<compile_context>
chip_gen: v7x
topology: tpu7x:2x2x1
jax: 0.10.0
libtpu: 0.0.40
codegen_flags: <defaults>
</compile_context>

<pallas_src>
import functools

import jax
import jax.numpy as jnp
import numpy as np
from jax import lax
from jax.experimental import pallas as pl
from jax.experimental.pallas import tpu as pltpu


# ---------------------------------------------------------------------------
# Fused per-stage kernel: masked MHA + ResidualNet + affine coupling + logdet
# ---------------------------------------------------------------------------
def _stage_kernel(q_ref, kv_ref, x_ref, pen_ref,
                  wq_ref, bq_ref, wk_ref, bk_ref, wv_ref, bv_ref, wo_ref, bo_ref,
                  wi_ref, bi_ref,
                  bn1s_ref, bn1b_ref, w1_ref, b1_ref,
                  bn2s_ref, bn2b_ref, w2_ref, b2_ref,
                  wsb_ref, bsb_ref,
                  z_ref, ld_ref,
                  *, num_heads, head_dim, attn_scale, inv_n_total):
    bb, n_q, q_in = q_ref.shape
    _, n_k, kv_in = kv_ref.shape
    dim = x_ref.shape[-1]
    hd = num_heads * head_dim
    rows = bb * n_q

    pen = pen_ref[...]                                       # (n_q, n_k) additive penalty (hoisted)

    # --- fused q/k/v projections: flatten (bb, n, f) -> (bb*n, f) so M fills the MXU
    q2 = q_ref[...].reshape(rows, q_in)
    kv2 = kv_ref[...].reshape(bb * n_k, kv_in)
    qa = (jnp.dot(q2, wq_ref[...], preferred_element_type=jnp.float32)
          + bq_ref[...]).reshape(bb, n_q, hd)
    ka = (jnp.dot(kv2, wk_ref[...], preferred_element_type=jnp.float32)
          + bk_ref[...]).reshape(bb, n_k, hd)
    va = (jnp.dot(kv2, wv_ref[...], preferred_element_type=jnp.float32)
          + bv_ref[...]).reshape(bb, n_k, hd)

    # --- per-head masked softmax attention, batched over the batch block
    ohs = []
    for h in range(num_heads):            # static unroll; small (num_heads * head_dim tiny)
        sl = slice(h * head_dim, (h + 1) * head_dim)
        qh = qa[:, :, sl] * attn_scale
        kh = ka[:, :, sl]
        vh = va[:, :, sl]
        s = lax.dot_general(qh, kh, (((2,), (2,)), ((0,), (0,))),
                            preferred_element_type=jnp.float32)          # (bb, n_q, n_k)
        s = s - pen[None]
        m = jnp.max(s, axis=-1, keepdims=True)
        p = jnp.exp(s - m)
        p = p / jnp.sum(p, axis=-1, keepdims=True)
        oh = lax.dot_general(p, vh, (((2,), (1,)), ((0,), (0,))),
                             preferred_element_type=jnp.float32)         # (bb, n_q, head_dim)
        ohs.append(oh.reshape(rows, head_dim))
    o = jnp.concatenate(ohs, axis=-1)                                    # (rows, hd)
    # single output projection over all heads (one K=hd matmul, not num_heads K=head_dim ones)
    h0 = jnp.dot(o, wo_ref[...], preferred_element_type=jnp.float32) + bo_ref[...]   # (rows, dim)

    # --- ResidualNet (eval-mode BatchNorm pre-folded into per-feature scale/shift)
    hcur = jnp.dot(h0, wi_ref[...], preferred_element_type=jnp.float32) + bi_ref[...]

    def _block(j, hh):
        r = hh * bn1s_ref[j] + bn1b_ref[j]
        r = jnp.maximum(r, 0.0)
        r = jnp.dot(r, w1_ref[j], preferred_element_type=jnp.float32) + b1_ref[j]
        r = r * bn2s_ref[j] + bn2b_ref[j]
        r = jnp.maximum(r, 0.0)
        # TODO(synk): dropout treated as identity (inference / p=0).
        r = jnp.dot(r, w2_ref[j], preferred_element_type=jnp.float32) + b2_ref[j]
        return hh + r

    hcur = lax.fori_loop(0, w1_ref.shape[0], _block, hcur, unroll=True)

    # --- final layer (scale & bias columns fused into one matmul), coupling, logdet
    hsb = jnp.dot(hcur, wsb_ref[...], preferred_element_type=jnp.float32) + bsb_ref[...]
    hs = hsb[:, :dim]                                                    # scale pre-activation
    hb = hsb[:, dim:]                                                    # bias
    scale = pl.reciprocal(1.0 + jnp.exp(-hs), approx=False) + 0.5        # sigmoid(s) + 0.5
    z = scale * x_ref[...].reshape(rows, dim) + hb
    z_ref[...] = z.reshape(bb, n_q, dim).astype(z_ref.dtype)
    ls = jnp.log(scale).reshape(bb, n_q, dim)
    ld_ref[...] = (jnp.sum(jnp.sum(ls, axis=2), axis=1, keepdims=True)
                   * inv_n_total).astype(ld_ref.dtype)


def fused_stage_pallas(q, kv, x_side, penalty, attn_p, trans_p, n_total,
                       num_heads, head_dim, eps=1e-5):
    """One coupling stage: h = Attention(q, kv, kv); (s,b) = ResidualNet(h);
    z = (sigmoid(s)+0.5)*x_side + b; returns (z, per-batch logdet/n_total)."""
    B, n_q, q_in = q.shape
    _, n_k, kv_in = kv.shape
    dim = x_side.shape[-1]
    hd = num_heads * head_dim
    width = trans_p["w_init"].shape[1]
    nb = trans_p["w1"].shape[0]

    # PyTorch splits heads as .view(b, n, head_dim, num_heads) (heads fastest). Permute the
    # projection weights once so the kernel sees contiguous per-head column blocks.
    perm = (jnp.arange(head_dim)[None, :] * num_heads
            + jnp.arange(num_heads)[:, None]).reshape(-1)
    wq = attn_p["wq"][:, perm]; bq = attn_p["bq"][perm][None, :]
    wk = attn_p["wk"][:, perm]; bk = attn_p["bk"][perm][None, :]
    wv = attn_p["wv"][:, perm]; bv = attn_p["bv"][perm][None, :]
    wo = attn_p["wo"][perm, :]; bo = attn_p["bo"][None, :]

    # Fold eval-mode BatchNorm1d into per-feature scale/shift.
    bn1_s = trans_p["bn1_gamma"] / jnp.sqrt(trans_p["bn1_var"] + eps)
    bn1_b = trans_p["bn1_beta"] - trans_p["bn1_mean"] * bn1_s
    bn2_s = trans_p["bn2_gamma"] / jnp.sqrt(trans_p["bn2_var"] + eps)
    bn2_b = trans_p["bn2_beta"] - trans_p["bn2_mean"] * bn2_s

    # Final layer: interleaved scale (odd cols) / bias (even cols) -> one concatenated matmul.
    wsb = jnp.concatenate([trans_p["w_final"][:, 1::2], trans_p["w_final"][:, 0::2]], axis=1)
    bsb = jnp.concatenate([trans_p["b_final"][1::2], trans_p["b_final"][0::2]])[None, :]

    # Batch block: whole batch when small, multiples of 8 otherwise (keeps the (bb, 1)
    # logdet output block legal under the (8, 128) tiling rule).
    bb = 8 if (B > 8 and B % 8 == 0) else B
    grid = (B // bb,)

    def _res(shape):  # weights / mask: VMEM-resident across the grid (constant index map)
        return pl.BlockSpec(shape, lambda b: (0,) * len(shape))

    kernel = functools.partial(_stage_kernel, num_heads=num_heads, head_dim=head_dim,
                               attn_scale=float(hd) ** -0.5,
                               inv_n_total=1.0 / float(n_total))

    z, ld = pl.pallas_call(
        kernel,
        out_shape=(jax.ShapeDtypeStruct((B, n_q, dim), jnp.float32),
                   jax.ShapeDtypeStruct((B, 1), jnp.float32)),
        grid=grid,
        in_specs=[
            pl.BlockSpec((bb, n_q, q_in), lambda b: (b, 0, 0)),
            pl.BlockSpec((bb, n_k, kv_in), lambda b: (b, 0, 0)),
            pl.BlockSpec((bb, n_q, dim), lambda b: (b, 0, 0)),
            _res((n_q, n_k)),
            _res((q_in, hd)), _res((1, hd)),
            _res((kv_in, hd)), _res((1, hd)),
            _res((kv_in, hd)), _res((1, hd)),
            _res((hd, dim)), _res((1, dim)),
            _res((dim, width)), _res((1, width)),
            _res((nb, 1, width)), _res((nb, 1, width)),
            _res((nb, width, width)), _res((nb, 1, width)),
            _res((nb, 1, width)), _res((nb, 1, width)),
            _res((nb, width, width)), _res((nb, 1, width)),
            _res((width, 2 * dim)), _res((1, 2 * dim)),
        ],
        out_specs=(pl.BlockSpec((bb, n_q, dim), lambda b: (b, 0, 0)),
                   pl.BlockSpec((bb, 1), lambda b: (b, 0))),
        compiler_params=pltpu.CompilerParams(
            dimension_semantics=("parallel",),
            vmem_limit_bytes=32 * 1024 * 1024),
    )(q, kv, x_side, penalty,
      wq, bq, wk, bk, wv, bv, wo, bo,
      trans_p["w_init"], trans_p["b_init"][None, :],
      bn1_s[:, None, :], bn1_b[:, None, :], trans_p["w1"], trans_p["b1"][:, None, :],
      bn2_s[:, None, :], bn2_b[:, None, :], trans_p["w2"], trans_p["b2"][:, None, :],
      wsb, bsb)
    return z, ld


# ---------------------------------------------------------------------------
# Full module forward (cheap JAX glue around the two fused stage kernels)
# ---------------------------------------------------------------------------
def additive_coupling_self_attention_forward(x, pos, attn_mask, params,
                                             identity_idx, transform_idx,
                                             num_heads, head_dim, context=None):
    # TODO(synk): context (c_dim) conditioning is not fused; demo / default uses context=None.
    B, N, _ = x.shape
    id_idx = jnp.asarray(identity_idx)
    tr_idx = jnp.asarray(transform_idx)

    x_id = x[:, id_idx]; x_tr = x[:, tr_idx]
    pos_id = pos[:, id_idx]; pos_tr = pos[:, tr_idx]
    mask_f = attn_mask.astype(jnp.float32)
    pen1 = 1e8 * (1.0 - mask_f[tr_idx][:, id_idx])     # hoisted, grid-invariant penalties
    pen2 = 1e8 * (1.0 - mask_f[id_idx][:, tr_idx])

    # stage 1: attend over the identity half, transform the transform half
    z_tr, ld1 = fused_stage_pallas(pos_tr, x_id, x_tr, pen1, params["attn1"],
                                   params["transform"], N, num_heads, head_dim)
    # stage 2: attend over the (already transformed) half, transform the identity half
    z_id, ld2 = fused_stage_pallas(pos_id, z_tr, x_id, pen2, params["attn2"],
                                   params["transform"], N, num_heads, head_dim)

    z = jnp.zeros_like(x).at[:, id_idx].set(z_id).at[:, tr_idx].set(z_tr)
    return z, ld1 + ld2


# ---------------------------------------------------------------------------
# Pure-JAX reference (mirrors the PyTorch module) for correctness checking
# ---------------------------------------------------------------------------
def _attention_ref(q, k, v, mask, p, num_heads, head_dim):
    b, n_q, _ = q.shape
    n_k = k.shape[1]
    hd = num_heads * head_dim
    qe = q @ p["wq"] + p["bq"]
    ke = k @ p["wk"] + p["bk"]
    ve = v @ p["wv"] + p["bv"]
    qh = qe.reshape(b, n_q, head_dim, num_heads).transpose(0, 3, 1, 2)
    kh = ke.reshape(b, n_k, head_dim, num_heads).transpose(0, 3, 1, 2)
    vh = ve.reshape(b, n_k, head_dim, num_heads).transpose(0, 3, 1, 2)
    s = (qh * hd ** -0.5) @ jnp.swapaxes(kh, -1, -2)
    s = s - 1e8 * (1.0 - mask[None, None])
    a = jax.nn.softmax(s, axis=-1)
    o = a @ vh
    o = o.transpose(0, 2, 3, 1).reshape(b, n_q, hd)
    return o @ p["wo"] + p["bo"]


def _residual_net_ref(x, tp, eps=1e-5):
    b, n, _ = x.shape
    h = x.reshape(b * n, -1) @ tp["w_init"] + tp["b_init"]
    for j in range(tp["w1"].shape[0]):
        r = (h - tp["bn1_mean"][j]) / jnp.sqrt(tp["bn1_var"][j] + eps)
        r = r * tp["bn1_gamma"][j] + tp["bn1_beta"][j]
        r = jax.nn.relu(r)
        r = r @ tp["w1"][j] + tp["b1"][j]
        r = (r - tp["bn2_mean"][j]) / jnp.sqrt(tp["bn2_var"][j] + eps)
        r = r * tp["bn2_gamma"][j] + tp["bn2_beta"][j]
        r = jax.nn.relu(r)
        r = r @ tp["w2"][j] + tp["b2"][j]
        h = h + r
    out = h @ tp["w_final"] + tp["b_final"]
    return out.reshape(b, n, -1)


def _module_ref(x, pos, attn_mask, params, id_idx, tr_idx, num_heads, head_dim):
    B, N, _ = x.shape
    x_id = x[:, id_idx]; x_tr = x[:, tr_idx]
    pos_id = pos[:, id_idx]; pos_tr = pos[:, tr_idx]
    m1 = attn_mask[tr_idx][:, id_idx]
    m2 = attn_mask[id_idx][:, tr_idx]

    h = _attention_ref(pos_tr, x_id, x_id, m1, params["attn1"], num_heads, head_dim)
    h = _residual_net_ref(h, params["transform"])
    scale = jax.nn.sigmoid(h[..., 1::2]) + 0.5
    bias = h[..., 0::2]
    x_tr = scale * x_tr + bias
    logdet = jnp.sum(jnp.log(scale).reshape(B, -1), axis=-1, keepdims=True) / N

    h = _attention_ref(pos_id, x_tr, x_tr, m2, params["attn2"], num_heads, head_dim)
    h = _residual_net_ref(h, params["transform"])
    scale = jax.nn.sigmoid(h[..., 1::2]) + 0.5
    bias = h[..., 0::2]
    x_id = scale * x_id + bias
    logdet = logdet + jnp.sum(jnp.log(scale).reshape(B, -1), axis=-1, keepdims=True) / N

    z = jnp.zeros_like(x).at[:, id_idx].set(x_id).at[:, tr_idx].set(x_tr)
    return z, logdet


# ---------------------------------------------------------------------------
# Deterministic parameter construction
# ---------------------------------------------------------------------------
def _make_attention_params(key, q_in, kv_in, out_dim, hd):
    ks = jax.random.split(key, 8)

    def lin(k, fi, fo):
        return jax.random.normal(k, (fi, fo), jnp.float32) / np.sqrt(fi)

    return {
        "wq": lin(ks[0], q_in, hd), "bq": 0.1 * jax.random.normal(ks[1], (hd,), jnp.float32),
        "wk": lin(ks[2], kv_in, hd), "bk": 0.1 * jax.random.normal(ks[3], (hd,), jnp.float32),
        "wv": lin(ks[4], kv_in, hd), "bv": 0.1 * jax.random.normal(ks[5], (hd,), jnp.float32),
        "wo": lin(ks[6], hd, out_dim), "bo": 0.1 * jax.random.normal(ks[7], (out_dim,), jnp.float32),
    }


def _make_transform_params(key, in_dim, width, out_dim, num_blocks):
    ks = jax.random.split(key, 16)
    n = lambda k, shape, s=1.0: s * jax.random.normal(k, shape, jnp.float32)
    stdv = 0.01 / np.sqrt(width)
    return {
        "w_init": n(ks[0], (in_dim, width)) / np.sqrt(in_dim),
        "b_init": n(ks[1], (width,), 0.1),
        "bn1_gamma": 1.0 + n(ks[2], (num_blocks, width), 0.1),
        "bn1_beta": n(ks[3], (num_blocks, width), 0.1),
        "bn1_mean": n(ks[4], (num_blocks, width), 0.1),
        "bn1_var": 0.5 + jax.random.uniform(ks[5], (num_blocks, width), jnp.float32),
        "w1": n(ks[6], (num_blocks, width, width)) / np.sqrt(width),
        "b1": n(ks[7], (num_blocks, width), 0.1),
        "bn2_gamma": 1.0 + n(ks[8], (num_blocks, width), 0.1),
        "bn2_beta": n(ks[9], (num_blocks, width), 0.1),
        "bn2_mean": n(ks[10], (num_blocks, width), 0.1),
        "bn2_var": 0.5 + jax.random.uniform(ks[11], (num_blocks, width), jnp.float32),
        "w2": n(ks[12], (num_blocks, width, width), 0.001),
        "b2": n(ks[13], (num_blocks, width), 0.001),
        "w_final": n(ks[14], (width, out_dim), stdv),
        "b_final": n(ks[15], (out_dim,), stdv),
    }


if __name__ == "__main__":
    key = jax.random.PRNGKey(0)
    B, N, dim, pos_dim, width = 2, 8, 4, 6, 32
    num_heads, head_dim, num_blocks = 8, 3, 2
    hd = num_heads * head_dim

    keys = jax.random.split(key, 6)
    x = jax.random.normal(keys[0], (B, N, dim), jnp.float32)
    pos = jax.random.normal(keys[1], (B, N, pos_dim), jnp.float32)
    attn_mask = (jax.random.uniform(keys[2], (N, N)) > 0.3).astype(jnp.float32)

    # coupling mask over the sequence dim (module __init__): which positions transform first
    coupling_mask = np.array([0, 1, 0, 1, 0, 1, 1, 0], dtype=np.int32)
    seq = np.arange(N)
    identity_idx = seq[coupling_mask <= 0]
    transform_idx = seq[coupling_mask > 0]

    params = {
        "attn1": _make_attention_params(keys[3], pos_dim, dim, dim, hd),
        "attn2": _make_attention_params(keys[4], pos_dim, dim, dim, hd),
        "transform": _make_transform_params(keys[5], dim, width, 2 * dim, num_blocks),
    }

    fwd = jax.jit(functools.partial(additive_coupling_self_attention_forward,
                                    num_heads=num_heads, head_dim=head_dim))
    z, logdet = fwd(x, pos, attn_mask, params, identity_idx, transform_idx)
    jax.block_until_ready((z, logdet))

    z_ref, logdet_ref = _module_ref(x, pos, attn_mask, params,
                                    identity_idx, transform_idx, num_heads, head_dim)

    assert z.shape == (B, N, dim) and logdet.shape == (B, 1)
    assert jnp.allclose(z, z_ref, atol=1e-4, rtol=1e-4), float(jnp.max(jnp.abs(z - z_ref)))
    assert jnp.allclose(logdet, logdet_ref, atol=1e-4, rtol=1e-4), \
        float(jnp.max(jnp.abs(logdet - logdet_ref)))

    print("KERNEL_OK")
</pallas_src>

<mosaic_0001>
module attributes {stable_mosaic.version = 11 : i64} {
  func.func @_stage_kernel(%arg0: i32, %arg1: memref<2x4x6xf32, #tpu.memory_space<vmem>>, %arg2: memref<2x4x4xf32, #tpu.memory_space<vmem>>, %arg3: memref<2x4x4xf32, #tpu.memory_space<vmem>>, %arg4: memref<4x4xf32, #tpu.memory_space<vmem>>, %arg5: memref<6x24xf32, #tpu.memory_space<vmem>>, %arg6: memref<1x24xf32, #tpu.memory_space<vmem>>, %arg7: memref<4x24xf32, #tpu.memory_space<vmem>>, %arg8: memref<1x24xf32, #tpu.memory_space<vmem>>, %arg9: memref<4x24xf32, #tpu.memory_space<vmem>>, %arg10: memref<1x24xf32, #tpu.memory_space<vmem>>, %arg11: memref<24x4xf32, #tpu.memory_space<vmem>>, %arg12: memref<1x4xf32, #tpu.memory_space<vmem>>, %arg13: memref<4x32xf32, #tpu.memory_space<vmem>>, %arg14: memref<1x32xf32, #tpu.memory_space<vmem>>, %arg15: memref<2x1x32xf32, #tpu.memory_space<vmem>>, %arg16: memref<2x1x32xf32, #tpu.memory_space<vmem>>, %arg17: memref<2x32x32xf32, #tpu.memory_space<vmem>>, %arg18: memref<2x1x32xf32, #tpu.memory_space<vmem>>, %arg19: memref<2x1x32xf32, #tpu.memory_space<vmem>>, %arg20: memref<2x1x32xf32, #tpu.memory_space<vmem>>, %arg21: memref<2x32x32xf32, #tpu.memory_space<vmem>>, %arg22: memref<2x1x32xf32, #tpu.memory_space<vmem>>, %arg23: memref<32x8xf32, #tpu.memory_space<vmem>>, %arg24: memref<1x8xf32, #tpu.memory_space<vmem>>, %arg25: memref<2x4x4xf32, #tpu.memory_space<vmem>>, %arg26: memref<2x1xf32, #tpu.memory_space<vmem>>) attributes {dimension_semantics = [#tpu.dimension_semantics<parallel>], iteration_bounds = array<i64: 1>, scalar_prefetch = 0 : i64, scratch_operands = 0 : i64, tpu.core_type = #tpu.core_type<tc>, window_params = [{transform_indices = @transform_0, window_bounds = array<i64: 2, 4, 6>}, {transform_indices = @transform_1, window_bounds = array<i64: 2, 4, 4>}, {transform_indices = @transform_2, window_bounds = array<i64: 2, 4, 4>}, {pipeline_mode = #tpu.pipeline_mode<synchronous>, transform_indices = @transform_3, window_bounds = array<i64: 4, 4>}, {pipeline_mode = #tpu.pipeline_mode<synchronous>, transform_indices = @transform_4, window_bounds = array<i64: 6, 24>}, {pipeline_mode = #tpu.pipeline_mode<synchronous>, transform_indices = @transform_5, window_bounds = array<i64: 1, 24>}, {pipeline_mode = #tpu.pipeline_mode<synchronous>, transform_indices = @transform_6, window_bounds = array<i64: 4, 24>}, {pipeline_mode = #tpu.pipeline_mode<synchronous>, transform_indices = @transform_7, window_bounds = array<i64: 1, 24>}, {pipeline_mode = #tpu.pipeline_mode<synchronous>, transform_indices = @transform_8, window_bounds = array<i64: 4, 24>}, {pipeline_mode = #tpu.pipeline_mode<synchronous>, transform_indices = @transform_9, window_bounds = array<i64: 1, 24>}, {pipeline_mode = #tpu.pipeline_mode<synchronous>, transform_indices = @transform_10, window_bounds = array<i64: 24, 4>}, {pipeline_mode = #tpu.pipeline_mode<synchronous>, transform_indices = @transform_11, window_bounds = array<i64: 1, 4>}, {pipeline_mode = #tpu.pipeline_mode<synchronous>, transform_indices = @transform_12, window_bounds = array<i64: 4, 32>}, {pipeline_mode = #tpu.pipeline_mode<synchronous>, transform_indices = @transform_13, window_bounds = array<i64: 1, 32>}, {pipeline_mode = #tpu.pipeline_mode<synchronous>, transform_indices = @transform_14, window_bounds = array<i64: 2, 1, 32>}, {pipeline_mode = #tpu.pipeline_mode<synchronous>, transform_indices = @transform_15, window_bounds = array<i64: 2, 1, 32>}, {pipeline_mode = #tpu.pipeline_mode<synchronous>, transform_indices = @transform_16, window_bounds = array<i64: 2, 32, 32>}, {pipeline_mode = #tpu.pipeline_mode<synchronous>, transform_indices = @transform_17, window_bounds = array<i64: 2, 1, 32>}, {pipeline_mode = #tpu.pipeline_mode<synchronous>, transform_indices = @transform_18, window_bounds = array<i64: 2, 1, 32>}, {pipeline_mode = #tpu.pipeline_mode<synchronous>, transform_indices = @transform_19, window_bounds = array<i64: 2, 1, 32>}, {pipeline_mode = #tpu.pipeline_mode<synchronous>, transform_indices = @transform_20, window_bounds = array<i64: 2, 32, 32>}, {pipeline_mode = #tpu.pipeline_mode<synchronous>, transform_indices = @transform_21, window_bounds = array<i64: 2, 1, 32>}, {pipeline_mode = #tpu.pipeline_mode<synchronous>, transform_indices = @transform_22, window_bounds = array<i64: 32, 8>}, {pipeline_mode = #tpu.pipeline_mode<synchronous>, transform_indices = @transform_23, window_bounds = array<i64: 1, 8>}, {transform_indices = @transform_24, window_bounds = array<i64: 2, 4, 4>}, {transform_indices = @transform_25, window_bounds = array<i64: 2, 1>}]} {
    %c0 = arith.constant 0 : index
    %c0_0 = arith.constant 0 : index
    %0 = vector.load %arg4[%c0, %c0_0] : memref<4x4xf32, #tpu.memory_space<vmem>>, vector<4x4xf32>
    %c0_1 = arith.constant 0 : index
    %c0_2 = arith.constant 0 : index
    %c0_3 = arith.constant 0 : index
    %1 = vector.load %arg1[%c0_1, %c0_2, %c0_3] : memref<2x4x6xf32, #tpu.memory_space<vmem>>, vector<2x4x6xf32>
    %2 = vector.shape_cast %1 : vector<2x4x6xf32> to vector<8x6xf32>
    %c0_4 = arith.constant 0 : index
    %c0_5 = arith.constant 0 : index
    %c0_6 = arith.constant 0 : index
    %3 = vector.load %arg2[%c0_4, %c0_5, %c0_6] : memref<2x4x4xf32, #tpu.memory_space<vmem>>, vector<2x4x4xf32>
    %4 = vector.shape_cast %3 : vector<2x4x4xf32> to vector<8x4xf32>
    %c0_7 = arith.constant 0 : index
    %c0_8 = arith.constant 0 : index
    %5 = vector.load %arg5[%c0_7, %c0_8] : memref<6x24xf32, #tpu.memory_space<vmem>>, vector<6x24xf32>
    %cst = arith.constant dense<0.000000e+00> : vector<8x24xf32>
    %6 = tpu.matmul %2, %5, %cst {dimension_numbers = #tpu.dot_dimension_numbers<[1], [0], [0], [1], [0, 0, 1, 1], [], []>} : vector<8x6xf32>, vector<6x24xf32>, vector<8x24xf32> -> vector<8x24xf32>
    %c0_9 = arith.constant 0 : index
    %c0_10 = arith.constant 0 : index
    %7 = vector.load %arg6[%c0_9, %c0_10] : memref<1x24xf32, #tpu.memory_space<vmem>>, vector<1x24xf32>
    %8 = vector.broadcast %7 : vector<1x24xf32> to vector<8x24xf32>
    %9 = arith.addf %6, %8 : vector<8x24xf32>
    %10 = vector.shape_cast %9 : vector<8x24xf32> to vector<2x4x24xf32>
    %c0_11 = arith.constant 0 : index
    %c0_12 = arith.constant 0 : index
    %11 = vector.load %arg7[%c0_11, %c0_12] : memref<4x24xf32, #tpu.memory_space<vmem>>, vector<4x24xf32>
    %cst_13 = arith.constant dense<0.000000e+00> : vector<8x24xf32>
    %12 = tpu.matmul %4, %11, %cst_13 {dimension_numbers = #tpu.dot_dimension_numbers<[1], [0], [0], [1], [0, 0, 1, 1], [], []>} : vector<8x4xf32>, vector<4x24xf32>, vector<8x24xf32> -> vector<8x24xf32>
    %c0_14 = arith.constant 0 : index
    %c0_15 = arith.constant 0 : index
    %13 = vector.load %arg8[%c0_14, %c0_15] : memref<1x24xf32, #tpu.memory_space<vmem>>, vector<1x24xf32>
    %14 = vector.broadcast %13 : vector<1x24xf32> to vector<8x24xf32>
    %15 = arith.addf %12, %14 : vector<8x24xf32>
    %16 = vector.shape_cast %15 : vector<8x24xf32> to vector<2x4x24xf32>
    %c0_16 = arith.constant 0 : index
    %c0_17 = arith.constant 0 : index
    %17 = vector.load %arg9[%c0_16, %c0_17] : memref<4x24xf32, #tpu.memory_space<vmem>>, vector<4x24xf32>
    %cst_18 = arith.constant dense<0.000000e+00> : vector<8x24xf32>
    %18 = tpu.matmul %4, %17, %cst_18 {dimension_numbers = #tpu.dot_dimension_numbers<[1], [0], [0], [1], [0, 0, 1, 1], [], []>} : vector<8x4xf32>, vector<4x24xf32>, vector<8x24xf32> -> vector<8x24xf32>
    %c0_19 = arith.constant 0 : index
    %c0_20 = arith.constant 0 : index
    %19 = vector.load %arg10[%c0_19, %c0_20] : memref<1x24xf32, #tpu.memory_space<vmem>>, vector<1x24xf32>
    %20 = vector.broadcast %19 : vector<1x24xf32> to vector<8x24xf32>
    %21 = arith.addf %18, %20 : vector<8x24xf32>
    %22 = vector.shape_cast %21 : vector<8x24xf32> to vector<2x4x24xf32>
    %23 = vector.extract_strided_slice %10 {offsets = [0, 0, 0], sizes = [2, 4, 3], strides = [1, 1, 1]} : vector<2x4x24xf32> to vector<2x4x3xf32>
    %cst_21 = arith.constant 0.204124153 : f32
    %24 = vector.broadcast %cst_21 : f32 to vector<2x4x3xf32>
    %25 = arith.mulf %23, %24 : vector<2x4x3xf32>
    %26 = vector.extract_strided_slice %16 {offsets = [0, 0, 0], sizes = [2, 4, 3], strides = [1, 1, 1]} : vector<2x4x24xf32> to vector<2x4x3xf32>
    %27 = vector.extract_strided_slice %22 {offsets = [0, 0, 0], sizes = [2, 4, 3], strides = [1, 1, 1]} : vector<2x4x24xf32> to vector<2x4x3xf32>
    %cst_22 = arith.constant dense<0.000000e+00> : vector<2x4x4xf32>
    %28 = tpu.matmul %25, %26, %cst_22 {dimension_numbers = #tpu.dot_dimension_numbers<[2], [2], [1], [1], [0, 0, 0, 1, 1, 1], [0], [0]>} : vector<2x4x3xf32>, vector<2x4x3xf32>, vector<2x4x4xf32> -> vector<2x4x4xf32>
    %29 = vector.shape_cast %0 : vector<4x4xf32> to vector<1x4x4xf32>
    %30 = vector.broadcast %29 : vector<1x4x4xf32> to vector<2x4x4xf32>
    %31 = arith.subf %28, %30 : vector<2x4x4xf32>
    %cst_23 = arith.constant dense<0xFF800000> : vector<2x4xf32>
    %32 = vector.multi_reduction <maximumf>, %31, %cst_23 [2] : vector<2x4x4xf32> to vector<2x4xf32>
    %33 = vector.shape_cast %32 : vector<2x4xf32> to vector<2x4x1xf32>
    %34 = vector.broadcast %33 : vector<2x4x1xf32> to vector<2x4x4xf32>
    %35 = arith.subf %31, %34 : vector<2x4x4xf32>
    %36 = math.exp %35 : vector<2x4x4xf32>
    %cst_24 = arith.constant dense<0.000000e+00> : vector<2x4xf32>
    %37 = vector.multi_reduction <add>, %36, %cst_24 [2] : vector<2x4x4xf32> to vector<2x4xf32>
    %38 = vector.shape_cast %37 : vector<2x4xf32> to vector<2x4x1xf32>
    %39 = vector.broadcast %38 : vector<2x4x1xf32> to vector<2x4x4xf32>
    %40 = arith.divf %36, %39 : vector<2x4x4xf32>
    %cst_25 = arith.constant dense<0.000000e+00> : vector<2x4x3xf32>
    %41 = tpu.matmul %40, %27, %cst_25 {dimension_numbers = #tpu.dot_dimension_numbers<[2], [1], [1], [2], [0, 0, 0, 1, 1, 2], [0], [0]>} : vector<2x4x4xf32>, vector<2x4x3xf32>, vector<2x4x3xf32> -> vector<2x4x3xf32>
    %42 = vector.shape_cast %41 : vector<2x4x3xf32> to vector<8x3xf32>
    %43 = vector.extract_strided_slice %10 {offsets = [0, 0, 3], sizes = [2, 4, 3], strides = [1, 1, 1]} : vector<2x4x24xf32> to vector<2x4x3xf32>
    %cst_26 = arith.constant 0.204124153 : f32
    %44 = vector.broadcast %cst_26 : f32 to vector<2x4x3xf32>
    %45 = arith.mulf %43, %44 : vector<2x4x3xf32>
    %46 = vector.extract_strided_slice %16 {offsets = [0, 0, 3], sizes = [2, 4, 3], strides = [1, 1, 1]} : vector<2x4x24xf32> to vector<2x4x3xf32>
    %47 = vector.extract_strided_slice %22 {offsets = [0, 0, 3], sizes = [2, 4, 3], strides = [1, 1, 1]} : vector<2x4x24xf32> to vector<2x4x3xf32>
    %cst_27 = arith.constant dense<0.000000e+00> : vector<2x4x4xf32>
    %48 = tpu.matmul %45, %46, %cst_27 {dimension_numbers = #tpu.dot_dimension_numbers<[2], [2], [1], [1], [0, 0, 0, 1, 1, 1], [0], [0]>} : vector<2x4x3xf32>, vector<2x4x3xf32>, vector<2x4x4xf32> -> vector<2x4x4xf32>
    %49 = vector.shape_cast %0 : vector<4x4xf32> to vector<1x4x4xf32>
    %50 = vector.broadcast %49 : vector<1x4x4xf32> to vector<2x4x4xf32>
    %51 = arith.subf %48, %50 : vector<2x4x4xf32>
    %cst_28 = arith.constant dense<0xFF800000> : vector<2x4xf32>
    %52 = vector.multi_reduction <maximumf>, %51, %cst_28 [2] : vector<2x4x4xf32> to vector<2x4xf32>
    %53 = vector.shape_cast %52 : vector<2x4xf32> to vector<2x4x1xf32>
    %54 = vector.broadcast %53 : vector<2x4x1xf32> to vector<2x4x4xf32>
    %55 = arith.subf %51, %54 : vector<2x4x4xf32>
    %56 = math.exp %55 : vector<2x4x4xf32>
    %cst_29 = arith.constant dense<0.000000e+00> : vector<2x4xf32>
    %57 = vector.multi_reduction <add>, %56, %cst_29 [2] : vector<2x4x4xf32> to vector<2x4xf32>
    %58 = vector.shape_cast %57 : vector<2x4xf32> to vector<2x4x1xf32>
    %59 = vector.broadcast %58 : vector<2x4x1xf32> to vector<2x4x4xf32>
    %60 = arith.divf %56, %59 : vector<2x4x4xf32>
    %cst_30 = arith.constant dense<0.000000e+00> : vector<2x4x3xf32>
    %61 = tpu.matmul %60, %47, %cst_30 {dimension_numbers = #tpu.dot_dimension_numbers<[2], [1], [1], [2], [0, 0, 0, 1, 1, 2], [0], [0]>} : vector<2x4x4xf32>, vector<2x4x3xf32>, vector<2x4x3xf32> -> vector<2x4x3xf32>
    %62 = vector.shape_cast %61 : vector<2x4x3xf32> to vector<8x3xf32>
    %63 = vector.extract_strided_slice %10 {offsets = [0, 0, 6], sizes = [2, 4, 3], strides = [1, 1, 1]} : vector<2x4x24xf32> to vector<2x4x3xf32>
    %cst_31 = arith.constant 0.204124153 : f32
    %64 = vector.broadcast %cst_31 : f32 to vector<2x4x3xf32>
    %65 = arith.mulf %63, %64 : vector<2x4x3xf32>
    %66 = vector.extract_strided_slice %16 {offsets = [0, 0, 6], sizes = [2, 4, 3], strides = [1, 1, 1]} : vector<2x4x24xf32> to vector<2x4x3xf32>
    %67 = vector.extract_strided_slice %22 {offsets = [0, 0, 6], sizes = [2, 4, 3], strides = [1, 1, 1]} : vector<2x4x24xf32> to vector<2x4x3xf32>
    %cst_32 = arith.constant dense<0.000000e+00> : vector<2x4x4xf32>
    %68 = tpu.matmul %65, %66, %cst_32 {dimension_numbers = #tpu.dot_dimension_numbers<[2], [2], [1], [1], [0, 0, 0, 1, 1, 1], [0], [0]>} : vector<2x4x3xf32>, vector<2x4x3xf32>, vector<2x4x4xf32> -> vector<2x4x4xf32>
    %69 = vector.shape_cast %0 : vector<4x4xf32> to vector<1x4x4xf32>
    %70 = vector.broadcast %69 : vector<1x4x4xf32> to vector<2x4x4xf32>
    %71 = arith.subf %68, %70 : vector<2x4x4xf32>
    %cst_33 = arith.constant dense<0xFF800000> : vector<2x4xf32>
    %72 = vector.multi_reduction <maximumf>, %71, %cst_33 [2] : vector<2x4x4xf32> to vector<2x4xf32>
    %73 = vector.shape_cast %72 : vector<2x4xf32> to vector<2x4x1xf32>
    %74 = vector.broadcast %73 : vector<2x4x1xf32> to vector<2x4x4xf32>
    %75 = arith.subf %71, %74 : vector<2x4x4xf32>
    %76 = math.exp %75 : vector<2x4x4xf32>
    %cst_34 = arith.constant dense<0.000000e+00> : vector<2x4xf32>
    %77 = vector.multi_reduction <add>, %76, %cst_34 [2] : vector<2x4x4xf32> to vector<2x4xf32>
    %78 = vector.shape_cast %77 : vector<2x4xf32> to vector<2x4x1xf32>
    %79 = vector.broadcast %78 : vector<2x4x1xf32> to vector<2x4x4xf32>
    %80 = arith.divf %76, %79 : vector<2x4x4xf32>
    %cst_35 = arith.constant dense<0.000000e+00> : vector<2x4x3xf32>
    %81 = tpu.matmul %80, %67, %cst_35 {dimension_numbers = #tpu.dot_dimension_numbers<[2], [1], [1], [2], [0, 0, 0, 1, 1, 2], [0], [0]>} : vector<2x4x4xf32>, vector<2x4x3xf32>, vector<2x4x3xf32> -> vector<2x4x3xf32>
    %82 = vector.shape_cast %81 : vector<2x4x3xf32> to vector<8x3xf32>
    %83 = vector.extract_strided_slice %10 {offsets = [0, 0, 9], sizes = [2, 4, 3], strides = [1, 1, 1]} : vector<2x4x24xf32> to vector<2x4x3xf32>
    %cst_36 = arith.constant 0.204124153 : f32
    %84 = vector.broadcast %cst_36 : f32 to vector<2x4x3xf32>
    %85 = arith.mulf %83, %84 : vector<2x4x3xf32>
    %86 = vector.extract_strided_slice %16 {offsets = [0, 0, 9], sizes = [2, 4, 3], strides = [1, 1, 1]} : vector<2x4x24xf32> to vector<2x4x3xf32>
    %87 = vector.extract_strided_slice %22 {offsets = [0, 0, 9], sizes = [2, 4, 3], strides = [1, 1, 1]} : vector<2x4x24xf32> to vector<2x4x3xf32>
    %cst_37 = arith.constant dense<0.000000e+00> : vector<2x4x4xf32>
    %88 = tpu.matmul %85, %86, %cst_37 {dimension_numbers = #tpu.dot_dimension_numbers<[2], [2], [1], [1], [0, 0, 0, 1, 1, 1], [0], [0]>} : vector<2x4x3xf32>, vector<2x4x3xf32>, vector<2x4x4xf32> -> vector<2x4x4xf32>
    %89 = vector.shape_cast %0 : vector<4x4xf32> to vector<1x4x4xf32>
    %90 = vector.broadcast %89 : vector<1x4x4xf32> to vector<2x4x4xf32>
    %91 = arith.subf %88, %90 : vector<2x4x4xf32>
    %cst_38 = arith.constant dense<0xFF800000> : vector<2x4xf32>
    %92 = vector.multi_reduction <maximumf>, %91, %cst_38 [2] : vector<2x4x4xf32> to vector<2x4xf32>
    %93 = vector.shape_cast %92 : vector<2x4xf32> to vector<2x4x1xf32>
    %94 = vector.broadcast %93 : vector<2x4x1xf32> to vector<2x4x4xf32>
    %95 = arith.subf %91, %94 : vector<2x4x4xf32>
    %96 = math.exp %95 : vector<2x4x4xf32>
    %cst_39 = arith.constant dense<0.000000e+00> : vector<2x4xf32>
    %97 = vector.multi_reduction <add>, %96, %cst_39 [2] : vector<2x4x4xf32> to vector<2x4xf32>
    %98 = vector.shape_cast %97 : vector<2x4xf32> to vector<2x4x1xf32>
    %99 = vector.broadcast %98 : vector<2x4x1xf32> to vector<2x4x4xf32>
    %100 = arith.divf %96, %99 : vector<2x4x4xf32>
    %cst_40 = arith.constant dense<0.000000e+00> : vector<2x4x3xf32>
    %101 = tpu.matmul %100, %87, %cst_40 {dimension_numbers = #tpu.dot_dimension_numbers<[2], [1], [1], [2], [0, 0, 0, 1, 1, 2], [0], [0]>} : vector<2x4x4xf32>, vector<2x4x3xf32>, vector<2x4x3xf32> -> vector<2x4x3xf32>
    %102 = vector.shape_cast %101 : vector<2x4x3xf32> to vector<8x3xf32>
    %103 = vector.extract_strided_slice %10 {offsets = [0, 0, 12], sizes = [2, 4, 3], strides = [1, 1, 1]} : vector<2x4x24xf32> to vector<2x4x3xf32>
    %cst_41 = arith.constant 0.204124153 : f32
    %104 = vector.broadcast %cst_41 : f32 to vector<2x4x3xf32>
    %105 = arith.mulf %103, %104 : vector<2x4x3xf32>
    %106 = vector.extract_strided_slice %16 {offsets = [0, 0, 12], sizes = [2, 4, 3], strides = [1, 1, 1]} : vector<2x4x24xf32> to vector<2x4x3xf32>
    %107 = vector.extract_strided_slice %22 {offsets = [0, 0, 12], sizes = [2, 4, 3], strides = [1, 1, 1]} : vector<2x4x24xf32> to vector<2x4x3xf32>
    %cst_42 = arith.constant dense<0.000000e+00> : vector<2x4x4xf32>
    %108 = tpu.matmul %105, %106, %cst_42 {dimension_numbers = #tpu.dot_dimension_numbers<[2], [2], [1], [1], [0, 0, 0, 1, 1, 1], [0], [0]>} : vector<2x4x3xf32>, vector<2x4x3xf32>, vector<2x4x4xf32> -> vector<2x4x4xf32>
    %109 = vector.shape_cast %0 : vector<4x4xf32> to vector<1x4x4xf32>
    %110 = vector.broadcast %109 : vector<1x4x4xf32> to vector<2x4x4xf32>
    %111 = arith.subf %108, %110 : vector<2x4x4xf32>
    %cst_43 = arith.constant dense<0xFF800000> : vector<2x4xf32>
    %112 = vector.multi_reduction <maximumf>, %111, %cst_43 [2] : vector<2x4x4xf32> to vector<2x4xf32>
    %113 = vector.shape_cast %112 : vector<2x4xf32> to vector<2x4x1xf32>
    %114 = vector.broadcast %113 : vector<2x4x1xf32> to vector<2x4x4xf32>
    %115 = arith.subf %111, %114 : vector<2x4x4xf32>
    %116 = math.exp %115 : vector<2x4x4xf32>
    %cst_44 = arith.constant dense<0.000000e+00> : vector<2x4xf32>
    %117 = vector.multi_reduction <add>, %116, %cst_44 [2] : vector<2x4x4xf32> to vector<2x4xf32>
    %118 = vector.shape_cast %117 : vector<2x4xf32> to vector<2x4x1xf32>
    %119 = vector.broadcast %118 : vector<2x4x1xf32> to vector<2x4x4xf32>
    %120 = arith.divf %116, %119 : vector<2x4x4xf32>
    %cst_45 = arith.constant dense<0.000000e+00> : vector<2x4x3xf32>
    %121 = tpu.matmul %120, %107, %cst_45 {dimension_numbers = #tpu.dot_dimension_numbers<[2], [1], [1], [2], [0, 0, 0, 1, 1, 2], [0], [0]>} : vector<2x4x4xf32>, vector<2x4x3xf32>, vector<2x4x3xf32> -> vector<2x4x3xf32>
    %122 = vector.shape_cast %121 : vector<2x4x3xf32> to vector<8x3xf32>
    %123 = vector.extract_strided_slice %10 {offsets = [0, 0, 15], sizes = [2, 4, 3], strides = [1, 1, 1]} : vector<2x4x24xf32> to vector<2x4x3xf32>
    %cst_46 = arith.constant 0.204124153 : f32
    %124 = vector.broadcast %cst_46 : f32 to vector<2x4x3xf32>
    %125 = arith.mulf %123, %124 : vector<2x4x3xf32>
    %126 = vector.extract_strided_slice %16 {offsets = [0, 0, 15], sizes = [2, 4, 3], strides = [1, 1, 1]} : vector<2x4x24xf32> to vector<2x4x3xf32>
    %127 = vector.extract_strided_slice %22 {offsets = [0, 0, 15], sizes = [2, 4, 3], strides = [1, 1, 1]} : vector<2x4x24xf32> to vector<2x4x3xf32>
    %cst_47 = arith.constant dense<0.000000e+00> : vector<2x4x4xf32>
    %128 = tpu.matmul %125, %126, %cst_47 {dimension_numbers = #tpu.dot_dimension_numbers<[2], [2], [1], [1], [0, 0, 0, 1, 1, 1], [0], [0]>} : vector<2x4x3xf32>, vector<2x4x3xf32>, vector<2x4x4xf32> -> vector<2x4x4xf32>
    %129 = vector.shape_cast %0 : vector<4x4xf32> to vector<1x4x4xf32>
    %130 = vector.broadcast %129 : vector<1x4x4xf32> to vector<2x4x4xf32>
    %131 = arith.subf %128, %130 : vector<2x4x4xf32>
    %cst_48 = arith.constant dense<0xFF800000> : vector<2x4xf32>
    %132 = vector.multi_reduction <maximumf>, %131, %cst_48 [2] : vector<2x4x4xf32> to vector<2x4xf32>
    %133 = vector.shape_cast %132 : vector<2x4xf32> to vector<2x4x1xf32>
    %134 = vector.broadcast %133 : vector<2x4x1xf32> to vector<2x4x4xf32>
    %135 = arith.subf %131, %134 : vector<2x4x4xf32>
    %136 = math.exp %135 : vector<2x4x4xf32>
    %cst_49 = arith.constant dense<0.000000e+00> : vector<2x4xf32>
    %137 = vector.multi_reduction <add>, %136, %cst_49 [2] : vector<2x4x4xf32> to vector<2x4xf32>
    %138 = vector.shape_cast %137 : vector<2x4xf32> to vector<2x4x1xf32>
    %139 = vector.broadcast %138 : vector<2x4x1xf32> to vector<2x4x4xf32>
    %140 = arith.divf %136, %139 : vector<2x4x4xf32>
    %cst_50 = arith.constant dense<0.000000e+00> : vector<2x4x3xf32>
    %141 = tpu.matmul %140, %127, %cst_50 {dimension_numbers = #tpu.dot_dimension_numbers<[2], [1], [1], [2], [0, 0, 0, 1, 1, 2], [0], [0]>} : vector<2x4x4xf32>, vector<2x4x3xf32>, vector<2x4x3xf32> -> vector<2x4x3xf32>
    %142 = vector.shape_cast %141 : vector<2x4x3xf32> to vector<8x3xf32>
    %143 = vector.extract_strided_slice %10 {offsets = [0, 0, 18], sizes = [2, 4, 3], strides = [1, 1, 1]} : vector<2x4x24xf32> to vector<2x4x3xf32>
    %cst_51 = arith.constant 0.204124153 : f32
    %144 = vector.broadcast %cst_51 : f32 to vector<2x4x3xf32>
    %145 = arith.mulf %143, %144 : vector<2x4x3xf32>
    %146 = vector.extract_strided_slice %16 {offsets = [0, 0, 18], sizes = [2, 4, 3], strides = [1, 1, 1]} : vector<2x4x24xf32> to vector<2x4x3xf32>
    %147 = vector.extract_strided_slice %22 {offsets = [0, 0, 18], sizes = [2, 4, 3], strides = [1, 1, 1]} : vector<2x4x24xf32> to vector<2x4x3xf32>
    %cst_52 = arith.constant dense<0.000000e+00> : vector<2x4x4xf32>
    %148 = tpu.matmul %145, %146, %cst_52 {dimension_numbers = #tpu.dot_dimension_numbers<[2], [2], [1], [1], [0, 0, 0, 1, 1, 1], [0], [0]>} : vector<2x4x3xf32>, vector<2x4x3xf32>, vector<2x4x4xf32> -> vector<2x4x4xf32>
    %149 = vector.shape_cast %0 : vector<4x4xf32> to vector<1x4x4xf32>
    %150 = vector.broadcast %149 : vector<1x4x4xf32> to vector<2x4x4xf32>
    %151 = arith.subf %148, %150 : vector<2x4x4xf32>
    %cst_53 = arith.constant dense<0xFF800000> : vector<2x4xf32>
    %152 = vector.multi_reduction <maximumf>, %151, %cst_53 [2] : vector<2x4x4xf32> to vector<2x4xf32>
    %153 = vector.shape_cast %152 : vector<2x4xf32> to vector<2x4x1xf32>
    %154 = vector.broadcast %153 : vector<2x4x1xf32> to vector<2x4x4xf32>
    %155 = arith.subf %151, %154 : vector<2x4x4xf32>
    %156 = math.exp %155 : vector<2x4x4xf32>
    %cst_54 = arith.constant dense<0.000000e+00> : vector<2x4xf32>
    %157 = vector.multi_reduction <add>, %156, %cst_54 [2] : vector<2x4x4xf32> to vector<2x4xf32>
    %158 = vector.shape_cast %157 : vector<2x4xf32> to vector<2x4x1xf32>
    %159 = vector.broadcast %158 : vector<2x4x1xf32> to vector<2x4x4xf32>
    %160 = arith.divf %156, %159 : vector<2x4x4xf32>
    %cst_55 = arith.constant dense<0.000000e+00> : vector<2x4x3xf32>
    %161 = tpu.matmul %160, %147, %cst_55 {dimension_numbers = #tpu.dot_dimension_numbers<[2], [1], [1], [2], [0, 0, 0, 1, 1, 2], [0], [0]>} : vector<2x4x4xf32>, vector<2x4x3xf32>, vector<2x4x3xf32> -> vector<2x4x3xf32>
    %162 = vector.shape_cast %161 : vector<2x4x3xf32> to vector<8x3xf32>
    %163 = vector.extract_strided_slice %10 {offsets = [0, 0, 21], sizes = [2, 4, 3], strides = [1, 1, 1]} : vector<2x4x24xf32> to vector<2x4x3xf32>
    %cst_56 = arith.constant 0.204124153 : f32
    %164 = vector.broadcast %cst_56 : f32 to vector<2x4x3xf32>
    %165 = arith.mulf %163, %164 : vector<2x4x3xf32>
    %166 = vector.extract_strided_slice %16 {offsets = [0, 0, 21], sizes = [2, 4, 3], strides = [1, 1, 1]} : vector<2x4x24xf32> to vector<2x4x3xf32>
    %167 = vector.extract_strided_slice %22 {offsets = [0, 0, 21], sizes = [2, 4, 3], strides = [1, 1, 1]} : vector<2x4x24xf32> to vector<2x4x3xf32>
    %cst_57 = arith.constant dense<0.000000e+00> : vector<2x4x4xf32>
    %168 = tpu.matmul %165, %166, %cst_57 {dimension_numbers = #tpu.dot_dimension_numbers<[2], [2], [1], [1], [0, 0, 0, 1, 1, 1], [0], [0]>} : vector<2x4x3xf32>, vector<2x4x3xf32>, vector<2x4x4xf32> -> vector<2x4x4xf32>
    %169 = vector.shape_cast %0 : vector<4x4xf32> to vector<1x4x4xf32>
    %170 = vector.broadcast %169 : vector<1x4x4xf32> to vector<2x4x4xf32>
    %171 = arith.subf %168, %170 : vector<2x4x4xf32>
    %cst_58 = arith.constant dense<0xFF800000> : vector<2x4xf32>
    %172 = vector.multi_reduction <maximumf>, %171, %cst_58 [2] : vector<2x4x4xf32> to vector<2x4xf32>
    %173 = vector.shape_cast %172 : vector<2x4xf32> to vector<2x4x1xf32>
    %174 = vector.broadcast %173 : vector<2x4x1xf32> to vector<2x4x4xf32>
    %175 = arith.subf %171, %174 : vector<2x4x4xf32>
    %176 = math.exp %175 : vector<2x4x4xf32>
    %cst_59 = arith.constant dense<0.000000e+00> : vector<2x4xf32>
    %177 = vector.multi_reduction <add>, %176, %cst_59 [2] : vector<2x4x4xf32> to vector<2x4xf32>
    %178 = vector.shape_cast %177 : vector<2x4xf32> to vector<2x4x1xf32>
    %179 = vector.broadcast %178 : vector<2x4x1xf32> to vector<2x4x4xf32>
    %180 = arith.divf %176, %179 : vector<2x4x4xf32>
    %cst_60 = arith.constant dense<0.000000e+00> : vector<2x4x3xf32>
    %181 = tpu.matmul %180, %167, %cst_60 {dimension_numbers = #tpu.dot_dimension_numbers<[2], [1], [1], [2], [0, 0, 0, 1, 1, 2], [0], [0]>} : vector<2x4x4xf32>, vector<2x4x3xf32>, vector<2x4x3xf32> -> vector<2x4x3xf32>
    %182 = vector.shape_cast %181 : vector<2x4x3xf32> to vector<8x3xf32>
    %183 = tpu.concatenate %42, %62, %82, %102, %122, %142, %162, %182 in 1 : vector<8x3xf32>, vector<8x3xf32>, vector<8x3xf32>, vector<8x3xf32>, vector<8x3xf32>, vector<8x3xf32>, vector<8x3xf32>, vector<8x3xf32> -> vector<8x24xf32>
    %c0_61 = arith.constant 0 : index
    %c0_62 = arith.constant 0 : index
    %184 = vector.load %arg11[%c0_61, %c0_62] : memref<24x4xf32, #tpu.memory_space<vmem>>, vector<24x4xf32>
    %cst_63 = arith.constant dense<0.000000e+00> : vector<8x4xf32>
    %185 = tpu.matmul %183, %184, %cst_63 {dimension_numbers = #tpu.dot_dimension_numbers<[1], [0], [0], [1], [0, 0, 1, 1], [], []>} : vector<8x24xf32>, vector<24x4xf32>, vector<8x4xf32> -> vector<8x4xf32>
    %c0_64 = arith.constant 0 : index
    %c0_65 = arith.constant 0 : index
    %186 = vector.load %arg12[%c0_64, %c0_65] : memref<1x4xf32, #tpu.memory_space<vmem>>, vector<1x4xf32>
    %187 = vector.broadcast %186 : vector<1x4xf32> to vector<8x4xf32>
    %188 = arith.addf %185, %187 : vector<8x4xf32>
    %c0_66 = arith.constant 0 : index
    %c0_67 = arith.constant 0 : index
    %189 = vector.load %arg13[%c0_66, %c0_67] : memref<4x32xf32, #tpu.memory_space<vmem>>, vector<4x32xf32>
    %cst_68 = arith.constant dense<0.000000e+00> : vector<8x32xf32>
    %190 = tpu.matmul %188, %189, %cst_68 {dimension_numbers = #tpu.dot_dimension_numbers<[1], [0], [0], [1], [0, 0, 1, 1], [], []>} : vector<8x4xf32>, vector<4x32xf32>, vector<8x32xf32> -> vector<8x32xf32>
    %c0_69 = arith.constant 0 : index
    %c0_70 = arith.constant 0 : index
    %191 = vector.load %arg14[%c0_69, %c0_70] : memref<1x32xf32, #tpu.memory_space<vmem>>, vector<1x32xf32>
    %192 = vector.broadcast %191 : vector<1x32xf32> to vector<8x32xf32>
    %193 = arith.addf %190, %192 : vector<8x32xf32>
    %c0_i32 = arith.constant 0 : i32
    %194 = arith.index_cast %c0_i32 : i32 to index
    %c0_71 = arith.constant 0 : index
    %c0_72 = arith.constant 0 : index
    %195 = vector.load %arg15[%194, %c0_71, %c0_72] : memref<2x1x32xf32, #tpu.memory_space<vmem>>, vector<1x1x32xf32>
    %196 = vector.shape_cast %195 : vector<1x1x32xf32> to vector<1x32xf32>
    %197 = vector.broadcast %196 : vector<1x32xf32> to vector<8x32xf32>
    %198 = arith.mulf %193, %197 : vector<8x32xf32>
    %199 = arith.index_cast %c0_i32 : i32 to index
    %c0_73 = arith.constant 0 : index
    %c0_74 = arith.constant 0 : index
    %200 = vector.load %arg16[%199, %c0_73, %c0_74] : memref<2x1x32xf32, #tpu.memory_space<vmem>>, vector<1x1x32xf32>
    %201 = vector.shape_cast %200 : vector<1x1x32xf32> to vector<1x32xf32>
    %202 = vector.broadcast %201 : vector<1x32xf32> to vector<8x32xf32>
    %203 = arith.addf %198, %202 : vector<8x32xf32>
    %cst_75 = arith.constant 0.000000e+00 : f32
    %204 = vector.broadcast %cst_75 : f32 to vector<8x32xf32>
    %205 = arith.maximumf %203, %204 : vector<8x32xf32>
    %206 = arith.index_cast %c0_i32 : i32 to index
    %c0_76 = arith.constant 0 : index
    %c0_77 = arith.constant 0 : index
    %207 = vector.load %arg17[%206, %c0_76, %c0_77] : memref<2x32x32xf32, #tpu.memory_space<vmem>>, vector<1x32x32xf32>
    %208 = vector.shape_cast %207 : vector<1x32x32xf32> to vector<32x32xf32>
    %cst_78 = arith.constant dense<0.000000e+00> : vector<8x32xf32>
    %209 = tpu.matmul %205, %208, %cst_78 {dimension_numbers = #tpu.dot_dimension_numbers<[1], [0], [0], [1], [0, 0, 1, 1], [], []>} : vector<8x32xf32>, vector<32x32xf32>, vector<8x32xf32> -> vector<8x32xf32>
    %210 = arith.index_cast %c0_i32 : i32 to index
    %c0_79 = arith.constant 0 : index
    %c0_80 = arith.constant 0 : index
    %211 = vector.load %arg18[%210, %c0_79, %c0_80] : memref<2x1x32xf32, #tpu.memory_space<vmem>>, vector<1x1x32xf32>
    %212 = vector.shape_cast %211 : vector<1x1x32xf32> to vector<1x32xf32>
    %213 = vector.broadcast %212 : vector<1x32xf32> to vector<8x32xf32>
    %214 = arith.addf %209, %213 : vector<8x32xf32>
    %215 = arith.index_cast %c0_i32 : i32 to index
    %c0_81 = arith.constant 0 : index
    %c0_82 = arith.constant 0 : index
    %216 = vector.load %arg19[%215, %c0_81, %c0_82] : memref<2x1x32xf32, #tpu.memory_space<vmem>>, vector<1x1x32xf32>
    %217 = vector.shape_cast %216 : vector<1x1x32xf32> to vector<1x32xf32>
    %218 = vector.broadcast %217 : vector<1x32xf32> to vector<8x32xf32>
    %219 = arith.mulf %214, %218 : vector<8x32xf32>
    %220 = arith.index_cast %c0_i32 : i32 to index
    %c0_83 = arith.constant 0 : index
    %c0_84 = arith.constant 0 : index
    %221 = vector.load %arg20[%220, %c0_83, %c0_84] : memref<2x1x32xf32, #tpu.memory_space<vmem>>, vector<1x1x32xf32>
    %222 = vector.shape_cast %221 : vector<1x1x32xf32> to vector<1x32xf32>
    %223 = vector.broadcast %222 : vector<1x32xf32> to vector<8x32xf32>
    %224 = arith.addf %219, %223 : vector<8x32xf32>
    %cst_85 = arith.constant 0.000000e+00 : f32
    %225 = vector.broadcast %cst_85 : f32 to vector<8x32xf32>
    %226 = arith.maximumf %224, %225 : vector<8x32xf32>
    %227 = arith.index_cast %c0_i32 : i32 to index
    %c0_86 = arith.constant 0 : index
    %c0_87 = arith.constant 0 : index
    %228 = vector.load %arg21[%227, %c0_86, %c0_87] : memref<2x32x32xf32, #tpu.memory_space<vmem>>, vector<1x32x32xf32>
    %229 = vector.shape_cast %228 : vector<1x32x32xf32> to vector<32x32xf32>
    %cst_88 = arith.constant dense<0.000000e+00> : vector<8x32xf32>
    %230 = tpu.matmul %226, %229, %cst_88 {dimension_numbers = #tpu.dot_dimension_numbers<[1], [0], [0], [1], [0, 0, 1, 1], [], []>} : vector<8x32xf32>, vector<32x32xf32>, vector<8x32xf32> -> vector<8x32xf32>
    %231 = arith.index_cast %c0_i32 : i32 to index
    %c0_89 = arith.constant 0 : index
    %c0_90 = arith.constant 0 : index
    %232 = vector.load %arg22[%231, %c0_89, %c0_90] : memref<2x1x32xf32, #tpu.memory_space<vmem>>, vector<1x1x32xf32>
    %233 = vector.shape_cast %232 : vector<1x1x32xf32> to vector<1x32xf32>
    %234 = vector.broadcast %233 : vector<1x32xf32> to vector<8x32xf32>
    %235 = arith.addf %230, %234 : vector<8x32xf32>
    %236 = arith.addf %193, %235 : vector<8x32xf32>
    %c1_i32 = arith.constant 1 : i32
    %237 = arith.index_cast %c1_i32 : i32 to index
    %c0_91 = arith.constant 0 : index
    %c0_92 = arith.constant 0 : index
    %238 = vector.load %arg15[%237, %c0_91, %c0_92] : memref<2x1x32xf32, #tpu.memory_space<vmem>>, vector<1x1x32xf32>
    %239 = vector.shape_cast %238 : vector<1x1x32xf32> to vector<1x32xf32>
    %240 = vector.broadcast %239 : vector<1x32xf32> to vector<8x32xf32>
    %241 = arith.mulf %236, %240 : vector<8x32xf32>
    %242 = arith.index_cast %c1_i32 : i32 to index
    %c0_93 = arith.constant 0 : index
    %c0_94 = arith.constant 0 : index
    %243 = vector.load %arg16[%242, %c0_93, %c0_94] : memref<2x1x32xf32, #tpu.memory_space<vmem>>, vector<1x1x32xf32>
    %244 = vector.shape_cast %243 : vector<1x1x32xf32> to vector<1x32xf32>
    %245 = vector.broadcast %244 : vector<1x32xf32> to vector<8x32xf32>
    %246 = arith.addf %241, %245 : vector<8x32xf32>
    %cst_95 = arith.constant 0.000000e+00 : f32
    %247 = vector.broadcast %cst_95 : f32 to vector<8x32xf32>
    %248 = arith.maximumf %246, %247 : vector<8x32xf32>
    %249 = arith.index_cast %c1_i32 : i32 to index
    %c0_96 = arith.constant 0 : index
    %c0_97 = arith.constant 0 : index
    %250 = vector.load %arg17[%249, %c0_96, %c0_97] : memref<2x32x32xf32, #tpu.memory_space<vmem>>, vector<1x32x32xf32>
    %251 = vector.shape_cast %250 : vector<1x32x32xf32> to vector<32x32xf32>
    %cst_98 = arith.constant dense<0.000000e+00> : vector<8x32xf32>
    %252 = tpu.matmul %248, %251, %cst_98 {dimension_numbers = #tpu.dot_dimension_numbers<[1], [0], [0], [1], [0, 0, 1, 1], [], []>} : vector<8x32xf32>, vector<32x32xf32>, vector<8x32xf32> -> vector<8x32xf32>
    %253 = arith.index_cast %c1_i32 : i32 to index
    %c0_99 = arith.constant 0 : index
    %c0_100 = arith.constant 0 : index
    %254 = vector.load %arg18[%253, %c0_99, %c0_100] : memref<2x1x32xf32, #tpu.memory_space<vmem>>, vector<1x1x32xf32>
    %255 = vector.shape_cast %254 : vector<1x1x32xf32> to vector<1x32xf32>
    %256 = vector.broadcast %255 : vector<1x32xf32> to vector<8x32xf32>
    %257 = arith.addf %252, %256 : vector<8x32xf32>
    %258 = arith.index_cast %c1_i32 : i32 to index
    %c0_101 = arith.constant 0 : index
    %c0_102 = arith.constant 0 : index
    %259 = vector.load %arg19[%258, %c0_101, %c0_102] : memref<2x1x32xf32, #tpu.memory_space<vmem>>, vector<1x1x32xf32>
    %260 = vector.shape_cast %259 : vector<1x1x32xf32> to vector<1x32xf32>
    %261 = vector.broadcast %260 : vector<1x32xf32> to vector<8x32xf32>
    %262 = arith.mulf %257, %261 : vector<8x32xf32>
    %263 = arith.index_cast %c1_i32 : i32 to index
    %c0_103 = arith.constant 0 : index
    %c0_104 = arith.constant 0 : index
    %264 = vector.load %arg20[%263, %c0_103, %c0_104] : memref<2x1x32xf32, #tpu.memory_space<vmem>>, vector<1x1x32xf32>
    %265 = vector.shape_cast %264 : vector<1x1x32xf32> to vector<1x32xf32>
    %266 = vector.broadcast %265 : vector<1x32xf32> to vector<8x32xf32>
    %267 = arith.addf %262, %266 : vector<8x32xf32>
    %cst_105 = arith.constant 0.000000e+00 : f32
    %268 = vector.broadcast %cst_105 : f32 to vector<8x32xf32>
    %269 = arith.maximumf %267, %268 : vector<8x32xf32>
    %270 = arith.index_cast %c1_i32 : i32 to index
    %c0_106 = arith.constant 0 : index
    %c0_107 = arith.constant 0 : index
    %271 = vector.load %arg21[%270, %c0_106, %c0_107] : memref<2x32x32xf32, #tpu.memory_space<vmem>>, vector<1x32x32xf32>
    %272 = vector.shape_cast %271 : vector<1x32x32xf32> to vector<32x32xf32>
    %cst_108 = arith.constant dense<0.000000e+00> : vector<8x32xf32>
    %273 = tpu.matmul %269, %272, %cst_108 {dimension_numbers = #tpu.dot_dimension_numbers<[1], [0], [0], [1], [0, 0, 1, 1], [], []>} : vector<8x32xf32>, vector<32x32xf32>, vector<8x32xf32> -> vector<8x32xf32>
    %274 = arith.index_cast %c1_i32 : i32 to index
    %c0_109 = arith.constant 0 : index
    %c0_110 = arith.constant 0 : index
    %275 = vector.load %arg22[%274, %c0_109, %c0_110] : memref<2x1x32xf32, #tpu.memory_space<vmem>>, vector<1x1x32xf32>
    %276 = vector.shape_cast %275 : vector<1x1x32xf32> to vector<1x32xf32>
    %277 = vector.broadcast %276 : vector<1x32xf32> to vector<8x32xf32>
    %278 = arith.addf %273, %277 : vector<8x32xf32>
    %279 = arith.addf %236, %278 : vector<8x32xf32>
    %c2_i32 = arith.constant 2 : i32
    %c0_111 = arith.constant 0 : index
    %c0_112 = arith.constant 0 : index
    %280 = vector.load %arg23[%c0_111, %c0_112] : memref<32x8xf32, #tpu.memory_space<vmem>>, vector<32x8xf32>
    %cst_113 = arith.constant dense<0.000000e+00> : vector<8x8xf32>
    %281 = tpu.matmul %279, %280, %cst_113 {dimension_numbers = #tpu.dot_dimension_numbers<[1], [0], [0], [1], [0, 0, 1, 1], [], []>} : vector<8x32xf32>, vector<32x8xf32>, vector<8x8xf32> -> vector<8x8xf32>
    %c0_114 = arith.constant 0 : index
    %c0_115 = arith.constant 0 : index
    %282 = vector.load %arg24[%c0_114, %c0_115] : memref<1x8xf32, #tpu.memory_space<vmem>>, vector<1x8xf32>
    %283 = vector.broadcast %282 : vector<1x8xf32> to vector<8x8xf32>
    %284 = arith.addf %281, %283 : vector<8x8xf32>
    %285 = vector.extract_strided_slice %284 {offsets = [0, 0], sizes = [8, 4], strides = [1, 1]} : vector<8x8xf32> to vector<8x4xf32>
    %286 = vector.extract_strided_slice %284 {offsets = [0, 4], sizes = [8, 4], strides = [1, 1]} : vector<8x8xf32> to vector<8x4xf32>
    %cst_116 = arith.constant 0.000000e+00 : f32
    %287 = vector.broadcast %cst_116 : f32 to vector<8x4xf32>
    %288 = arith.subf %287, %285 : vector<8x4xf32>
    %289 = math.exp %288 : vector<8x4xf32>
    %cst_117 = arith.constant 1.000000e+00 : f32
    %290 = vector.broadcast %cst_117 : f32 to vector<8x4xf32>
    %291 = arith.addf %290, %289 : vector<8x4xf32>
    %292 = tpu.reciprocal %291 : vector<8x4xf32> -> vector<8x4xf32>
    %cst_118 = arith.constant 5.000000e-01 : f32
    %293 = vector.broadcast %cst_118 : f32 to vector<8x4xf32>
    %294 = arith.addf %292, %293 : vector<8x4xf32>
    %c0_119 = arith.constant 0 : index
    %c0_120 = arith.constant 0 : index
    %c0_121 = arith.constant 0 : index
    %295 = vector.load %arg3[%c0_119, %c0_120, %c0_121] : memref<2x4x4xf32, #tpu.memory_space<vmem>>, vector<2x4x4xf32>
    %296 = vector.shape_cast %295 : vector<2x4x4xf32> to vector<8x4xf32>
    %297 = arith.mulf %294, %296 : vector<8x4xf32>
    %298 = arith.addf %297, %286 : vector<8x4xf32>
    %299 = vector.shape_cast %298 : vector<8x4xf32> to vector<2x4x4xf32>
    %c0_122 = arith.constant 0 : index
    %c0_123 = arith.constant 0 : index
    %c0_124 = arith.constant 0 : index
    %300 = vector.load %arg25[%c0_122, %c0_123, %c0_124] : memref<2x4x4xf32, #tpu.memory_space<vmem>>, vector<2x4x4xf32>
    tpu.vector_store %arg25[%c0_122, %c0_123, %c0_124], %299 {strides = array<i32>} : memref<2x4x4xf32, #tpu.memory_space<vmem>>, vector<2x4x4xf32>,
    %301 = math.log %294 : vector<8x4xf32>
    %302 = vector.shape_cast %301 : vector<8x4xf32> to vector<2x4x4xf32>
    %cst_125 = arith.constant dense<0.000000e+00> : vector<2x4xf32>
    %303 = vector.multi_reduction <add>, %302, %cst_125 [2] : vector<2x4x4xf32> to vector<2x4xf32>
    %cst_126 = arith.constant dense<0.000000e+00> : vector<2xf32>
    %304 = vector.multi_reduction <add>, %303, %cst_126 [1] : vector<2x4xf32> to vector<2xf32>
    %305 = vector.shape_cast %304 : vector<2xf32> to vector<2x1xf32>
    %cst_127 = arith.constant 1.250000e-01 : f32
    %306 = vector.broadcast %cst_127 : f32 to vector<2x1xf32>
    %307 = arith.mulf %305, %306 : vector<2x1xf32>
    %c0_128 = arith.constant 0 : index
    %c0_129 = arith.constant 0 : index
    %308 = vector.load %arg26[%c0_128, %c0_129] : memref<2x1xf32, #tpu.memory_space<vmem>>, vector<2x1xf32>
    tpu.vector_store %arg26[%c0_128, %c0_129], %307 {strides = array<i32>} : memref<2x1xf32, #tpu.memory_space<vmem>>, vector<2x1xf32>,
    return
  }
  func.func @transform_0(%arg0: i32) -> (i32, i32, i32) {
    %c0_i32 = arith.constant 0 : i32
    %c0_i32_0 = arith.constant 0 : i32
    %c0_i32_1 = arith.constant 0 : i32
    return %arg0, %c0_i32, %c0_i32_0 : i32, i32, i32
  }
  func.func @transform_1(%arg0: i32) -> (i32, i32, i32) {
    %c0_i32 = arith.constant 0 : i32
    %c0_i32_0 = arith.constant 0 : i32
    %c0_i32_1 = arith.constant 0 : i32
    return %arg0, %c0_i32, %c0_i32_0 : i32, i32, i32
  }
  func.func @transform_2(%arg0: i32) -> (i32, i32, i32) {
    %c0_i32 = arith.constant 0 : i32
    %c0_i32_0 = arith.constant 0 : i32
    %c0_i32_1 = arith.constant 0 : i32
    return %arg0, %c0_i32, %c0_i32_0 : i32, i32, i32
  }
  func.func @transform_3(%arg0: i32) -> (i32, i32) {
    %c0_i32 = arith.constant 0 : i32
    %c0_i32_0 = arith.constant 0 : i32
    %c0_i32_1 = arith.constant 0 : i32
    return %c0_i32, %c0_i32_0 : i32, i32
  }
  func.func @transform_4(%arg0: i32) -> (i32, i32) {
    %c0_i32 = arith.constant 0 : i32
    %c0_i32_0 = arith.constant 0 : i32
    %c0_i32_1 = arith.constant 0 : i32
    return %c0_i32, %c0_i32_0 : i32, i32
  }
  func.func @transform_5(%arg0: i32) -> (i32, i32) {
    %c0_i32 = arith.constant 0 : i32
    %c0_i32_0 = arith.constant 0 : i32
    %c0_i32_1 = arith.constant 0 : i32
    return %c0_i32, %c0_i32_0 : i32, i32
  }
  func.func @transform_6(%arg0: i32) -> (i32, i32) {
    %c0_i32 = arith.constant 0 : i32
    %c0_i32_0 = arith.constant 0 : i32
    %c0_i32_1 = arith.constant 0 : i32
    return %c0_i32, %c0_i32_0 : i32, i32
  }
  func.func @transform_7(%arg0: i32) -> (i32, i32) {
    %c0_i32 = arith.constant 0 : i32
    %c0_i32_0 = arith.constant 0 : i32
    %c0_i32_1 = arith.constant 0 : i32
    return %c0_i32, %c0_i32_0 : i32, i32
  }
  func.func @transform_8(%arg0: i32) -> (i32, i32) {
    %c0_i32 = arith.constant 0 : i32
    %c0_i32_0 = arith.constant 0 : i32
    %c0_i32_1 = arith.constant 0 : i32
    return %c0_i32, %c0_i32_0 : i32, i32
  }
  func.func @transform_9(%arg0: i32) -> (i32, i32) {
    %c0_i32 = arith.constant 0 : i32
    %c0_i32_0 = arith.constant 0 : i32
    %c0_i32_1 = arith.constant 0 : i32
    return %c0_i32, %c0_i32_0 : i32, i32
  }
  func.func @transform_10(%arg0: i32) -> (i32, i32) {
    %c0_i32 = arith.constant 0 : i32
    %c0_i32_0 = arith.constant 0 : i32
    %c0_i32_1 = arith.constant 0 : i32
    return %c0_i32, %c0_i32_0 : i32, i32
  }
  func.func @transform_11(%arg0: i32) -> (i32, i32) {
    %c0_i32 = arith.constant 0 : i32
    %c0_i32_0 = arith.constant 0 : i32
    %c0_i32_1 = arith.constant 0 : i32
    return %c0_i32, %c0_i32_0 : i32, i32
  }
  func.func @transform_12(%arg0: i32) -> (i32, i32) {
    %c0_i32 = arith.constant 0 : i32
    %c0_i32_0 = arith.constant 0 : i32
    %c0_i32_1 = arith.constant 0 : i32
    return %c0_i32, %c0_i32_0 : i32, i32
  }
  func.func @transform_13(%arg0: i32) -> (i32, i32) {
    %c0_i32 = arith.constant 0 : i32
    %c0_i32_0 = arith.constant 0 : i32
    %c0_i32_1 = arith.constant 0 : i32
    return %c0_i32, %c0_i32_0 : i32, i32
  }
  func.func @transform_14(%arg0: i32) -> (i32, i32, i32) {
    %c0_i32 = arith.constant 0 : i32
    %c0_i32_0 = arith.constant 0 : i32
    %c0_i32_1 = arith.constant 0 : i32
    %c0_i32_2 = arith.constant 0 : i32
    return %c0_i32, %c0_i32_0, %c0_i32_1 : i32, i32, i32
  }
  func.func @transform_15(%arg0: i32) -> (i32, i32, i32) {
    %c0_i32 = arith.constant 0 : i32
    %c0_i32_0 = arith.constant 0 : i32
    %c0_i32_1 = arith.constant 0 : i32
    %c0_i32_2 = arith.constant 0 : i32
    return %c0_i32, %c0_i32_0, %c0_i32_1 : i32, i32, i32
  }
  func.func @transform_16(%arg0: i32) -> (i32, i32, i32) {
    %c0_i32 = arith.constant 0 : i32
    %c0_i32_0 = arith.constant 0 : i32
    %c0_i32_1 = arith.constant 0 : i32
    %c0_i32_2 = arith.constant 0 : i32
    return %c0_i32, %c0_i32_0, %c0_i32_1 : i32, i32, i32
  }
  func.func @transform_17(%arg0: i32) -> (i32, i32, i32) {
    %c0_i32 = arith.constant 0 : i32
    %c0_i32_0 = arith.constant 0 : i32
    %c0_i32_1 = arith.constant 0 : i32
    %c0_i32_2 = arith.constant 0 : i32
    return %c0_i32, %c0_i32_0, %c0_i32_1 : i32, i32, i32
  }
  func.func @transform_18(%arg0: i32) -> (i32, i32, i32) {
    %c0_i32 = arith.constant 0 : i32
    %c0_i32_0 = arith.constant 0 : i32
    %c0_i32_1 = arith.constant 0 : i32
    %c0_i32_2 = arith.constant 0 : i32
    return %c0_i32, %c0_i32_0, %c0_i32_1 : i32, i32, i32
  }
  func.func @transform_19(%arg0: i32) -> (i32, i32, i32) {
    %c0_i32 = arith.constant 0 : i32
    %c0_i32_0 = arith.constant 0 : i32
    %c0_i32_1 = arith.constant 0 : i32
    %c0_i32_2 = arith.constant 0 : i32
    return %c0_i32, %c0_i32_0, %c0_i32_1 : i32, i32, i32
  }
  func.func @transform_20(%arg0: i32) -> (i32, i32, i32) {
    %c0_i32 = arith.constant 0 : i32
    %c0_i32_0 = arith.constant 0 : i32
    %c0_i32_1 = arith.constant 0 : i32
    %c0_i32_2 = arith.constant 0 : i32
    return %c0_i32, %c0_i32_0, %c0_i32_1 : i32, i32, i32
  }
  func.func @transform_21(%arg0: i32) -> (i32, i32, i32) {
    %c0_i32 = arith.constant 0 : i32
    %c0_i32_0 = arith.constant 0 : i32
    %c0_i32_1 = arith.constant 0 : i32
    %c0_i32_2 = arith.constant 0 : i32
    return %c0_i32, %c0_i32_0, %c0_i32_1 : i32, i32, i32
  }
  func.func @transform_22(%arg0: i32) -> (i32, i32) {
    %c0_i32 = arith.constant 0 : i32
    %c0_i32_0 = arith.constant 0 : i32
    %c0_i32_1 = arith.constant 0 : i32
    return %c0_i32, %c0_i32_0 : i32, i32
  }
  func.func @transform_23(%arg0: i32) -> (i32, i32) {
    %c0_i32 = arith.constant 0 : i32
    %c0_i32_0 = arith.constant 0 : i32
    %c0_i32_1 = arith.constant 0 : i32
    return %c0_i32, %c0_i32_0 : i32, i32
  }
  func.func @transform_24(%arg0: i32) -> (i32, i32, i32) {
    %c0_i32 = arith.constant 0 : i32
    %c0_i32_0 = arith.constant 0 : i32
    %c0_i32_1 = arith.constant 0 : i32
    return %arg0, %c0_i32, %c0_i32_0 : i32, i32, i32
  }
  func.func @transform_25(%arg0: i32) -> (i32, i32) {
    %c0_i32 = arith.constant 0 : i32
    %c0_i32_0 = arith.constant 0 : i32
    return %arg0, %c0_i32 : i32, i32
  }
}

</mosaic_0001>

<llo_original>
// kernel: additive_coupling_self_attention_forward.2
$region0: #{additive_coupling_self_attention_forward.2}
  #allocation0 [shape = 'u32[]', space=smem, size = 0x4, offset = 0x4, fixed_abs, tag = 'smem constant byte address 0x4 - core index']
  #allocation1 [shape = 'u32[144,128]{1,0:T(1,128)}', space=vmem, size = 0x12000, scoped, tag = 'internal scratch']
  %s0 = inlined_call_operand.vmem [shape: f32[2,4,6], index: 0, kind: input, shape index: {}]
  %s1 = inlined_call_operand.vmem [shape: f32[2,4,4], index: 1, kind: input, shape index: {}]
  %s2 = inlined_call_operand.vmem [shape: f32[2,4,4], index: 2, kind: input, shape index: {}]
  %s3 = inlined_call_operand.vmem [shape: f32[4,4], index: 3, kind: input, shape index: {}]
  %s4 = inlined_call_operand.vmem [shape: f32[6,24], index: 4, kind: input, shape index: {}]
  %s5 = inlined_call_operand.vmem [shape: f32[1,24], index: 5, kind: input, shape index: {}]
  %s6 = inlined_call_operand.vmem [shape: f32[4,24], index: 6, kind: input, shape index: {}]
  %s7 = inlined_call_operand.vmem [shape: f32[1,24], index: 7, kind: input, shape index: {}]
  %s8 = inlined_call_operand.vmem [shape: f32[4,24], index: 8, kind: input, shape index: {}]
  %s9 = inlined_call_operand.vmem [shape: f32[1,24], index: 9, kind: input, shape index: {}]
  %s10 = inlined_call_operand.vmem [shape: f32[24,4], index: 10, kind: input, shape index: {}]
  %s11 = inlined_call_operand.vmem [shape: f32[1,4], index: 11, kind: input, shape index: {}]
  %s12 = inlined_call_operand.vmem [shape: f32[4,32], index: 12, kind: input, shape index: {}]
  %s13 = inlined_call_operand.vmem [shape: f32[1,32], index: 13, kind: input, shape index: {}]
  %s14 = inlined_call_operand.vmem [shape: f32[2,1,32], index: 14, kind: input, shape index: {}]
  %s15 = inlined_call_operand.vmem [shape: f32[2,1,32], index: 15, kind: input, shape index: {}]
  %s16 = inlined_call_operand.vmem [shape: f32[2,32,32], index: 16, kind: input, shape index: {}]
  %s17 = inlined_call_operand.vmem [shape: f32[2,1,32], index: 17, kind: input, shape index: {}]
  %s18 = inlined_call_operand.vmem [shape: f32[2,1,32], index: 18, kind: input, shape index: {}]
  %s19 = inlined_call_operand.vmem [shape: f32[2,1,32], index: 19, kind: input, shape index: {}]
  %s20 = inlined_call_operand.vmem [shape: f32[2,32,32], index: 20, kind: input, shape index: {}]
  %s21 = inlined_call_operand.vmem [shape: f32[2,1,32], index: 21, kind: input, shape index: {}]
  %s22 = inlined_call_operand.vmem [shape: f32[32,8], index: 22, kind: input, shape index: {}]
  %s23 = inlined_call_operand.vmem [shape: f32[1,8], index: 23, kind: input, shape index: {}]
  %s24 = inlined_call_operand.vmem [shape: f32[2,4,4], index: 24, kind: output, shape index: {0}]
  %s25 = inlined_call_operand.vmem [shape: f32[2,1], index: 25, kind: output, shape index: {1}]
  %26 = xla_tuple %s24, %s25
  %s27 = sld [smem:[#allocation0]]
  $region114: #{additive_coupling_self_attention_forward.2} parent=0
    _
  %s29 = ssub.s32 1, %s27
  %s30 = scalar_select 0, %s29, %s27
  // Predicated region
  $region2: #{additive_coupling_self_attention_forward.2} parent=0 // pred_check
    _
  $region3: #{additive_coupling_self_attention_forward.2} parent=0 // pred_check_branch
    %32 = sbr.rel (0) target = $region5
  $region4: #{additive_coupling_self_attention_forward.2} parent=0 // pred_region
    _
  $region5: #{additive_coupling_self_attention_forward.2} parent=0 // pred_fallthru
    _
  // Predicated region
  $region6: #{additive_coupling_self_attention_forward.2} parent=0 // pred_check
    _
  $region7: #{additive_coupling_self_attention_forward.2} parent=0 // pred_check_branch
    %34 = sbr.rel (0) target = $region9
  $region8: #{additive_coupling_self_attention_forward.2} parent=0 // pred_region
    _
  $region9: #{additive_coupling_self_attention_forward.2} parent=0 // pred_fallthru
    _
  // Predicated region
  $region10: #{additive_coupling_self_attention_forward.2} parent=0 // pred_check
    _
  $region11: #{additive_coupling_self_attention_forward.2} parent=0 // pred_check_branch
    %36 = sbr.rel (0) target = $region13
  $region12: #{additive_coupling_self_attention_forward.2} parent=0 // pred_region
    _
  $region13: #{additive_coupling_self_attention_forward.2} parent=0 // pred_fallthru
    _
  // Predicated region
  $region14: #{additive_coupling_self_attention_forward.2} parent=0 // pred_check
    _
  $region15: #{additive_coupling_self_attention_forward.2} parent=0 // pred_check_branch
    %38 = sbr.rel (0) target = $region17
  $region16: #{additive_coupling_self_attention_forward.2} parent=0 // pred_region
    _
  $region17: #{additive_coupling_self_attention_forward.2} parent=0 // pred_fallthru
    _
  // Predicated region
  $region18: #{additive_coupling_self_attention_forward.2} parent=0 // pred_check
    _
  $region19: #{additive_coupling_self_attention_forward.2} parent=0 // pred_check_branch
    %40 = sbr.rel (0) target = $region21
  $region20: #{additive_coupling_self_attention_forward.2} parent=0 // pred_region
    _
  $region21: #{additive_coupling_self_attention_forward.2} parent=0 // pred_fallthru
    _
  // Predicated region
  $region22: #{additive_coupling_self_attention_forward.2} parent=0 // pred_check
    _
  $region23: #{additive_coupling_self_attention_forward.2} parent=0 // pred_check_branch
    %42 = sbr.rel (0) target = $region25
  $region24: #{additive_coupling_self_attention_forward.2} parent=0 // pred_region
    _
  $region25: #{additive_coupling_self_attention_forward.2} parent=0 // pred_fallthru
    _
  // Predicated region
  $region26: #{additive_coupling_self_attention_forward.2} parent=0 // pred_check
    _
  $region27: #{additive_coupling_self_attention_forward.2} parent=0 // pred_check_branch
    %44 = sbr.rel (0) target = $region29
  $region28: #{additive_coupling_self_attention_forward.2} parent=0 // pred_region
    _
  $region29: #{additive_coupling_self_attention_forward.2} parent=0 // pred_fallthru
    _
  // Predicated region
  $region30: #{additive_coupling_self_attention_forward.2} parent=0 // pred_check
    _
  $region31: #{additive_coupling_self_attention_forward.2} parent=0 // pred_check_branch
    %46 = sbr.rel (0) target = $region33
  $region32: #{additive_coupling_self_attention_forward.2} parent=0 // pred_region
    _
  $region33: #{additive_coupling_self_attention_forward.2} parent=0 // pred_fallthru
    _
  // Predicated region
  $region34: #{additive_coupling_self_attention_forward.2} parent=0 // pred_check
    _
  $region35: #{additive_coupling_self_attention_forward.2} parent=0 // pred_check_branch
    %48 = sbr.rel (0) target = $region37
  $region36: #{additive_coupling_self_attention_forward.2} parent=0 // pred_region
    _
  $region37: #{additive_coupling_self_attention_forward.2} parent=0 // pred_fallthru
    _
  // Predicated region
  $region38: #{additive_coupling_self_attention_forward.2} parent=0 // pred_check
    _
  $region39: #{additive_coupling_self_attention_forward.2} parent=0 // pred_check_branch
    %50 = sbr.rel (0) target = $region41
  $region40: #{additive_coupling_self_attention_forward.2} parent=0 // pred_region
    _
  $region41: #{additive_coupling_self_attention_forward.2} parent=0 // pred_fallthru
    _
  // Predicated region
  $region42: #{additive_coupling_self_attention_forward.2} parent=0 // pred_check
    _
  $region43: #{additive_coupling_self_attention_forward.2} parent=0 // pred_check_branch
    %52 = sbr.rel (0) target = $region45
  $region44: #{additive_coupling_self_attention_forward.2} parent=0 // pred_region
    _
  $region45: #{additive_coupling_self_attention_forward.2} parent=0 // pred_fallthru
    _
  // Predicated region
  $region46: #{additive_coupling_self_attention_forward.2} parent=0 // pred_check
    _
  $region47: #{additive_coupling_self_attention_forward.2} parent=0 // pred_check_branch
    %54 = sbr.rel (0) target = $region49
  $region48: #{additive_coupling_self_attention_forward.2} parent=0 // pred_region
    _
  $region49: #{additive_coupling_self_attention_forward.2} parent=0 // pred_fallthru
    _
  // Predicated region
  $region50: #{additive_coupling_self_attention_forward.2} parent=0 // pred_check
    _
  $region51: #{additive_coupling_self_attention_forward.2} parent=0 // pred_check_branch
    %56 = sbr.rel (0) target = $region53
  $region52: #{additive_coupling_self_attention_forward.2} parent=0 // pred_region
    _
  $region53: #{additive_coupling_self_attention_forward.2} parent=0 // pred_fallthru
    _
  // Predicated region
  $region54: #{additive_coupling_self_attention_forward.2} parent=0 // pred_check
    _
  $region55: #{additive_coupling_self_attention_forward.2} parent=0 // pred_check_branch
    %58 = sbr.rel (0) target = $region57
  $region56: #{additive_coupling_self_attention_forward.2} parent=0 // pred_region
    _
  $region57: #{additive_coupling_self_attention_forward.2} parent=0 // pred_fallthru
    _
  // Predicated region
  $region58: #{additive_coupling_self_attention_forward.2} parent=0 // pred_check
    _
  $region59: #{additive_coupling_self_attention_forward.2} parent=0 // pred_check_branch
    %60 = sbr.rel (0) target = $region61
  $region60: #{additive_coupling_self_attention_forward.2} parent=0 // pred_region
    _
  $region61: #{additive_coupling_self_attention_forward.2} parent=0 // pred_fallthru
    _
  // Predicated region
  $region62: #{additive_coupling_self_attention_forward.2} parent=0 // pred_check
    _
  $region63: #{additive_coupling_self_attention_forward.2} parent=0 // pred_check_branch
    %62 = sbr.rel (0) target = $region65
  $region64: #{additive_coupling_self_attention_forward.2} parent=0 // pred_region
    _
  $region65: #{additive_coupling_self_attention_forward.2} parent=0 // pred_fallthru
    _
  // Predicated region
  $region66: #{additive_coupling_self_attention_forward.2} parent=0 // pred_check
    _
  $region67: #{additive_coupling_self_attention_forward.2} parent=0 // pred_check_branch
    %64 = sbr.rel (0) target = $region69
  $region68: #{additive_coupling_self_attention_forward.2} parent=0 // pred_region
    _
  $region69: #{additive_coupling_self_attention_forward.2} parent=0 // pred_fallthru
    _
  // Predicated region
  $region70: #{additive_coupling_self_attention_forward.2} parent=0 // pred_check
    _
  $region71: #{additive_coupling_self_attention_forward.2} parent=0 // pred_check_branch
    %66 = sbr.rel (0) target = $region73
  $region72: #{additive_coupling_self_attention_forward.2} parent=0 // pred_region
    _
  $region73: #{additive_coupling_self_attention_forward.2} parent=0 // pred_fallthru
    _
  // Predicated region
  $region74: #{additive_coupling_self_attention_forward.2} parent=0 // pred_check
    _
  $region75: #{additive_coupling_self_attention_forward.2} parent=0 // pred_check_branch
    %68 = sbr.rel (0) target = $region77
  $region76: #{additive_coupling_self_attention_forward.2} parent=0 // pred_region
    _
  $region77: #{additive_coupling_self_attention_forward.2} parent=0 // pred_fallthru
    _
  // Predicated region
  $region78: #{additive_coupling_self_attention_forward.2} parent=0 // pred_check
    _
  $region79: #{additive_coupling_self_attention_forward.2} parent=0 // pred_check_branch
    %70 = sbr.rel (0) target = $region81
  $region80: #{additive_coupling_self_attention_forward.2} parent=0 // pred_region
    _
  $region81: #{additive_coupling_self_attention_forward.2} parent=0 // pred_fallthru
    _
  // Predicated region
  $region82: #{additive_coupling_self_attention_forward.2} parent=0 // pred_check
    _
  $region83: #{additive_coupling_self_attention_forward.2} parent=0 // pred_check_branch
    %72 = sbr.rel (0) target = $region85
  $region84: #{additive_coupling_self_attention_forward.2} parent=0 // pred_region
    _
  $region85: #{additive_coupling_self_attention_forward.2} parent=0 // pred_fallthru
    _
  // Predicated region
  $region86: #{additive_coupling_self_attention_forward.2} parent=0 // pred_check
    _
  $region87: #{additive_coupling_self_attention_forward.2} parent=0 // pred_check_branch
    %74 = sbr.rel (0) target = $region89
  $region88: #{additive_coupling_self_attention_forward.2} parent=0 // pred_region
    _
  $region89: #{additive_coupling_self_attention_forward.2} parent=0 // pred_fallthru
    _
  // Predicated region
  $region90: #{additive_coupling_self_attention_forward.2} parent=0 // pred_check
    _
  $region91: #{additive_coupling_self_attention_forward.2} parent=0 // pred_check_branch
    %76 = sbr.rel (0) target = $region93
  $region92: #{additive_coupling_self_attention_forward.2} parent=0 // pred_region
    _
  $region93: #{additive_coupling_self_attention_forward.2} parent=0 // pred_fallthru
    _
  // Predicated region
  $region94: #{additive_coupling_self_attention_forward.2} parent=0 // pred_check
    _
  $region95: #{additive_coupling_self_attention_forward.2} parent=0 // pred_check_branch
    %78 = sbr.rel (0) target = $region97
  $region96: #{additive_coupling_self_attention_forward.2} parent=0 // pred_region
    _
  $region97: #{additive_coupling_self_attention_forward.2} parent=0 // pred_fallthru
    _
  %v79 = vld [vmem:[%s3] sm:$0xf]
  %v80 = vld [vmem:[%s0] sm:$0xf]
  %v81 = vld [vmem:[%s0 + $0x4] sm:$0xf]
  %v82 = vld [vmem:[%s1] sm:$0xf]
  %v83 = vld [vmem:[%s1 + $0x4] sm:$0xf]
  %v84 = vld [vmem:[%s4] sm:$0x3f]
  %v85 = vld [vmem:[%s5] sm:$0x1]
  %v87 = vlaneseq
  %v88 = vshrl.u32 %v87, 7
  %v89 = vsub.s32 0, %v88
  %v90 = vrot.slane %v85, %v89
  %v94 = vcombine.low %v80, %v81
  %vm95 = vcmask 48128
  %v96 = vsel %vm95, %v94, 0
  %vm98 = vcmask 1045504
  %v100 = vsel %vm98, %v84, 0
  %102 = vmatprep.subr.mxu0 0.0
  %103 = vmatpush1.msra.mxu0 %v100
  %104 = vmatprep.subr.mxu0 0.0
  %105 = vmatpush1.msra.mxu0 0.0
  %106 = vmatprep.subr.mxu0 0.0
  %107 = vmatpush1.msra.mxu0 0.0
  %108 = vmatprep.subr.mxu0 0.0
  %109 = vmatpush1.msra.mxu0 0.0
  %110 = vmatprep.subr.mxu0 0.0
  %111 = vmatpush1.msra.mxu0 0.0
  %112 = vmatprep.subr.mxu0 0.0
  %113 = vmatpush1.msra.mxu0 0.0
  %114 = vmatprep.subr.mxu0 0.0
  %115 = vmatpush1.msra.mxu0 0.0
  %116 = vmatprep.subr.mxu0 0.0
  %117 = vmatpush1.msra.mxu0 0.0
  %118 = vmatprep.subr.mxu0 0.0
  %119 = vmatpush1.msra.mxu0 0.0
  %120 = vmatprep.subr.mxu0 0.0
  %121 = vmatpush1.msra.mxu0 0.0
  %122 = vmatprep.subr.mxu0 0.0
  %123 = vmatpush1.msra.mxu0 0.0
  %124 = vmatprep.subr.mxu0 0.0
  %125 = vmatpush1.msra.mxu0 0.0
  %126 = vmatprep.subr.mxu0 0.0
  %127 = vmatpush1.msra.mxu0 0.0
  %128 = vmatprep.subr.mxu0 0.0
  %129 = vmatpush1.msra.mxu0 0.0
  %130 = vmatprep.subr.mxu0 0.0
  %131 = vmatpush1.msra.mxu0 0.0
  %132 = vmatprep.subr.mxu0 0.0
  %133 = vmatpush1.msra.mxu0 0.0
  %134 = vmatprep.subr.mxu0 0.0
  %135 = vmatpush1.msra.mxu0 0.0
  %136 = vmatprep.subr.mxu0 0.0
  %137 = vmatpush1.msra.mxu0 0.0
  %138 = vmatprep.subr.mxu0 0.0
  %139 = vmatpush1.msra.mxu0 0.0
  %140 = vmatprep.subr.mxu0 0.0
  %141 = vmatpush1.msra.mxu0 0.0
  %142 = vmatprep.subr.mxu0 0.0
  %143 = vmatpush1.msra.mxu0 0.0
  %144 = vmatprep.subr.mxu0 0.0
  %145 = vmatpush1.msra.mxu0 0.0
  %146 = vmatprep.subr.mxu0 0.0
  %147 = vmatpush1.msra.mxu0 0.0
  %148 = vmatprep.subr.mxu0 0.0
  %149 = vmatpush1.msra.mxu0 0.0
  %150 = vmatprep.subr.mxu0 0.0
  %151 = vmatpush1.msra.mxu0 0.0
  %152 = vmatprep.subr.mxu0 0.0
  %153 = vmatpush1.msra.mxu0 0.0
  %154 = vmatprep.subr.mxu0 0.0
  %155 = vmatpush1.msra.mxu0 0.0
  %156 = vmatprep.subr.mxu0 0.0
  %157 = vmatpush1.msra.mxu0 0.0
  %158 = vmatprep.subr.mxu0 0.0
  %159 = vmatpush1.msra.mxu0 0.0
  %160 = vmatprep.subr.mxu0 0.0
  %161 = vmatpush1.msra.mxu0 0.0
  %162 = vmatprep.subr.mxu0 0.0
  %163 = vmatpush1.msra.mxu0 0.0
  %164 = vmatprep.subr.mxu0 0.0
  %165 = vmatpush1.msra.mxu0 0.0
  %166 = vmatprep.mubr.f32.mxu0 0.0
  %167 = vmatmul.mubr.f32.gmra.mrb[0].mxu0 %v96
  %v168 = vpop.f32.mrb[0].mxu0
  %v169 = vadd.f32 %v90, %v168
  %v170 = vpop.f32.mrb[0].mxu0
  %171 = vdwg.mxu0
  %v173 = vcombine.high %v169, %v169
  %v175 = vld [vmem:[%s6] sm:$0xf]
  %v176 = vld [vmem:[%s7] sm:$0x1]
  %v178 = vlaneseq
  %v179 = vshrl.u32 %v178, 7
  %v180 = vsub.s32 0, %v179
  %v181 = vrot.slane %v176, %v180
  %v185 = vcombine.low %v82, %v83
  %vm186 = vcmask 31744
  %v187 = vsel %vm186, %v185, 0
  %vm189 = vcmask 1043456
  %v191 = vsel %vm189, %v175, 0
  %193 = vmatprep.subr.mxu0 0.0
  %194 = vmatpush1.msra.mxu0 %v191
  %195 = vmatprep.subr.mxu0 0.0
  %196 = vmatpush1.msra.mxu0 0.0
  %197 = vmatprep.subr.mxu0 0.0
  %198 = vmatpush1.msra.mxu0 0.0
  %199 = vmatprep.subr.mxu0 0.0
  %200 = vmatpush1.msra.mxu0 0.0
  %201 = vmatprep.subr.mxu0 0.0
  %202 = vmatpush1.msra.mxu0 0.0
  %203 = vmatprep.subr.mxu0 0.0
  %204 = vmatpush1.msra.mxu0 0.0
  %205 = vmatprep.subr.mxu0 0.0
  %206 = vmatpush1.msra.mxu0 0.0
  %207 = vmatprep.subr.mxu0 0.0
  %208 = vmatpush1.msra.mxu0 0.0
  %209 = vmatprep.subr.mxu0 0.0
  %210 = vmatpush1.msra.mxu0 0.0
  %211 = vmatprep.subr.mxu0 0.0
  %212 = vmatpush1.msra.mxu0 0.0
  %213 = vmatprep.subr.mxu0 0.0
  %214 = vmatpush1.msra.mxu0 0.0
  %215 = vmatprep.subr.mxu0 0.0
  %216 = vmatpush1.msra.mxu0 0.0
  %217 = vmatprep.subr.mxu0 0.0
  %218 = vmatpush1.msra.mxu0 0.0
  %219 = vmatprep.subr.mxu0 0.0
  %220 = vmatpush1.msra.mxu0 0.0
  %221 = vmatprep.subr.mxu0 0.0
  %222 = vmatpush1.msra.mxu0 0.0
  %223 = vmatprep.subr.mxu0 0.0
  %224 = vmatpush1.msra.mxu0 0.0
  %225 = vmatprep.subr.mxu0 0.0
  %226 = vmatpush1.msra.mxu0 0.0
  %227 = vmatprep.subr.mxu0 0.0
  %228 = vmatpush1.msra.mxu0 0.0
  %229 = vmatprep.subr.mxu0 0.0
  %230 = vmatpush1.msra.mxu0 0.0
  %231 = vmatprep.subr.mxu0 0.0
  %232 = vmatpush1.msra.mxu0 0.0
  %233 = vmatprep.subr.mxu0 0.0
  %234 = vmatpush1.msra.mxu0 0.0
  %235 = vmatprep.subr.mxu0 0.0
  %236 = vmatpush1.msra.mxu0 0.0
  %237 = vmatprep.subr.mxu0 0.0
  %238 = vmatpush1.msra.mxu0 0.0
  %239 = vmatprep.subr.mxu0 0.0
  %240 = vmatpush1.msra.mxu0 0.0
  %241 = vmatprep.subr.mxu0 0.0
  %242 = vmatpush1.msra.mxu0 0.0
  %243 = vmatprep.subr.mxu0 0.0
  %244 = vmatpush1.msra.mxu0 0.0
  %245 = vmatprep.subr.mxu0 0.0
  %246 = vmatpush1.msra.mxu0 0.0
  %247 = vmatprep.subr.mxu0 0.0
  %248 = vmatpush1.msra.mxu0 0.0
  %249 = vmatprep.subr.mxu0 0.0
  %250 = vmatpush1.msra.mxu0 0.0
  %251 = vmatprep.subr.mxu0 0.0
  %252 = vmatpush1.msra.mxu0 0.0
  %253 = vmatprep.subr.mxu0 0.0
  %254 = vmatpush1.msra.mxu0 0.0
  %255 = vmatprep.subr.mxu0 0.0
  %256 = vmatpush1.msra.mxu0 0.0
  %257 = vmatprep.mubr.f32.mxu0 0.0
  %258 = vmatmul.mubr.f32.gmra.mrb[0].mxu0 %v187
  %v259 = vpop.f32.mrb[0].mxu0
  %v260 = vadd.f32 %v181, %v259
  %v261 = vpop.f32.mrb[0].mxu0
  %262 = vdwg.mxu0
  %v264 = vcombine.high %v260, %v260
  %v265 = vld [vmem:[%s8] sm:$0xf]
  %v266 = vld [vmem:[%s9] sm:$0x1]
  %v268 = vlaneseq
  %v269 = vshrl.u32 %v268, 7
  %v270 = vsub.s32 0, %v269
  %v271 = vrot.slane %v266, %v270
  %v274 = vsel %vm189, %v265, 0
  %276 = vmatprep.subr.mxu0 0.0
  %277 = vmatpush1.msra.mxu0 %v274
  %278 = vmatprep.subr.mxu0 0.0
  %279 = vmatpush1.msra.mxu0 0.0
  %280 = vmatprep.subr.mxu0 0.0
  %281 = vmatpush1.msra.mxu0 0.0
  %282 = vmatprep.subr.mxu0 0.0
  %283 = vmatpush1.msra.mxu0 0.0
  %284 = vmatprep.subr.mxu0 0.0
  %285 = vmatpush1.msra.mxu0 0.0
  %286 = vmatprep.subr.mxu0 0.0
  %287 = vmatpush1.msra.mxu0 0.0
  %288 = vmatprep.subr.mxu0 0.0
  %289 = vmatpush1.msra.mxu0 0.0
  %290 = vmatprep.subr.mxu0 0.0
  %291 = vmatpush1.msra.mxu0 0.0
  %292 = vmatprep.subr.mxu0 0.0
  %293 = vmatpush1.msra.mxu0 0.0
  %294 = vmatprep.subr.mxu0 0.0
  %295 = vmatpush1.msra.mxu0 0.0
  %296 = vmatprep.subr.mxu0 0.0
  %297 = vmatpush1.msra.mxu0 0.0
  %298 = vmatprep.subr.mxu0 0.0
  %299 = vmatpush1.msra.mxu0 0.0
  %300 = vmatprep.subr.mxu0 0.0
  %301 = vmatpush1.msra.mxu0 0.0
  %302 = vmatprep.subr.mxu0 0.0
  %303 = vmatpush1.msra.mxu0 0.0
  %304 = vmatprep.subr.mxu0 0.0
  %305 = vmatpush1.msra.mxu0 0.0
  %306 = vmatprep.subr.mxu0 0.0
  %307 = vmatpush1.msra.mxu0 0.0
  %308 = vmatprep.subr.mxu0 0.0
  %309 = vmatpush1.msra.mxu0 0.0
  %310 = vmatprep.subr.mxu0 0.0
  %311 = vmatpush1.msra.mxu0 0.0
  %312 = vmatprep.subr.mxu0 0.0
  %313 = vmatpush1.msra.mxu0 0.0
  %314 = vmatprep.subr.mxu0 0.0
  %315 = vmatpush1.msra.mxu0 0.0
  %316 = vmatprep.subr.mxu0 0.0
  %317 = vmatpush1.msra.mxu0 0.0
  %318 = vmatprep.subr.mxu0 0.0
  %319 = vmatpush1.msra.mxu0 0.0
  %320 = vmatprep.subr.mxu0 0.0
  %321 = vmatpush1.msra.mxu0 0.0
  %322 = vmatprep.subr.mxu0 0.0
  %323 = vmatpush1.msra.mxu0 0.0
  %324 = vmatprep.subr.mxu0 0.0
  %325 = vmatpush1.msra.mxu0 0.0
  %326 = vmatprep.subr.mxu0 0.0
  %327 = vmatpush1.msra.mxu0 0.0
  %328 = vmatprep.subr.mxu0 0.0
  %329 = vmatpush1.msra.mxu0 0.0
  %330 = vmatprep.subr.mxu0 0.0
  %331 = vmatpush1.msra.mxu0 0.0
  %332 = vmatprep.subr.mxu0 0.0
  %333 = vmatpush1.msra.mxu0 0.0
  %334 = vmatprep.subr.mxu0 0.0
  %335 = vmatpush1.msra.mxu0 0.0
  %336 = vmatprep.subr.mxu0 0.0
  %337 = vmatpush1.msra.mxu0 0.0
  %338 = vmatprep.subr.mxu0 0.0
  %339 = vmatpush1.msra.mxu0 0.0
  %340 = vmatprep.mubr.f32.mxu0 0.0
  %341 = vmatmul.mubr.f32.gmra.mrb[0].mxu0 %v187
  %v342 = vpop.f32.mrb[0].mxu0
  %v343 = vadd.f32 %v271, %v342
  %v344 = vpop.f32.mrb[0].mxu0
  %345 = vdwg.mxu0
  %v347 = vcombine.high %v343, %v343
  %v348 = vmul.f32 %v169, 0.20412415
  %v349 = vmul.f32 %v173, 0.20412415
  %vm350 = vcmask 23552
  %v352 = vsel %vm350, %v348, 0
  %v354 = vsel %vm350, %v260, 0
  %356 = vmatprep.subr.mxu0 0.0
  %357 = vmatpush1.xpose.msra.mxu0 %v354
  %358 = vmatprep.subr.mxu0 0.0
  %359 = vmatpush1.xpose.msra.mxu0 0.0
  %360 = vmatprep.subr.mxu0 0.0
  %361 = vmatpush1.xpose.msra.mxu0 0.0
  %362 = vmatprep.subr.mxu0 0.0
  %363 = vmatpush1.xpose.msra.mxu0 0.0
  %364 = vmatprep.subr.mxu0 0.0
  %365 = vmatpush1.xpose.msra.mxu0 0.0
  %366 = vmatprep.subr.mxu0 0.0
  %367 = vmatpush1.xpose.msra.mxu0 0.0
  %368 = vmatprep.subr.mxu0 0.0
  %369 = vmatpush1.xpose.msra.mxu0 0.0
  %370 = vmatprep.subr.mxu0 0.0
  %371 = vmatpush1.xpose.msra.mxu0 0.0
  %372 = vmatprep.subr.mxu0 0.0
  %373 = vmatpush1.xpose.msra.mxu0 0.0
  %374 = vmatprep.subr.mxu0 0.0
  %375 = vmatpush1.xpose.msra.mxu0 0.0
  %376 = vmatprep.subr.mxu0 0.0
  %377 = vmatpush1.xpose.msra.mxu0 0.0
  %378 = vmatprep.subr.mxu0 0.0
  %379 = vmatpush1.xpose.msra.mxu0 0.0
  %380 = vmatprep.subr.mxu0 0.0
  %381 = vmatpush1.xpose.msra.mxu0 0.0
  %382 = vmatprep.subr.mxu0 0.0
  %383 = vmatpush1.xpose.msra.mxu0 0.0
  %384 = vmatprep.subr.mxu0 0.0
  %385 = vmatpush1.xpose.msra.mxu0 0.0
  %386 = vmatprep.subr.mxu0 0.0
  %387 = vmatpush1.xpose.msra.mxu0 0.0
  %388 = vmatprep.subr.mxu0 0.0
  %389 = vmatpush1.xpose.msra.mxu0 0.0
  %390 = vmatprep.subr.mxu0 0.0
  %391 = vmatpush1.xpose.msra.mxu0 0.0
  %392 = vmatprep.subr.mxu0 0.0
  %393 = vmatpush1.xpose.msra.mxu0 0.0
  %394 = vmatprep.subr.mxu0 0.0
  %395 = vmatpush1.xpose.msra.mxu0 0.0
  %396 = vmatprep.subr.mxu0 0.0
  %397 = vmatpush1.xpose.msra.mxu0 0.0
  %398 = vmatprep.subr.mxu0 0.0
  %399 = vmatpush1.xpose.msra.mxu0 0.0
  %400 = vmatprep.subr.mxu0 0.0
  %401 = vmatpush1.xpose.msra.mxu0 0.0
  %402 = vmatprep.subr.mxu0 0.0
  %403 = vmatpush1.xpose.msra.mxu0 0.0
  %404 = vmatprep.subr.mxu0 0.0
  %405 = vmatpush1.xpose.msra.mxu0 0.0
  %406 = vmatprep.subr.mxu0 0.0
  %407 = vmatpush1.xpose.msra.mxu0 0.0
  %408 = vmatprep.subr.mxu0 0.0
  %409 = vmatpush1.xpose.msra.mxu0 0.0
  %410 = vmatprep.subr.mxu0 0.0
  %411 = vmatpush1.xpose.msra.mxu0 0.0
  %412 = vmatprep.subr.mxu0 0.0
  %413 = vmatpush1.xpose.msra.mxu0 0.0
  %414 = vmatprep.subr.mxu0 0.0
  %415 = vmatpush1.xpose.msra.mxu0 0.0
  %416 = vmatprep.subr.mxu0 0.0
  %417 = vmatpush1.xpose.msra.mxu0 0.0
  %418 = vmatprep.subr.mxu0 0.0
  %419 = vmatpush1.xpose.msra.mxu0 0.0
  %420 = vmatprep.mubr.f32.mxu0 0.0
  %421 = vmatmul.mubr.f32.gmra.mrb[0].mxu0 %v352
  %v422 = vpop.f32.mrb[0].mxu0
  %v423 = vadd.f32 0.0, %v422
  %v424 = vpop.f32.mrb[0].mxu0
  %425 = vdwg.mxu0
  %v427 = vsel %vm350, %v349, 0
  %v429 = vsel %vm350, %v264, 0
  %431 = vmatprep.subr.mxu0 0.0
  %432 = vmatpush1.xpose.msra.mxu0 %v429
  %433 = vmatprep.subr.mxu0 0.0
  %434 = vmatpush1.xpose.msra.mxu0 0.0
  %435 = vmatprep.subr.mxu0 0.0
  %436 = vmatpush1.xpose.msra.mxu0 0.0
  %437 = vmatprep.subr.mxu0 0.0
  %438 = vmatpush1.xpose.msra.mxu0 0.0
  %439 = vmatprep.subr.mxu0 0.0
  %440 = vmatpush1.xpose.msra.mxu0 0.0
  %441 = vmatprep.subr.mxu0 0.0
  %442 = vmatpush1.xpose.msra.mxu0 0.0
  %443 = vmatprep.subr.mxu0 0.0
  %444 = vmatpush1.xpose.msra.mxu0 0.0
  %445 = vmatprep.subr.mxu0 0.0
  %446 = vmatpush1.xpose.msra.mxu0 0.0
  %447 = vmatprep.subr.mxu0 0.0
  %448 = vmatpush1.xpose.msra.mxu0 0.0
  %449 = vmatprep.subr.mxu0 0.0
  %450 = vmatpush1.xpose.msra.mxu0 0.0
  %451 = vmatprep.subr.mxu0 0.0
  %452 = vmatpush1.xpose.msra.mxu0 0.0
  %453 = vmatprep.subr.mxu0 0.0
  %454 = vmatpush1.xpose.msra.mxu0 0.0
  %455 = vmatprep.subr.mxu0 0.0
  %456 = vmatpush1.xpose.msra.mxu0 0.0
  %457 = vmatprep.subr.mxu0 0.0
  %458 = vmatpush1.xpose.msra.mxu0 0.0
  %459 = vmatprep.subr.mxu0 0.0
  %460 = vmatpush1.xpose.msra.mxu0 0.0
  %461 = vmatprep.subr.mxu0 0.0
  %462 = vmatpush1.xpose.msra.mxu0 0.0
  %463 = vmatprep.subr.mxu0 0.0
  %464 = vmatpush1.xpose.msra.mxu0 0.0
  %465 = vmatprep.subr.mxu0 0.0
  %466 = vmatpush1.xpose.msra.mxu0 0.0
  %467 = vmatprep.subr.mxu0 0.0
  %468 = vmatpush1.xpose.msra.mxu0 0.0
  %469 = vmatprep.subr.mxu0 0.0
  %470 = vmatpush1.xpose.msra.mxu0 0.0
  %471 = vmatprep.subr.mxu0 0.0
  %472 = vmatpush1.xpose.msra.mxu0 0.0
  %473 = vmatprep.subr.mxu0 0.0
  %474 = vmatpush1.xpose.msra.mxu0 0.0
  %475 = vmatprep.subr.mxu0 0.0
  %476 = vmatpush1.xpose.msra.mxu0 0.0
  %477 = vmatprep.subr.mxu0 0.0
  %478 = vmatpush1.xpose.msra.mxu0 0.0
  %479 = vmatprep.subr.mxu0 0.0
  %480 = vmatpush1.xpose.msra.mxu0 0.0
  %481 = vmatprep.subr.mxu0 0.0
  %482 = vmatpush1.xpose.msra.mxu0 0.0
  %483 = vmatprep.subr.mxu0 0.0
  %484 = vmatpush1.xpose.msra.mxu0 0.0
  %485 = vmatprep.subr.mxu0 0.0
  %486 = vmatpush1.xpose.msra.mxu0 0.0
  %487 = vmatprep.subr.mxu0 0.0
  %488 = vmatpush1.xpose.msra.mxu0 0.0
  %489 = vmatprep.subr.mxu0 0.0
  %490 = vmatpush1.xpose.msra.mxu0 0.0
  %491 = vmatprep.subr.mxu0 0.0
  %492 = vmatpush1.xpose.msra.mxu0 0.0
  %493 = vmatprep.subr.mxu0 0.0
  %494 = vmatpush1.xpose.msra.mxu0 0.0
  %495 = vmatprep.mubr.f32.mxu0 0.0
  %496 = vmatmul.mubr.f32.gmra.mrb[0].mxu0 %v427
  %v497 = vpop.f32.mrb[0].mxu0
  %v498 = vadd.f32 0.0, %v497
  %v499 = vpop.f32.mrb[0].mxu0
  %500 = vdwg.mxu0
  %v501 = vsub.f32 %v423, %v79
  %v502 = vsub.f32 %v498, %v79
  %vm503 = vcmask 27648
  %v504 = vsel %vm503, %v501, -inf
  %505 = vmax.xlane.f32.xlu0 %v504
  %v506 = vpop.xlane.xlu0 %505
  %v507 = vsel %vm503, %v502, -inf
  %508 = vmax.xlane.f32.xlu0 %v507
  %v509 = vpop.xlane.xlu0 %508
  %v510 = vsub.f32 %v501, %v506
  %v511 = vsub.f32 %v502, %v509
  %v512 = vmul.f32 %v510, 1.442695
  %v513 = vpow.pop %v512
  %v514 = vmul.f32 %v511, 1.442695
  %v515 = vpow.pop %v514
  %v516 = vsel %vm503, %v513, 0.0
  %517 = vadd.xlane.f32.xlu0 %v516
  %v518 = vpop.xlane.xlu0 %517
  %v519 = vsel %vm503, %v515, 0.0
  %520 = vadd.xlane.f32.xlu0 %v519
  %v521 = vpop.xlane.xlu0 %520
  %v522 = vrcp.pop %v518
  %v523 = vmul.f32 %v513, %v522
  %v524 = vrcp.pop %v521
  %v525 = vmul.f32 %v515, %v524
  %v527 = vsel %vm186, %v523, 0
  %v529 = vsel %vm189, %v343, 0
  %531 = vmatprep.subr.mxu0 0.0
  %532 = vmatpush1.msra.mxu0 %v529
  %533 = vmatprep.subr.mxu0 0.0
  %534 = vmatpush1.msra.mxu0 0.0
  %535 = vmatprep.subr.mxu0 0.0
  %536 = vmatpush1.msra.mxu0 0.0
  %537 = vmatprep.subr.mxu0 0.0
  %538 = vmatpush1.msra.mxu0 0.0
  %539 = vmatprep.subr.mxu0 0.0
  %540 = vmatpush1.msra.mxu0 0.0
  %541 = vmatprep.subr.mxu0 0.0
  %542 = vmatpush1.msra.mxu0 0.0
  %543 = vmatprep.subr.mxu0 0.0
  %544 = vmatpush1.msra.mxu0 0.0
  %545 = vmatprep.subr.mxu0 0.0
  %546 = vmatpush1.msra.mxu0 0.0
  %547 = vmatprep.subr.mxu0 0.0
  %548 = vmatpush1.msra.mxu0 0.0
  %549 = vmatprep.subr.mxu0 0.0
  %550 = vmatpush1.msra.mxu0 0.0
  %551 = vmatprep.subr.mxu0 0.0
  %552 = vmatpush1.msra.mxu0 0.0
  %553 = vmatprep.subr.mxu0 0.0
  %554 = vmatpush1.msra.mxu0 0.0
  %555 = vmatprep.subr.mxu0 0.0
  %556 = vmatpush1.msra.mxu0 0.0
  %557 = vmatprep.subr.mxu0 0.0
  %558 = vmatpush1.msra.mxu0 0.0
  %559 = vmatprep.subr.mxu0 0.0
  %560 = vmatpush1.msra.mxu0 0.0
  %561 = vmatprep.subr.mxu0 0.0
  %562 = vmatpush1.msra.mxu0 0.0
  %563 = vmatprep.subr.mxu0 0.0
  %564 = vmatpush1.msra.mxu0 0.0
  %565 = vmatprep.subr.mxu0 0.0
  %566 = vmatpush1.msra.mxu0 0.0
  %567 = vmatprep.subr.mxu0 0.0
  %568 = vmatpush1.msra.mxu0 0.0
  %569 = vmatprep.subr.mxu0 0.0
  %570 = vmatpush1.msra.mxu0 0.0
  %571 = vmatprep.subr.mxu0 0.0
  %572 = vmatpush1.msra.mxu0 0.0
  %573 = vmatprep.subr.mxu0 0.0
  %574 = vmatpush1.msra.mxu0 0.0
  %575 = vmatprep.subr.mxu0 0.0
  %576 = vmatpush1.msra.mxu0 0.0
  %577 = vmatprep.subr.mxu0 0.0
  %578 = vmatpush1.msra.mxu0 0.0
  %579 = vmatprep.subr.mxu0 0.0
  %580 = vmatpush1.msra.mxu0 0.0
  %581 = vmatprep.subr.mxu0 0.0
  %582 = vmatpush1.msra.mxu0 0.0
  %583 = vmatprep.subr.mxu0 0.0
  %584 = vmatpush1.msra.mxu0 0.0
  %585 = vmatprep.subr.mxu0 0.0
  %586 = vmatpush1.msra.mxu0 0.0
  %587 = vmatprep.subr.mxu0 0.0
  %588 = vmatpush1.msra.mxu0 0.0
  %589 = vmatprep.subr.mxu0 0.0
  %590 = vmatpush1.msra.mxu0 0.0
  %591 = vmatprep.subr.mxu0 0.0
  %592 = vmatpush1.msra.mxu0 0.0
  %593 = vmatprep.subr.mxu0 0.0
  %594 = vmatpush1.msra.mxu0 0.0
  %595 = vmatprep.mubr.f32.mxu0 0.0
  %596 = vmatmul.mubr.f32.gmra.mrb[0].mxu0 %v527
  %v597 = vpop.f32.mrb[0].mxu0
  %v598 = vadd.f32 0.0, %v597
  %v599 = vpop.f32.mrb[0].mxu0
  %600 = vdwg.mxu0
  %v602 = vsel %vm186, %v525, 0
  %v604 = vsel %vm189, %v347, 0
  %606 = vmatprep.subr.mxu0 0.0
  %607 = vmatpush1.msra.mxu0 %v604
  %608 = vmatprep.subr.mxu0 0.0
  %609 = vmatpush1.msra.mxu0 0.0
  %610 = vmatprep.subr.mxu0 0.0
  %611 = vmatpush1.msra.mxu0 0.0
  %612 = vmatprep.subr.mxu0 0.0
  %613 = vmatpush1.msra.mxu0 0.0
  %614 = vmatprep.subr.mxu0 0.0
  %615 = vmatpush1.msra.mxu0 0.0
  %616 = vmatprep.subr.mxu0 0.0
  %617 = vmatpush1.msra.mxu0 0.0
  %618 = vmatprep.subr.mxu0 0.0
  %619 = vmatpush1.msra.mxu0 0.0
  %620 = vmatprep.subr.mxu0 0.0
  %621 = vmatpush1.msra.mxu0 0.0
  %622 = vmatprep.subr.mxu0 0.0
  %623 = vmatpush1.msra.mxu0 0.0
  %624 = vmatprep.subr.mxu0 0.0
  %625 = vmatpush1.msra.mxu0 0.0
  %626 = vmatprep.subr.mxu0 0.0
  %627 = vmatpush1.msra.mxu0 0.0
  %628 = vmatprep.subr.mxu0 0.0
  %629 = vmatpush1.msra.mxu0 0.0
  %630 = vmatprep.subr.mxu0 0.0
  %631 = vmatpush1.msra.mxu0 0.0
  %632 = vmatprep.subr.mxu0 0.0
  %633 = vmatpush1.msra.mxu0 0.0
  %634 = vmatprep.subr.mxu0 0.0
  %635 = vmatpush1.msra.mxu0 0.0
  %636 = vmatprep.subr.mxu0 0.0
  %637 = vmatpush1.msra.mxu0 0.0
  %638 = vmatprep.subr.mxu0 0.0
  %639 = vmatpush1.msra.mxu0 0.0
  %640 = vmatprep.subr.mxu0 0.0
  %641 = vmatpush1.msra.mxu0 0.0
  %642 = vmatprep.subr.mxu0 0.0
  %643 = vmatpush1.msra.mxu0 0.0
  %644 = vmatprep.subr.mxu0 0.0
  %645 = vmatpush1.msra.mxu0 0.0
  %646 = vmatprep.subr.mxu0 0.0
  %647 = vmatpush1.msra.mxu0 0.0
  %648 = vmatprep.subr.mxu0 0.0
  %649 = vmatpush1.msra.mxu0 0.0
  %650 = vmatprep.subr.mxu0 0.0
  %651 = vmatpush1.msra.mxu0 0.0
  %652 = vmatprep.subr.mxu0 0.0
  %653 = vmatpush1.msra.mxu0 0.0
  %654 = vmatprep.subr.mxu0 0.0
  %655 = vmatpush1.msra.mxu0 0.0
  %656 = vmatprep.subr.mxu0 0.0
  %657 = vmatpush1.msra.mxu0 0.0
  %658 = vmatprep.subr.mxu0 0.0
  %659 = vmatpush1.msra.mxu0 0.0
  %660 = vmatprep.subr.mxu0 0.0
  %661 = vmatpush1.msra.mxu0 0.0
  %662 = vmatprep.subr.mxu0 0.0
  %663 = vmatpush1.msra.mxu0 0.0
  %664 = vmatprep.subr.mxu0 0.0
  %665 = vmatpush1.msra.mxu0 0.0
  %666 = vmatprep.subr.mxu0 0.0
  %667 = vmatpush1.msra.mxu0 0.0
  %668 = vmatprep.subr.mxu0 0.0
  %669 = vmatpush1.msra.mxu0 0.0
  %670 = vmatprep.mubr.f32.mxu0 0.0
  %671 = vmatmul.mubr.f32.gmra.mrb[0].mxu0 %v602
  %v672 = vpop.f32.mrb[0].mxu0
  %v673 = vadd.f32 0.0, %v672
  %v674 = vpop.f32.mrb[0].mxu0
  %675 = vdwg.mxu0
  %676 = vrot.lane.b32.xlu0 %v348, 125
  %v677 = vpop.permute.xlu0 %676
  %678 = vrot.lane.b32.xlu0 %v260, 125
  %v679 = vpop.permute.xlu0 %678
  %v680 = vsel %vm350, %v677, 0
  %v682 = vsel %vm350, %v679, 0
  %684 = vmatprep.subr.mxu0 0.0
  %685 = vmatpush1.xpose.msra.mxu0 %v682
  %686 = vmatprep.subr.mxu0 0.0
  %687 = vmatpush1.xpose.msra.mxu0 0.0
  %688 = vmatprep.subr.mxu0 0.0
  %689 = vmatpush1.xpose.msra.mxu0 0.0
  %690 = vmatprep.subr.mxu0 0.0
  %691 = vmatpush1.xpose.msra.mxu0 0.0
  %692 = vmatprep.subr.mxu0 0.0
  %693 = vmatpush1.xpose.msra.mxu0 0.0
  %694 = vmatprep.subr.mxu0 0.0
  %695 = vmatpush1.xpose.msra.mxu0 0.0
  %696 = vmatprep.subr.mxu0 0.0
  %697 = vmatpush1.xpose.msra.mxu0 0.0
  %698 = vmatprep.subr.mxu0 0.0
  %699 = vmatpush1.xpose.msra.mxu0 0.0
  %700 = vmatprep.subr.mxu0 0.0
  %701 = vmatpush1.xpose.msra.mxu0 0.0
  %702 = vmatprep.subr.mxu0 0.0
  %703 = vmatpush1.xpose.msra.mxu0 0.0
  %704 = vmatprep.subr.mxu0 0.0
  %705 = vmatpush1.xpose.msra.mxu0 0.0
  %706 = vmatprep.subr.mxu0 0.0
  %707 = vmatpush1.xpose.msra.mxu0 0.0
  %708 = vmatprep.subr.mxu0 0.0
  %709 = vmatpush1.xpose.msra.mxu0 0.0
  %710 = vmatprep.subr.mxu0 0.0
  %711 = vmatpush1.xpose.msra.mxu0 0.0
  %712 = vmatprep.subr.mxu0 0.0
  %713 = vmatpush1.xpose.msra.mxu0 0.0
  %714 = vmatprep.subr.mxu0 0.0
  %715 = vmatpush1.xpose.msra.mxu0 0.0
  %716 = vmatprep.subr.mxu0 0.0
  %717 = vmatpush1.xpose.msra.mxu0 0.0
  %718 = vmatprep.subr.mxu0 0.0
  %719 = vmatpush1.xpose.msra.mxu0 0.0
  %720 = vmatprep.subr.mxu0 0.0
  %721 = vmatpush1.xpose.msra.mxu0 0.0
  %722 = vmatprep.subr.mxu0 0.0
  %723 = vmatpush1.xpose.msra.mxu0 0.0
  %724 = vmatprep.subr.mxu0 0.0
  %725 = vmatpush1.xpose.msra.mxu0 0.0
  %726 = vmatprep.subr.mxu0 0.0
  %727 = vmatpush1.xpose.msra.mxu0 0.0
  %728 = vmatprep.subr.mxu0 0.0
  %729 = vmatpush1.xpose.msra.mxu0 0.0
  %730 = vmatprep.subr.mxu0 0.0
  %731 = vmatpush1.xpose.msra.mxu0 0.0
  %732 = vmatprep.subr.mxu0 0.0
  %733 = vmatpush1.xpose.msra.mxu0 0.0
  %734 = vmatprep.subr.mxu0 0.0
  %735 = vmatpush1.xpose.msra.mxu0 0.0
  %736 = vmatprep.subr.mxu0 0.0
  %737 = vmatpush1.xpose.msra.mxu0 0.0
  %738 = vmatprep.subr.mxu0 0.0
  %739 = vmatpush1.xpose.msra.mxu0 0.0
  %740 = vmatprep.subr.mxu0 0.0
  %741 = vmatpush1.xpose.msra.mxu0 0.0
  %742 = vmatprep.subr.mxu0 0.0
  %743 = vmatpush1.xpose.msra.mxu0 0.0
  %744 = vmatprep.subr.mxu0 0.0
  %745 = vmatpush1.xpose.msra.mxu0 0.0
  %746 = vmatprep.subr.mxu0 0.0
  %747 = vmatpush1.xpose.msra.mxu0 0.0
  %748 = vmatprep.mubr.f32.mxu0 0.0
  %749 = vmatmul.mubr.f32.gmra.mrb[0].mxu0 %v680
  %v750 = vpop.f32.mrb[0].mxu0
  %v751 = vadd.f32 0.0, %v750
  %v752 = vpop.f32.mrb[0].mxu0
  %753 = vdwg.mxu0
  %754 = vrot.lane.b32.xlu0 %v349, 125
  %v755 = vpop.permute.xlu0 %754
  %756 = vrot.lane.b32.xlu0 %v264, 125
  %v757 = vpop.permute.xlu0 %756
  %v758 = vsel %vm350, %v755, 0
  %v760 = vsel %vm350, %v757, 0
  %762 = vmatprep.subr.mxu0 0.0
  %763 = vmatpush1.xpose.msra.mxu0 %v760
  %764 = vmatprep.subr.mxu0 0.0
  %765 = vmatpush1.xpose.msra.mxu0 0.0
  %766 = vmatprep.subr.mxu0 0.0
  %767 = vmatpush1.xpose.msra.mxu0 0.0
  %768 = vmatprep.subr.mxu0 0.0
  %769 = vmatpush1.xpose.msra.mxu0 0.0
  %770 = vmatprep.subr.mxu0 0.0
  %771 = vmatpush1.xpose.msra.mxu0 0.0
  %772 = vmatprep.subr.mxu0 0.0
  %773 = vmatpush1.xpose.msra.mxu0 0.0
  %774 = vmatprep.subr.mxu0 0.0
  %775 = vmatpush1.xpose.msra.mxu0 0.0
  %776 = vmatprep.subr.mxu0 0.0
  %777 = vmatpush1.xpose.msra.mxu0 0.0
  %778 = vmatprep.subr.mxu0 0.0
  %779 = vmatpush1.xpose.msra.mxu0 0.0
  %780 = vmatprep.subr.mxu0 0.0
  %781 = vmatpush1.xpose.msra.mxu0 0.0
  %782 = vmatprep.subr.mxu0 0.0
  %783 = vmatpush1.xpose.msra.mxu0 0.0
  %784 = vmatprep.subr.mxu0 0.0
  %785 = vmatpush1.xpose.msra.mxu0 0.0
  %786 = vmatprep.subr.mxu0 0.0
  %787 = vmatpush1.xpose.msra.mxu0 0.0
  %788 = vmatprep.subr.mxu0 0.0
  %789 = vmatpush1.xpose.msra.mxu0 0.0
  %790 = vmatprep.subr.mxu0 0.0
  %791 = vmatpush1.xpose.msra.mxu0 0.0
  %792 = vmatprep.subr.mxu0 0.0
  %793 = vmatpush1.xpose.msra.mxu0 0.0
  %794 = vmatprep.subr.mxu0 0.0
  %795 = vmatpush1.xpose.msra.mxu0 0.0
  %796 = vmatprep.subr.mxu0 0.0
  %797 = vmatpush1.xpose.msra.mxu0 0.0
  %798 = vmatprep.subr.mxu0 0.0
  %799 = vmatpush1.xpose.msra.mxu0 0.0
  %800 = vmatprep.subr.mxu0 0.0
  %801 = vmatpush1.xpose.msra.mxu0 0.0
  %802 = vmatprep.subr.mxu0 0.0
  %803 = vmatpush1.xpose.msra.mxu0 0.0
  %804 = vmatprep.subr.mxu0 0.0
  %805 = vmatpush1.xpose.msra.mxu0 0.0
  %806 = vmatprep.subr.mxu0 0.0
  %807 = vmatpush1.xpose.msra.mxu0 0.0
  %808 = vmatprep.subr.mxu0 0.0
  %809 = vmatpush1.xpose.msra.mxu0 0.0
  %810 = vmatprep.subr.mxu0 0.0
  %811 = vmatpush1.xpose.msra.mxu0 0.0
  %812 = vmatprep.subr.mxu0 0.0
  %813 = vmatpush1.xpose.msra.mxu0 0.0
  %814 = vmatprep.subr.mxu0 0.0
  %815 = vmatpush1.xpose.msra.mxu0 0.0
  %816 = vmatprep.subr.mxu0 0.0
  %817 = vmatpush1.xpose.msra.mxu0 0.0
  %818 = vmatprep.subr.mxu0 0.0
  %819 = vmatpush1.xpose.msra.mxu0 0.0
  %820 = vmatprep.subr.mxu0 0.0
  %821 = vmatpush1.xpose.msra.mxu0 0.0
  %822 = vmatprep.subr.mxu0 0.0
  %823 = vmatpush1.xpose.msra.mxu0 0.0
  %824 = vmatprep.subr.mxu0 0.0
  %825 = vmatpush1.xpose.msra.mxu0 0.0
  %826 = vmatprep.mubr.f32.mxu0 0.0
  %827 = vmatmul.mubr.f32.gmra.mrb[0].mxu0 %v758
  %v828 = vpop.f32.mrb[0].mxu0
  %v829 = vadd.f32 0.0, %v828
  %v830 = vpop.f32.mrb[0].mxu0
  %831 = vdwg.mxu0
  %v832 = vsub.f32 %v751, %v79
  %v833 = vsub.f32 %v829, %v79
  %v834 = vsel %vm503, %v832, -inf
  %835 = vmax.xlane.f32.xlu0 %v834
  %v836 = vpop.xlane.xlu0 %835
  %v837 = vsel %vm503, %v833, -inf
  %838 = vmax.xlane.f32.xlu0 %v837
  %v839 = vpop.xlane.xlu0 %838
  %v840 = vsub.f32 %v832, %v836
  %v841 = vsub.f32 %v833, %v839
  %v842 = vmul.f32 %v840, 1.442695
  %v843 = vpow.pop %v842
  %v844 = vmul.f32 %v841, 1.442695
  %v845 = vpow.pop %v844
  %v846 = vsel %vm503, %v843, 0.0
  %847 = vadd.xlane.f32.xlu0 %v846
  %v848 = vpop.xlane.xlu0 %847
  %v849 = vsel %vm503, %v845, 0.0
  %850 = vadd.xlane.f32.xlu0 %v849
  %v851 = vpop.xlane.xlu0 %850
  %v852 = vrcp.pop %v848
  %v853 = vmul.f32 %v843, %v852
  %v854 = vrcp.pop %v851
  %v855 = vmul.f32 %v845, %v854
  %856 = vrot.lane.b32.xlu0 %v343, 125
  %v857 = vpop.permute.xlu0 %856
  %v859 = vsel %vm186, %v853, 0
  %v861 = vsel %vm189, %v857, 0
  %863 = vmatprep.subr.mxu0 0.0
  %864 = vmatpush1.msra.mxu0 %v861
  %865 = vmatprep.subr.mxu0 0.0
  %866 = vmatpush1.msra.mxu0 0.0
  %867 = vmatprep.subr.mxu0 0.0
  %868 = vmatpush1.msra.mxu0 0.0
  %869 = vmatprep.subr.mxu0 0.0
  %870 = vmatpush1.msra.mxu0 0.0
  %871 = vmatprep.subr.mxu0 0.0
  %872 = vmatpush1.msra.mxu0 0.0
  %873 = vmatprep.subr.mxu0 0.0
  %874 = vmatpush1.msra.mxu0 0.0
  %875 = vmatprep.subr.mxu0 0.0
  %876 = vmatpush1.msra.mxu0 0.0
  %877 = vmatprep.subr.mxu0 0.0
  %878 = vmatpush1.msra.mxu0 0.0
  %879 = vmatprep.subr.mxu0 0.0
  %880 = vmatpush1.msra.mxu0 0.0
  %881 = vmatprep.subr.mxu0 0.0
  %882 = vmatpush1.msra.mxu0 0.0
  %883 = vmatprep.subr.mxu0 0.0
  %884 = vmatpush1.msra.mxu0 0.0
  %885 = vmatprep.subr.mxu0 0.0
  %886 = vmatpush1.msra.mxu0 0.0
  %887 = vmatprep.subr.mxu0 0.0
  %888 = vmatpush1.msra.mxu0 0.0
  %889 = vmatprep.subr.mxu0 0.0
  %890 = vmatpush1.msra.mxu0 0.0
  %891 = vmatprep.subr.mxu0 0.0
  %892 = vmatpush1.msra.mxu0 0.0
  %893 = vmatprep.subr.mxu0 0.0
  %894 = vmatpush1.msra.mxu0 0.0
  %895 = vmatprep.subr.mxu0 0.0
  %896 = vmatpush1.msra.mxu0 0.0
  %897 = vmatprep.subr.mxu0 0.0
  %898 = vmatpush1.msra.mxu0 0.0
  %899 = vmatprep.subr.mxu0 0.0
  %900 = vmatpush1.msra.mxu0 0.0
  %901 = vmatprep.subr.mxu0 0.0
  %902 = vmatpush1.msra.mxu0 0.0
  %903 = vmatprep.subr.mxu0 0.0
  %904 = vmatpush1.msra.mxu0 0.0
  %905 = vmatprep.subr.mxu0 0.0
  %906 = vmatpush1.msra.mxu0 0.0
  %907 = vmatprep.subr.mxu0 0.0
  %908 = vmatpush1.msra.mxu0 0.0
  %909 = vmatprep.subr.mxu0 0.0
  %910 = vmatpush1.msra.mxu0 0.0
  %911 = vmatprep.subr.mxu0 0.0
  %912 = vmatpush1.msra.mxu0 0.0
  %913 = vmatprep.subr.mxu0 0.0
  %914 = vmatpush1.msra.mxu0 0.0
  %915 = vmatprep.subr.mxu0 0.0
  %916 = vmatpush1.msra.mxu0 0.0
  %917 = vmatprep.subr.mxu0 0.0
  %918 = vmatpush1.msra.mxu0 0.0
  %919 = vmatprep.subr.mxu0 0.0
  %920 = vmatpush1.msra.mxu0 0.0
  %921 = vmatprep.subr.mxu0 0.0
  %922 = vmatpush1.msra.mxu0 0.0
  %923 = vmatprep.subr.mxu0 0.0
  %924 = vmatpush1.msra.mxu0 0.0
  %925 = vmatprep.subr.mxu0 0.0
  %926 = vmatpush1.msra.mxu0 0.0
  %927 = vmatprep.mubr.f32.mxu0 0.0
  %928 = vmatmul.mubr.f32.gmra.mrb[0].mxu0 %v859
  %v929 = vpop.f32.mrb[0].mxu0
  %v930 = vadd.f32 0.0, %v929
  %v931 = vpop.f32.mrb[0].mxu0
  %932 = vdwg.mxu0
  %933 = vrot.lane.b32.xlu0 %v347, 125
  %v934 = vpop.permute.xlu0 %933
  %v936 = vsel %vm186, %v855, 0
  %v938 = vsel %vm189, %v934, 0
  %940 = vmatprep.subr.mxu0 0.0
  %941 = vmatpush1.msra.mxu0 %v938
  %942 = vmatprep.subr.mxu0 0.0
  %943 = vmatpush1.msra.mxu0 0.0
  %944 = vmatprep.subr.mxu0 0.0
  %945 = vmatpush1.msra.mxu0 0.0
  %946 = vmatprep.subr.mxu0 0.0
  %947 = vmatpush1.msra.mxu0 0.0
  %948 = vmatprep.subr.mxu0 0.0
  %949 = vmatpush1.msra.mxu0 0.0
  %950 = vmatprep.subr.mxu0 0.0
  %951 = vmatpush1.msra.mxu0 0.0
  %952 = vmatprep.subr.mxu0 0.0
  %953 = vmatpush1.msra.mxu0 0.0
  %954 = vmatprep.subr.mxu0 0.0
  %955 = vmatpush1.msra.mxu0 0.0
  %956 = vmatprep.subr.mxu0 0.0
  %957 = vmatpush1.msra.mxu0 0.0
  %958 = vmatprep.subr.mxu0 0.0
  %959 = vmatpush1.msra.mxu0 0.0
  %960 = vmatprep.subr.mxu0 0.0
  %961 = vmatpush1.msra.mxu0 0.0
  %962 = vmatprep.subr.mxu0 0.0
  %963 = vmatpush1.msra.mxu0 0.0
  %964 = vmatprep.subr.mxu0 0.0
  %965 = vmatpush1.msra.mxu0 0.0
  %966 = vmatprep.subr.mxu0 0.0
  %967 = vmatpush1.msra.mxu0 0.0
  %968 = vmatprep.subr.mxu0 0.0
  %969 = vmatpush1.msra.mxu0 0.0
  %970 = vmatprep.subr.mxu0 0.0
  %971 = vmatpush1.msra.mxu0 0.0
  %972 = vmatprep.subr.mxu0 0.0
  %973 = vmatpush1.msra.mxu0 0.0
  %974 = vmatprep.subr.mxu0 0.0
  %975 = vmatpush1.msra.mxu0 0.0
  %976 = vmatprep.subr.mxu0 0.0
  %977 = vmatpush1.msra.mxu0 0.0
  %978 = vmatprep.subr.mxu0 0.0
  %979 = vmatpush1.msra.mxu0 0.0
  %980 = vmatprep.subr.mxu0 0.0
  %981 = vmatpush1.msra.mxu0 0.0
  %982 = vmatprep.subr.mxu0 0.0
  %983 = vmatpush1.msra.mxu0 0.0
  %984 = vmatprep.subr.mxu0 0.0
  %985 = vmatpush1.msra.mxu0 0.0
  %986 = vmatprep.subr.mxu0 0.0
  %987 = vmatpush1.msra.mxu0 0.0
  %988 = vmatprep.subr.mxu0 0.0
  %989 = vmatpush1.msra.mxu0 0.0
  %990 = vmatprep.subr.mxu0 0.0
  %991 = vmatpush1.msra.mxu0 0.0
  %992 = vmatprep.subr.mxu0 0.0
  %993 = vmatpush1.msra.mxu0 0.0
  %994 = vmatprep.subr.mxu0 0.0
  %995 = vmatpush1.msra.mxu0 0.0
  %996 = vmatprep.subr.mxu0 0.0
  %997 = vmatpush1.msra.mxu0 0.0
  %998 = vmatprep.subr.mxu0 0.0
  %999 = vmatpush1.msra.mxu0 0.0
  %1000 = vmatprep.subr.mxu0 0.0
  %1001 = vmatpush1.msra.mxu0 0.0
  %1002 = vmatprep.subr.mxu0 0.0
  %1003 = vmatpush1.msra.mxu0 0.0
  %1004 = vmatprep.mubr.f32.mxu0 0.0
  %1005 = vmatmul.mubr.f32.gmra.mrb[0].mxu0 %v936
  %v1006 = vpop.f32.mrb[0].mxu0
  %v1007 = vadd.f32 0.0, %v1006
  %v1008 = vpop.f32.mrb[0].mxu0
  %1009 = vdwg.mxu0
  %1010 = vrot.lane.b32.xlu0 %v348, 122
  %v1011 = vpop.permute.xlu0 %1010
  %1012 = vrot.lane.b32.xlu0 %v260, 122
  %v1013 = vpop.permute.xlu0 %1012
  %v1014 = vsel %vm350, %v1011, 0
  %v1016 = vsel %vm350, %v1013, 0
  %1018 = vmatprep.subr.mxu0 0.0
  %1019 = vmatpush1.xpose.msra.mxu0 %v1016
  %1020 = vmatprep.subr.mxu0 0.0
  %1021 = vmatpush1.xpose.msra.mxu0 0.0
  %1022 = vmatprep.subr.mxu0 0.0
  %1023 = vmatpush1.xpose.msra.mxu0 0.0
  %1024 = vmatprep.subr.mxu0 0.0
  %1025 = vmatpush1.xpose.msra.mxu0 0.0
  %1026 = vmatprep.subr.mxu0 0.0
  %1027 = vmatpush1.xpose.msra.mxu0 0.0
  %1028 = vmatprep.subr.mxu0 0.0
  %1029 = vmatpush1.xpose.msra.mxu0 0.0
  %1030 = vmatprep.subr.mxu0 0.0
  %1031 = vmatpush1.xpose.msra.mxu0 0.0
  %1032 = vmatprep.subr.mxu0 0.0
  %1033 = vmatpush1.xpose.msra.mxu0 0.0
  %1034 = vmatprep.subr.mxu0 0.0
  %1035 = vmatpush1.xpose.msra.mxu0 0.0
  %1036 = vmatprep.subr.mxu0 0.0
  %1037 = vmatpush1.xpose.msra.mxu0 0.0
  %1038 = vmatprep.subr.mxu0 0.0
  %1039 = vmatpush1.xpose.msra.mxu0 0.0
  %1040 = vmatprep.subr.mxu0 0.0
  %1041 = vmatpush1.xpose.msra.mxu0 0.0
  %1042 = vmatprep.subr.mxu0 0.0
  %1043 = vmatpush1.xpose.msra.mxu0 0.0
  %1044 = vmatprep.subr.mxu0 0.0
  %1045 = vmatpush1.xpose.msra.mxu0 0.0
  %1046 = vmatprep.subr.mxu0 0.0
  %1047 = vmatpush1.xpose.msra.mxu0 0.0
  %1048 = vmatprep.subr.mxu0 0.0
  %1049 = vmatpush1.xpose.msra.mxu0 0.0
  %1050 = vmatprep.subr.mxu0 0.0
  %1051 = vmatpush1.xpose.msra.mxu0 0.0
  %1052 = vmatprep.subr.mxu0 0.0
  %1053 = vmatpush1.xpose.msra.mxu0 0.0
  %1054 = vmatprep.subr.mxu0 0.0
  %1055 = vmatpush1.xpose.msra.mxu0 0.0
  %1056 = vmatprep.subr.mxu0 0.0
  %1057 = vmatpush1.xpose.msra.mxu0 0.0
  %1058 = vmatprep.subr.mxu0 0.0
  %1059 = vmatpush1.xpose.msra.mxu0 0.0
  %1060 = vmatprep.subr.mxu0 0.0
  %1061 = vmatpush1.xpose.msra.mxu0 0.0
  %1062 = vmatprep.subr.mxu0 0.0
  %1063 = vmatpush1.xpose.msra.mxu0 0.0
  %1064 = vmatprep.subr.mxu0 0.0
  %1065 = vmatpush1.xpose.msra.mxu0 0.0
  %1066 = vmatprep.subr.mxu0 0.0
  %1067 = vmatpush1.xpose.msra.mxu0 0.0
  %1068 = vmatprep.subr.mxu0 0.0
  %1069 = vmatpush1.xpose.msra.mxu0 0.0
  %1070 = vmatprep.subr.mxu0 0.0
  %1071 = vmatpush1.xpose.msra.mxu0 0.0
  %1072 = vmatprep.subr.mxu0 0.0
  %1073 = vmatpush1.xpose.msra.mxu0 0.0
  %1074 = vmatprep.subr.mxu0 0.0
  %1075 = vmatpush1.xpose.msra.mxu0 0.0
  %1076 = vmatprep.subr.mxu0 0.0
  %1077 = vmatpush1.xpose.msra.mxu0 0.0
  %1078 = vmatprep.subr.mxu0 0.0
  %1079 = vmatpush1.xpose.msra.mxu0 0.0
  %1080 = vmatprep.subr.mxu0 0.0
  %1081 = vmatpush1.xpose.msra.mxu0 0.0
  %1082 = vmatprep.mubr.f32.mxu0 0.0
  %1083 = vmatmul.mubr.f32.gmra.mrb[0].mxu0 %v1014
  %v1084 = vpop.f32.mrb[0].mxu0
  %v1085 = vadd.f32 0.0, %v1084
  %v1086 = vpop.f32.mrb[0].mxu0
  %1087 = vdwg.mxu0
  %1088 = vrot.lane.b32.xlu0 %v349, 122
  %v1089 = vpop.permute.xlu0 %1088
  %1090 = vrot.lane.b32.xlu0 %v264, 122
  %v1091 = vpop.permute.xlu0 %1090
  %v1092 = vsel %vm350, %v1089, 0
  %v1094 = vsel %vm350, %v1091, 0
  %1096 = vmatprep.subr.mxu0 0.0
  %1097 = vmatpush1.xpose.msra.mxu0 %v1094
  %1098 = vmatprep.subr.mxu0 0.0
  %1099 = vmatpush1.xpose.msra.mxu0 0.0
  %1100 = vmatprep.subr.mxu0 0.0
  %1101 = vmatpush1.xpose.msra.mxu0 0.0
  %1102 = vmatprep.subr.mxu0 0.0
  %1103 = vmatpush1.xpose.msra.mxu0 0.0
  %1104 = vmatprep.subr.mxu0 0.0
  %1105 = vmatpush1.xpose.msra.mxu0 0.0
  %1106 = vmatprep.subr.mxu0 0.0
  %1107 = vmatpush1.xpose.msra.mxu0 0.0
  %1108 = vmatprep.subr.mxu0 0.0
  %1109 = vmatpush1.xpose.msra.mxu0 0.0
  %1110 = vmatprep.subr.mxu0 0.0
  %1111 = vmatpush1.xpose.msra.mxu0 0.0
  %1112 = vmatprep.subr.mxu0 0.0
  %1113 = vmatpush1.xpose.msra.mxu0 0.0
  %1114 = vmatprep.subr.mxu0 0.0
  %1115 = vmatpush1.xpose.msra.mxu0 0.0
  %1116 = vmatprep.subr.mxu0 0.0
  %1117 = vmatpush1.xpose.msra.mxu0 0.0
  %1118 = vmatprep.subr.mxu0 0.0
  %1119 = vmatpush1.xpose.msra.mxu0 0.0
  %1120 = vmatprep.subr.mxu0 0.0
  %1121 = vmatpush1.xpose.msra.mxu0 0.0
  %1122 = vmatprep.subr.mxu0 0.0
  %1123 = vmatpush1.xpose.msra.mxu0 0.0
  %1124 = vmatprep.subr.mxu0 0.0
  %1125 = vmatpush1.xpose.msra.mxu0 0.0
  %1126 = vmatprep.subr.mxu0 0.0
  %1127 = vmatpush1.xpose.msra.mxu0 0.0
  %1128 = vmatprep.subr.mxu0 0.0
  %1129 = vmatpush1.xpose.msra.mxu0 0.0
  %1130 = vmatprep.subr.mxu0 0.0
  %1131 = vmatpush1.xpose.msra.mxu0 0.0
  %1132 = vmatprep.subr.mxu0 0.0
  %1133 = vmatpush1.xpose.msra.mxu0 0.0
  %1134 = vmatprep.subr.mxu0 0.0
  %1135 = vmatpush1.xpose.msra.mxu0 0.0
  %1136 = vmatprep.subr.mxu0 0.0
  %1137 = vmatpush1.xpose.msra.mxu0 0.0
  %1138 = vmatprep.subr.mxu0 0.0
  %1139 = vmatpush1.xpose.msra.mxu0 0.0
  %1140 = vmatprep.subr.mxu0 0.0
  %1141 = vmatpush1.xpose.msra.mxu0 0.0
  %1142 = vmatprep.subr.mxu0 0.0
  %1143 = vmatpush1.xpose.msra.mxu0 0.0
  %1144 = vmatprep.subr.mxu0 0.0
  %1145 = vmatpush1.xpose.msra.mxu0 0.0
  %1146 = vmatprep.subr.mxu0 0.0
  %1147 = vmatpush1.xpose.msra.mxu0 0.0
  %1148 = vmatprep.subr.mxu0 0.0
  %1149 = vmatpush1.xpose.msra.mxu0 0.0
  %1150 = vmatprep.subr.mxu0 0.0
  %1151 = vmatpush1.xpose.msra.mxu0 0.0
  %1152 = vmatprep.subr.mxu0 0.0
  %1153 = vmatpush1.xpose.msra.mxu0 0.0
  %1154 = vmatprep.subr.mxu0 0.0
  %1155 = vmatpush1.xpose.msra.mxu0 0.0
  %1156 = vmatprep.subr.mxu0 0.0
  %1157 = vmatpush1.xpose.msra.mxu0 0.0
  %1158 = vmatprep.subr.mxu0 0.0
  %1159 = vmatpush1.xpose.msra.mxu0 0.0
  %1160 = vmatprep.mubr.f32.mxu0 0.0
  %1161 = vmatmul.mubr.f32.gmra.mrb[0].mxu0 %v1092
  %v1162 = vpop.f32.mrb[0].mxu0
  %v1163 = vadd.f32 0.0, %v1162
  %v1164 = vpop.f32.mrb[0].mxu0
  %1165 = vdwg.mxu0
  %v1166 = vsub.f32 %v1085, %v79
  %v1167 = vsub.f32 %v1163, %v79
  %v1168 = vsel %vm503, %v1166, -inf
  %1169 = vmax.xlane.f32.xlu0 %v1168
  %v1170 = vpop.xlane.xlu0 %1169
  %v1171 = vsel %vm503, %v1167, -inf
  %1172 = vmax.xlane.f32.xlu0 %v1171
  %v1173 = vpop.xlane.xlu0 %1172
  %v1174 = vsub.f32 %v1166, %v1170
  %v1175 = vsub.f32 %v1167, %v1173
  %v1176 = vmul.f32 %v1174, 1.442695
  %v1177 = vpow.pop %v1176
  %v1178 = vmul.f32 %v1175, 1.442695
  %v1179 = vpow.pop %v1178
  %v1180 = vsel %vm503, %v1177, 0.0
  %1181 = vadd.xlane.f32.xlu0 %v1180
  %v1182 = vpop.xlane.xlu0 %1181
  %v1183 = vsel %vm503, %v1179, 0.0
  %1184 = vadd.xlane.f32.xlu0 %v1183
  %v1185 = vpop.xlane.xlu0 %1184
  %v1186 = vrcp.pop %v1182
  %v1187 = vmul.f32 %v1177, %v1186
  %v1188 = vrcp.pop %v1185
  %v1189 = vmul.f32 %v1179, %v1188
  %1190 = vrot.lane.b32.xlu0 %v343, 122
  %v1191 = vpop.permute.xlu0 %1190
  %v1193 = vsel %vm186, %v1187, 0
  %v1195 = vsel %vm189, %v1191, 0
  %1197 = vmatprep.subr.mxu0 0.0
  %1198 = vmatpush1.msra.mxu0 %v1195
  %1199 = vmatprep.subr.mxu0 0.0
  %1200 = vmatpush1.msra.mxu0 0.0
  %1201 = vmatprep.subr.mxu0 0.0
  %1202 = vmatpush1.msra.mxu0 0.0
  %1203 = vmatprep.subr.mxu0 0.0
  %1204 = vmatpush1.msra.mxu0 0.0
  %1205 = vmatprep.subr.mxu0 0.0
  %1206 = vmatpush1.msra.mxu0 0.0
  %1207 = vmatprep.subr.mxu0 0.0
  %1208 = vmatpush1.msra.mxu0 0.0
  %1209 = vmatprep.subr.mxu0 0.0
  %1210 = vmatpush1.msra.mxu0 0.0
  %1211 = vmatprep.subr.mxu0 0.0
  %1212 = vmatpush1.msra.mxu0 0.0
  %1213 = vmatprep.subr.mxu0 0.0
  %1214 = vmatpush1.msra.mxu0 0.0
  %1215 = vmatprep.subr.mxu0 0.0
  %1216 = vmatpush1.msra.mxu0 0.0
  %1217 = vmatprep.subr.mxu0 0.0
  %1218 = vmatpush1.msra.mxu0 0.0
  %1219 = vmatprep.subr.mxu0 0.0
  %1220 = vmatpush1.msra.mxu0 0.0
  %1221 = vmatprep.subr.mxu0 0.0
  %1222 = vmatpush1.msra.mxu0 0.0
  %1223 = vmatprep.subr.mxu0 0.0
  %1224 = vmatpush1.msra.mxu0 0.0
  %1225 = vmatprep.subr.mxu0 0.0
  %1226 = vmatpush1.msra.mxu0 0.0
  %1227 = vmatprep.subr.mxu0 0.0
  %1228 = vmatpush1.msra.mxu0 0.0
  %1229 = vmatprep.subr.mxu0 0.0
  %1230 = vmatpush1.msra.mxu0 0.0
  %1231 = vmatprep.subr.mxu0 0.0
  %1232 = vmatpush1.msra.mxu0 0.0
  %1233 = vmatprep.subr.mxu0 0.0
  %1234 = vmatpush1.msra.mxu0 0.0
  %1235 = vmatprep.subr.mxu0 0.0
  %1236 = vmatpush1.msra.mxu0 0.0
  %1237 = vmatprep.subr.mxu0 0.0
  %1238 = vmatpush1.msra.mxu0 0.0
  %1239 = vmatprep.subr.mxu0 0.0
  %1240 = vmatpush1.msra.mxu0 0.0
  %1241 = vmatprep.subr.mxu0 0.0
  %1242 = vmatpush1.msra.mxu0 0.0
  %1243 = vmatprep.subr.mxu0 0.0
  %1244 = vmatpush1.msra.mxu0 0.0
  %1245 = vmatprep.subr.mxu0 0.0
  %1246 = vmatpush1.msra.mxu0 0.0
  %1247 = vmatprep.subr.mxu0 0.0
  %1248 = vmatpush1.msra.mxu0 0.0
  %1249 = vmatprep.subr.mxu0 0.0
  %1250 = vmatpush1.msra.mxu0 0.0
  %1251 = vmatprep.subr.mxu0 0.0
  %1252 = vmatpush1.msra.mxu0 0.0
  %1253 = vmatprep.subr.mxu0 0.0
  %1254 = vmatpush1.msra.mxu0 0.0
  %1255 = vmatprep.subr.mxu0 0.0
  %1256 = vmatpush1.msra.mxu0 0.0
  %1257 = vmatprep.subr.mxu0 0.0
  %1258 = vmatpush1.msra.mxu0 0.0
  %1259 = vmatprep.subr.mxu0 0.0
  %1260 = vmatpush1.msra.mxu0 0.0
  %1261 = vmatprep.mubr.f32.mxu0 0.0
  %1262 = vmatmul.mubr.f32.gmra.mrb[0].mxu0 %v1193
  %v1263 = vpop.f32.mrb[0].mxu0
  %v1264 = vadd.f32 0.0, %v1263
  %v1265 = vpop.f32.mrb[0].mxu0
  %1266 = vdwg.mxu0
  %1267 = vrot.lane.b32.xlu0 %v347, 122
  %v1268 = vpop.permute.xlu0 %1267
  %v1270 = vsel %vm186, %v1189, 0
  %v1272 = vsel %vm189, %v1268, 0
  %1274 = vmatprep.subr.mxu0 0.0
  %1275 = vmatpush1.msra.mxu0 %v1272
  %1276 = vmatprep.subr.mxu0 0.0
  %1277 = vmatpush1.msra.mxu0 0.0
  %1278 = vmatprep.subr.mxu0 0.0
  %1279 = vmatpush1.msra.mxu0 0.0
  %1280 = vmatprep.subr.mxu0 0.0
  %1281 = vmatpush1.msra.mxu0 0.0
  %1282 = vmatprep.subr.mxu0 0.0
  %1283 = vmatpush1.msra.mxu0 0.0
  %1284 = vmatprep.subr.mxu0 0.0
  %1285 = vmatpush1.msra.mxu0 0.0
  %1286 = vmatprep.subr.mxu0 0.0
  %1287 = vmatpush1.msra.mxu0 0.0
  %1288 = vmatprep.subr.mxu0 0.0
  %1289 = vmatpush1.msra.mxu0 0.0
  %1290 = vmatprep.subr.mxu0 0.0
  %1291 = vmatpush1.msra.mxu0 0.0
  %1292 = vmatprep.subr.mxu0 0.0
  %1293 = vmatpush1.msra.mxu0 0.0
  %1294 = vmatprep.subr.mxu0 0.0
  %1295 = vmatpush1.msra.mxu0 0.0
  %1296 = vmatprep.subr.mxu0 0.0
  %1297 = vmatpush1.msra.mxu0 0.0
  %1298 = vmatprep.subr.mxu0 0.0
  %1299 = vmatpush1.msra.mxu0 0.0
  %1300 = vmatprep.subr.mxu0 0.0
  %1301 = vmatpush1.msra.mxu0 0.0
  %1302 = vmatprep.subr.mxu0 0.0
  %1303 = vmatpush1.msra.mxu0 0.0
  %1304 = vmatprep.subr.mxu0 0.0
  %1305 = vmatpush1.msra.mxu0 0.0
  %1306 = vmatprep.subr.mxu0 0.0
  %1307 = vmatpush1.msra.mxu0 0.0
  %1308 = vmatprep.subr.mxu0 0.0
  %1309 = vmatpush1.msra.mxu0 0.0
  %1310 = vmatprep.subr.mxu0 0.0
  %1311 = vmatpush1.msra.mxu0 0.0
  %1312 = vmatprep.subr.mxu0 0.0
  %1313 = vmatpush1.msra.mxu0 0.0
  %1314 = vmatprep.subr.mxu0 0.0
  %1315 = vmatpush1.msra.mxu0 0.0
  %1316 = vmatprep.subr.mxu0 0.0
  %1317 = vmatpush1.msra.mxu0 0.0
  %1318 = vmatprep.subr.mxu0 0.0
  %1319 = vmatpush1.msra.mxu0 0.0
  %1320 = vmatprep.subr.mxu0 0.0
  %1321 = vmatpush1.msra.mxu0 0.0
  %1322 = vmatprep.subr.mxu0 0.0
  %1323 = vmatpush1.msra.mxu0 0.0
  %1324 = vmatprep.subr.mxu0 0.0
  %1325 = vmatpush1.msra.mxu0 0.0
  %1326 = vmatprep.subr.mxu0 0.0
  %1327 = vmatpush1.msra.mxu0 0.0
  %1328 = vmatprep.subr.mxu0 0.0
  %1329 = vmatpush1.msra.mxu0 0.0
  %1330 = vmatprep.subr.mxu0 0.0
  %1331 = vmatpush1.msra.mxu0 0.0
  %1332 = vmatprep.subr.mxu0 0.0
  %1333 = vmatpush1.msra.mxu0 0.0
  %1334 = vmatprep.subr.mxu0 0.0
  %1335 = vmatpush1.msra.mxu0 0.0
  %1336 = vmatprep.subr.mxu0 0.0
  %1337 = vmatpush1.msra.mxu0 0.0
  %1338 = vmatprep.mubr.f32.mxu0 0.0
  %1339 = vmatmul.mubr.f32.gmra.mrb[0].mxu0 %v1270
  %v1340 = vpop.f32.mrb[0].mxu0
  %v1341 = vadd.f32 0.0, %v1340
  %v1342 = vpop.f32.mrb[0].mxu0
  %1343 = vdwg.mxu0
  %1344 = vrot.lane.b32.xlu0 %v348, 119
  %v1345 = vpop.permute.xlu0 %1344
  %1346 = vrot.lane.b32.xlu0 %v260, 119
  %v1347 = vpop.permute.xlu0 %1346
  %v1348 = vsel %vm350, %v1345, 0
  %v1350 = vsel %vm350, %v1347, 0
  %1352 = vmatprep.subr.mxu0 0.0
  %1353 = vmatpush1.xpose.msra.mxu0 %v1350
  %1354 = vmatprep.subr.mxu0 0.0
  %1355 = vmatpush1.xpose.msra.mxu0 0.0
  %1356 = vmatprep.subr.mxu0 0.0
  %1357 = vmatpush1.xpose.msra.mxu0 0.0
  %1358 = vmatprep.subr.mxu0 0.0
  %1359 = vmatpush1.xpose.msra.mxu0 0.0
  %1360 = vmatprep.subr.mxu0 0.0
  %1361 = vmatpush1.xpose.msra.mxu0 0.0
  %1362 = vmatprep.subr.mxu0 0.0
  %1363 = vmatpush1.xpose.msra.mxu0 0.0
  %1364 = vmatprep.subr.mxu0 0.0
  %1365 = vmatpush1.xpose.msra.mxu0 0.0
  %1366 = vmatprep.subr.mxu0 0.0
  %1367 = vmatpush1.xpose.msra.mxu0 0.0
  %1368 = vmatprep.subr.mxu0 0.0
  %1369 = vmatpush1.xpose.msra.mxu0 0.0
  %1370 = vmatprep.subr.mxu0 0.0
  %1371 = vmatpush1.xpose.msra.mxu0 0.0
  %1372 = vmatprep.subr.mxu0 0.0
  %1373 = vmatpush1.xpose.msra.mxu0 0.0
  %1374 = vmatprep.subr.mxu0 0.0
  %1375 = vmatpush1.xpose.msra.mxu0 0.0
  %1376 = vmatprep.subr.mxu0 0.0
  %1377 = vmatpush1.xpose.msra.mxu0 0.0
  %1378 = vmatprep.subr.mxu0 0.0
  %1379 = vmatpush1.xpose.msra.mxu0 0.0
  %1380 = vmatprep.subr.mxu0 0.0
  %1381 = vmatpush1.xpose.msra.mxu0 0.0
  %1382 = vmatprep.subr.mxu0 0.0
  %1383 = vmatpush1.xpose.msra.mxu0 0.0
  %1384 = vmatprep.subr.mxu0 0.0
  %1385 = vmatpush1.xpose.msra.mxu0 0.0
  %1386 = vmatprep.subr.mxu0 0.0
  %1387 = vmatpush1.xpose.msra.mxu0 0.0
  %1388 = vmatprep.subr.mxu0 0.0
  %1389 = vmatpush1.xpose.msra.mxu0 0.0
  %1390 = vmatprep.subr.mxu0 0.0
  %1391 = vmatpush1.xpose.msra.mxu0 0.0
  %1392 = vmatprep.subr.mxu0 0.0
  %1393 = vmatpush1.xpose.msra.mxu0 0.0
  %1394 = vmatprep.subr.mxu0 0.0
  %1395 = vmatpush1.xpose.msra.mxu0 0.0
  %1396 = vmatprep.subr.mxu0 0.0
  %1397 = vmatpush1.xpose.msra.mxu0 0.0
  %1398 = vmatprep.subr.mxu0 0.0
  %1399 = vmatpush1.xpose.msra.mxu0 0.0
  %1400 = vmatprep.subr.mxu0 0.0
  %1401 = vmatpush1.xpose.msra.mxu0 0.0
  %1402 = vmatprep.subr.mxu0 0.0
  %1403 = vmatpush1.xpose.msra.mxu0 0.0
  %1404 = vmatprep.subr.mxu0 0.0
  %1405 = vmatpush1.xpose.msra.mxu0 0.0
  %1406 = vmatprep.subr.mxu0 0.0
  %1407 = vmatpush1.xpose.msra.mxu0 0.0
  %1408 = vmatprep.subr.mxu0 0.0
  %1409 = vmatpush1.xpose.msra.mxu0 0.0
  %1410 = vmatprep.subr.mxu0 0.0
  %1411 = vmatpush1.xpose.msra.mxu0 0.0
  %1412 = vmatprep.subr.mxu0 0.0
  %1413 = vmatpush1.xpose.msra.mxu0 0.0
  %1414 = vmatprep.subr.mxu0 0.0
  %1415 = vmatpush1.xpose.msra.mxu0 0.0
  %1416 = vmatprep.mubr.f32.mxu0 0.0
  %1417 = vmatmul.mubr.f32.gmra.mrb[0].mxu0 %v1348
  %v1418 = vpop.f32.mrb[0].mxu0
  %v1419 = vadd.f32 0.0, %v1418
  %v1420 = vpop.f32.mrb[0].mxu0
  %1421 = vdwg.mxu0
  %1422 = vrot.lane.b32.xlu0 %v349, 119
  %v1423 = vpop.permute.xlu0 %1422
  %1424 = vrot.lane.b32.xlu0 %v264, 119
  %v1425 = vpop.permute.xlu0 %1424
  %v1426 = vsel %vm350, %v1423, 0
  %v1428 = vsel %vm350, %v1425, 0
  %1430 = vmatprep.subr.mxu0 0.0
  %1431 = vmatpush1.xpose.msra.mxu0 %v1428
  %1432 = vmatprep.subr.mxu0 0.0
  %1433 = vmatpush1.xpose.msra.mxu0 0.0
  %1434 = vmatprep.subr.mxu0 0.0
  %1435 = vmatpush1.xpose.msra.mxu0 0.0
  %1436 = vmatprep.subr.mxu0 0.0
  %1437 = vmatpush1.xpose.msra.mxu0 0.0
  %1438 = vmatprep.subr.mxu0 0.0
  %1439 = vmatpush1.xpose.msra.mxu0 0.0
  %1440 = vmatprep.subr.mxu0 0.0
  %1441 = vmatpush1.xpose.msra.mxu0 0.0
  %1442 = vmatprep.subr.mxu0 0.0
  %1443 = vmatpush1.xpose.msra.mxu0 0.0
  %1444 = vmatprep.subr.mxu0 0.0
  %1445 = vmatpush1.xpose.msra.mxu0 0.0
  %1446 = vmatprep.subr.mxu0 0.0
  %1447 = vmatpush1.xpose.msra.mxu0 0.0
  %1448 = vmatprep.subr.mxu0 0.0
  %1449 = vmatpush1.xpose.msra.mxu0 0.0
  %1450 = vmatprep.subr.mxu0 0.0
  %1451 = vmatpush1.xpose.msra.mxu0 0.0
  %1452 = vmatprep.subr.mxu0 0.0
  %1453 = vmatpush1.xpose.msra.mxu0 0.0
  %1454 = vmatprep.subr.mxu0 0.0
  %1455 = vmatpush1.xpose.msra.mxu0 0.0
  %1456 = vmatprep.subr.mxu0 0.0
  %1457 = vmatpush1.xpose.msra.mxu0 0.0
  %1458 = vmatprep.subr.mxu0 0.0
  %1459 = vmatpush1.xpose.msra.mxu0 0.0
  %1460 = vmatprep.subr.mxu0 0.0
  %1461 = vmatpush1.xpose.msra.mxu0 0.0
  %1462 = vmatprep.subr.mxu0 0.0
  %1463 = vmatpush1.xpose.msra.mxu0 0.0
  %1464 = vmatprep.subr.mxu0 0.0
  %1465 = vmatpush1.xpose.msra.mxu0 0.0
  %1466 = vmatprep.subr.mxu0 0.0
  %1467 = vmatpush1.xpose.msra.mxu0 0.0
  %1468 = vmatprep.subr.mxu0 0.0
  %1469 = vmatpush1.xpose.msra.mxu0 0.0
  %1470 = vmatprep.subr.mxu0 0.0
  %1471 = vmatpush1.xpose.msra.mxu0 0.0
  %1472 = vmatprep.subr.mxu0 0.0
  %1473 = vmatpush1.xpose.msra.mxu0 0.0
  %1474 = vmatprep.subr.mxu0 0.0
  %1475 = vmatpush1.xpose.msra.mxu0 0.0
  %1476 = vmatprep.subr.mxu0 0.0
  %1477 = vmatpush1.xpose.msra.mxu0 0.0
  %1478 = vmatprep.subr.mxu0 0.0
  %1479 = vmatpush1.xpose.msra.mxu0 0.0
  %1480 = vmatprep.subr.mxu0 0.0
  %1481 = vmatpush1.xpose.msra.mxu0 0.0
  %1482 = vmatprep.subr.mxu0 0.0
  %1483 = vmatpush1.xpose.msra.mxu0 0.0
  %1484 = vmatprep.subr.mxu0 0.0
  %1485 = vmatpush1.xpose.msra.mxu0 0.0
  %1486 = vmatprep.subr.mxu0 0.0
  %1487 = vmatpush1.xpose.msra.mxu0 0.0
  %1488 = vmatprep.subr.mxu0 0.0
  %1489 = vmatpush1.xpose.msra.mxu0 0.0
  %1490 = vmatprep.subr.mxu0 0.0
  %1491 = vmatpush1.xpose.msra.mxu0 0.0
  %1492 = vmatprep.subr.mxu0 0.0
  %1493 = vmatpush1.xpose.msra.mxu0 0.0
  %1494 = vmatprep.mubr.f32.mxu0 0.0
  %1495 = vmatmul.mubr.f32.gmra.mrb[0].mxu0 %v1426
  %v1496 = vpop.f32.mrb[0].mxu0
  %v1497 = vadd.f32 0.0, %v1496
  %v1498 = vpop.f32.mrb[0].mxu0
  %1499 = vdwg.mxu0
  %v1500 = vsub.f32 %v1419, %v79
  %v1501 = vsub.f32 %v1497, %v79
  %v1502 = vsel %vm503, %v1500, -inf
  %1503 = vmax.xlane.f32.xlu0 %v1502
  %v1504 = vpop.xlane.xlu0 %1503
  %v1505 = vsel %vm503, %v1501, -inf
  %1506 = vmax.xlane.f32.xlu0 %v1505
  %v1507 = vpop.xlane.xlu0 %1506
  %v1508 = vsub.f32 %v1500, %v1504
  %v1509 = vsub.f32 %v1501, %v1507
  %v1510 = vmul.f32 %v1508, 1.442695
  %v1511 = vpow.pop %v1510
  %v1512 = vmul.f32 %v1509, 1.442695
  %v1513 = vpow.pop %v1512
  %v1514 = vsel %vm503, %v1511, 0.0
  %1515 = vadd.xlane.f32.xlu0 %v1514
  %v1516 = vpop.xlane.xlu0 %1515
  %v1517 = vsel %vm503, %v1513, 0.0
  %1518 = vadd.xlane.f32.xlu0 %v1517
  %v1519 = vpop.xlane.xlu0 %1518
  %v1520 = vrcp.pop %v1516
  %v1521 = vmul.f32 %v1511, %v1520
  %v1522 = vrcp.pop %v1519
  %v1523 = vmul.f32 %v1513, %v1522
  %1524 = vrot.lane.b32.xlu0 %v343, 119
  %v1525 = vpop.permute.xlu0 %1524
  %v1527 = vsel %vm186, %v1521, 0
  %v1529 = vsel %vm189, %v1525, 0
  %1531 = vmatprep.subr.mxu0 0.0
  %1532 = vmatpush1.msra.mxu0 %v1529
  %1533 = vmatprep.subr.mxu0 0.0
  %1534 = vmatpush1.msra.mxu0 0.0
  %1535 = vmatprep.subr.mxu0 0.0
  %1536 = vmatpush1.msra.mxu0 0.0
  %1537 = vmatprep.subr.mxu0 0.0
  %1538 = vmatpush1.msra.mxu0 0.0
  %1539 = vmatprep.subr.mxu0 0.0
  %1540 = vmatpush1.msra.mxu0 0.0
  %1541 = vmatprep.subr.mxu0 0.0
  %1542 = vmatpush1.msra.mxu0 0.0
  %1543 = vmatprep.subr.mxu0 0.0
  %1544 = vmatpush1.msra.mxu0 0.0
  %1545 = vmatprep.subr.mxu0 0.0
  %1546 = vmatpush1.msra.mxu0 0.0
  %1547 = vmatprep.subr.mxu0 0.0
  %1548 = vmatpush1.msra.mxu0 0.0
  %1549 = vmatprep.subr.mxu0 0.0
  %1550 = vmatpush1.msra.mxu0 0.0
  %1551 = vmatprep.subr.mxu0 0.0
  %1552 = vmatpush1.msra.mxu0 0.0
  %1553 = vmatprep.subr.mxu0 0.0
  %1554 = vmatpush1.msra.mxu0 0.0
  %1555 = vmatprep.subr.mxu0 0.0
  %1556 = vmatpush1.msra.mxu0 0.0
  %1557 = vmatprep.subr.mxu0 0.0
  %1558 = vmatpush1.msra.mxu0 0.0
  %1559 = vmatprep.subr.mxu0 0.0
  %1560 = vmatpush1.msra.mxu0 0.0
  %1561 = vmatprep.subr.mxu0 0.0
  %1562 = vmatpush1.msra.mxu0 0.0
  %1563 = vmatprep.subr.mxu0 0.0
  %1564 = vmatpush1.msra.mxu0 0.0
  %1565 = vmatprep.subr.mxu0 0.0
  %1566 = vmatpush1.msra.mxu0 0.0
  %1567 = vmatprep.subr.mxu0 0.0
  %1568 = vmatpush1.msra.mxu0 0.0
  %1569 = vmatprep.subr.mxu0 0.0
  %1570 = vmatpush1.msra.mxu0 0.0
  %1571 = vmatprep.subr.mxu0 0.0
  %1572 = vmatpush1.msra.mxu0 0.0
  %1573 = vmatprep.subr.mxu0 0.0
  %1574 = vmatpush1.msra.mxu0 0.0
  %1575 = vmatprep.subr.mxu0 0.0
  %1576 = vmatpush1.msra.mxu0 0.0
  %1577 = vmatprep.subr.mxu0 0.0
  %1578 = vmatpush1.msra.mxu0 0.0
  %1579 = vmatprep.subr.mxu0 0.0
  %1580 = vmatpush1.msra.mxu0 0.0
  %1581 = vmatprep.subr.mxu0 0.0
  %1582 = vmatpush1.msra.mxu0 0.0
  %1583 = vmatprep.subr.mxu0 0.0
  %1584 = vmatpush1.msra.mxu0 0.0
  %1585 = vmatprep.subr.mxu0 0.0
  %1586 = vmatpush1.msra.mxu0 0.0
  %1587 = vmatprep.subr.mxu0 0.0
  %1588 = vmatpush1.msra.mxu0 0.0
  %1589 = vmatprep.subr.mxu0 0.0
  %1590 = vmatpush1.msra.mxu0 0.0
  %1591 = vmatprep.subr.mxu0 0.0
  %1592 = vmatpush1.msra.mxu0 0.0
  %1593 = vmatprep.subr.mxu0 0.0
  %1594 = vmatpush1.msra.mxu0 0.0
  %1595 = vmatprep.mubr.f32.mxu0 0.0
  %1596 = vmatmul.mubr.f32.gmra.mrb[0].mxu0 %v1527
  %v1597 = vpop.f32.mrb[0].mxu0
  %v1598 = vadd.f32 0.0, %v1597
  %v1599 = vpop.f32.mrb[0].mxu0
  %1600 = vdwg.mxu0
  %1601 = vrot.lane.b32.xlu0 %v347, 119
  %v1602 = vpop.permute.xlu0 %1601
  %v1604 = vsel %vm186, %v1523, 0
  %v1606 = vsel %vm189, %v1602, 0
  %1608 = vmatprep.subr.mxu0 0.0
  %1609 = vmatpush1.msra.mxu0 %v1606
  %1610 = vmatprep.subr.mxu0 0.0
  %1611 = vmatpush1.msra.mxu0 0.0
  %1612 = vmatprep.subr.mxu0 0.0
  %1613 = vmatpush1.msra.mxu0 0.0
  %1614 = vmatprep.subr.mxu0 0.0
  %1615 = vmatpush1.msra.mxu0 0.0
  %1616 = vmatprep.subr.mxu0 0.0
  %1617 = vmatpush1.msra.mxu0 0.0
  %1618 = vmatprep.subr.mxu0 0.0
  %1619 = vmatpush1.msra.mxu0 0.0
  %1620 = vmatprep.subr.mxu0 0.0
  %1621 = vmatpush1.msra.mxu0 0.0
  %1622 = vmatprep.subr.mxu0 0.0
  %1623 = vmatpush1.msra.mxu0 0.0
  %1624 = vmatprep.subr.mxu0 0.0
  %1625 = vmatpush1.msra.mxu0 0.0
  %1626 = vmatprep.subr.mxu0 0.0
  %1627 = vmatpush1.msra.mxu0 0.0
  %1628 = vmatprep.subr.mxu0 0.0
  %1629 = vmatpush1.msra.mxu0 0.0
  %1630 = vmatprep.subr.mxu0 0.0
  %1631 = vmatpush1.msra.mxu0 0.0
  %1632 = vmatprep.subr.mxu0 0.0
  %1633 = vmatpush1.msra.mxu0 0.0
  %1634 = vmatprep.subr.mxu0 0.0
  %1635 = vmatpush1.msra.mxu0 0.0
  %1636 = vmatprep.subr.mxu0 0.0
  %1637 = vmatpush1.msra.mxu0 0.0
  %1638 = vmatprep.subr.mxu0 0.0
  %1639 = vmatpush1.msra.mxu0 0.0
  %1640 = vmatprep.subr.mxu0 0.0
  %1641 = vmatpush1.msra.mxu0 0.0
  %1642 = vmatprep.subr.mxu0 0.0
  %1643 = vmatpush1.msra.mxu0 0.0
  %1644 = vmatprep.subr.mxu0 0.0
  %1645 = vmatpush1.msra.mxu0 0.0
  %1646 = vmatprep.subr.mxu0 0.0
  %1647 = vmatpush1.msra.mxu0 0.0
  %1648 = vmatprep.subr.mxu0 0.0
  %1649 = vmatpush1.msra.mxu0 0.0
  %1650 = vmatprep.subr.mxu0 0.0
  %1651 = vmatpush1.msra.mxu0 0.0
  %1652 = vmatprep.subr.mxu0 0.0
  %1653 = vmatpush1.msra.mxu0 0.0
  %1654 = vmatprep.subr.mxu0 0.0
  %1655 = vmatpush1.msra.mxu0 0.0
  %1656 = vmatprep.subr.mxu0 0.0
  %1657 = vmatpush1.msra.mxu0 0.0
  %1658 = vmatprep.subr.mxu0 0.0
  %1659 = vmatpush1.msra.mxu0 0.0
  %1660 = vmatprep.subr.mxu0 0.0
  %1661 = vmatpush1.msra.mxu0 0.0
  %1662 = vmatprep.subr.mxu0 0.0
  %1663 = vmatpush1.msra.mxu0 0.0
  %1664 = vmatprep.subr.mxu0 0.0
  %1665 = vmatpush1.msra.mxu0 0.0
  %1666 = vmatprep.subr.mxu0 0.0
  %1667 = vmatpush1.msra.mxu0 0.0
  %1668 = vmatprep.subr.mxu0 0.0
  %1669 = vmatpush1.msra.mxu0 0.0
  %1670 = vmatprep.subr.mxu0 0.0
  %1671 = vmatpush1.msra.mxu0 0.0
  %1672 = vmatprep.mubr.f32.mxu0 0.0
  %1673 = vmatmul.mubr.f32.gmra.mrb[0].mxu0 %v1604
  %v1674 = vpop.f32.mrb[0].mxu0
  %v1675 = vadd.f32 0.0, %v1674
  %v1676 = vpop.f32.mrb[0].mxu0
  %1677 = vdwg.mxu0
  %1678 = vrot.lane.b32.xlu0 %v348, 116
  %v1679 = vpop.permute.xlu0 %1678
  %1680 = vrot.lane.b32.xlu0 %v260, 116
  %v1681 = vpop.permute.xlu0 %1680
  %v1682 = vsel %vm350, %v1679, 0
  %v1684 = vsel %vm350, %v1681, 0
  %1686 = vmatprep.subr.mxu0 0.0
  %1687 = vmatpush1.xpose.msra.mxu0 %v1684
  %1688 = vmatprep.subr.mxu0 0.0
  %1689 = vmatpush1.xpose.msra.mxu0 0.0
  %1690 = vmatprep.subr.mxu0 0.0
  %1691 = vmatpush1.xpose.msra.mxu0 0.0
  %1692 = vmatprep.subr.mxu0 0.0
  %1693 = vmatpush1.xpose.msra.mxu0 0.0
  %1694 = vmatprep.subr.mxu0 0.0
  %1695 = vmatpush1.xpose.msra.mxu0 0.0
  %1696 = vmatprep.subr.mxu0 0.0
  %1697 = vmatpush1.xpose.msra.mxu0 0.0
  %1698 = vmatprep.subr.mxu0 0.0
  %1699 = vmatpush1.xpose.msra.mxu0 0.0
  %1700 = vmatprep.subr.mxu0 0.0
  %1701 = vmatpush1.xpose.msra.mxu0 0.0
  %1702 = vmatprep.subr.mxu0 0.0
  %1703 = vmatpush1.xpose.msra.mxu0 0.0
  %1704 = vmatprep.subr.mxu0 0.0
  %1705 = vmatpush1.xpose.msra.mxu0 0.0
  %1706 = vmatprep.subr.mxu0 0.0
  %1707 = vmatpush1.xpose.msra.mxu0 0.0
  %1708 = vmatprep.subr.mxu0 0.0
  %1709 = vmatpush1.xpose.msra.mxu0 0.0
  %1710 = vmatprep.subr.mxu0 0.0
  %1711 = vmatpush1.xpose.msra.mxu0 0.0
  %1712 = vmatprep.subr.mxu0 0.0
  %1713 = vmatpush1.xpose.msra.mxu0 0.0
  %1714 = vmatprep.subr.mxu0 0.0
  %1715 = vmatpush1.xpose.msra.mxu0 0.0
  %1716 = vmatprep.subr.mxu0 0.0
  %1717 = vmatpush1.xpose.msra.mxu0 0.0
  %1718 = vmatprep.subr.mxu0 0.0
  %1719 = vmatpush1.xpose.msra.mxu0 0.0
  %1720 = vmatprep.subr.mxu0 0.0
  %1721 = vmatpush1.xpose.msra.mxu0 0.0
  %1722 = vmatprep.subr.mxu0 0.0
  %1723 = vmatpush1.xpose.msra.mxu0 0.0
  %1724 = vmatprep.subr.mxu0 0.0
  %1725 = vmatpush1.xpose.msra.mxu0 0.0
  %1726 = vmatprep.subr.mxu0 0.0
  %1727 = vmatpush1.xpose.msra.mxu0 0.0
  %1728 = vmatprep.subr.mxu0 0.0
  %1729 = vmatpush1.xpose.msra.mxu0 0.0
  %1730 = vmatprep.subr.mxu0 0.0
  %1731 = vmatpush1.xpose.msra.mxu0 0.0
  %1732 = vmatprep.subr.mxu0 0.0
  %1733 = vmatpush1.xpose.msra.mxu0 0.0
  %1734 = vmatprep.subr.mxu0 0.0
  %1735 = vmatpush1.xpose.msra.mxu0 0.0
  %1736 = vmatprep.subr.mxu0 0.0
  %1737 = vmatpush1.xpose.msra.mxu0 0.0
  %1738 = vmatprep.subr.mxu0 0.0
  %1739 = vmatpush1.xpose.msra.mxu0 0.0
  %1740 = vmatprep.subr.mxu0 0.0
  %1741 = vmatpush1.xpose.msra.mxu0 0.0
  %1742 = vmatprep.subr.mxu0 0.0
  %1743 = vmatpush1.xpose.msra.mxu0 0.0
  %1744 = vmatprep.subr.mxu0 0.0
  %1745 = vmatpush1.xpose.msra.mxu0 0.0
  %1746 = vmatprep.subr.mxu0 0.0
  %1747 = vmatpush1.xpose.msra.mxu0 0.0
  %1748 = vmatprep.subr.mxu0 0.0
  %1749 = vmatpush1.xpose.msra.mxu0 0.0
  %1750 = vmatprep.mubr.f32.mxu0 0.0
  %1751 = vmatmul.mubr.f32.gmra.mrb[0].mxu0 %v1682
  %v1752 = vpop.f32.mrb[0].mxu0
  %v1753 = vadd.f32 0.0, %v1752
  %v1754 = vpop.f32.mrb[0].mxu0
  %1755 = vdwg.mxu0
  %1756 = vrot.lane.b32.xlu0 %v349, 116
  %v1757 = vpop.permute.xlu0 %1756
  %1758 = vrot.lane.b32.xlu0 %v264, 116
  %v1759 = vpop.permute.xlu0 %1758
  %v1760 = vsel %vm350, %v1757, 0
  %v1762 = vsel %vm350, %v1759, 0
  %1764 = vmatprep.subr.mxu0 0.0
  %1765 = vmatpush1.xpose.msra.mxu0 %v1762
  %1766 = vmatprep.subr.mxu0 0.0
  %1767 = vmatpush1.xpose.msra.mxu0 0.0
  %1768 = vmatprep.subr.mxu0 0.0
  %1769 = vmatpush1.xpose.msra.mxu0 0.0
  %1770 = vmatprep.subr.mxu0 0.0
  %1771 = vmatpush1.xpose.msra.mxu0 0.0
  %1772 = vmatprep.subr.mxu0 0.0
  %1773 = vmatpush1.xpose.msra.mxu0 0.0
  %1774 = vmatprep.subr.mxu0 0.0
  %1775 = vmatpush1.xpose.msra.mxu0 0.0
  %1776 = vmatprep.subr.mxu0 0.0
  %1777 = vmatpush1.xpose.msra.mxu0 0.0
  %1778 = vmatprep.subr.mxu0 0.0
  %1779 = vmatpush1.xpose.msra.mxu0 0.0
  %1780 = vmatprep.subr.mxu0 0.0
  %1781 = vmatpush1.xpose.msra.mxu0 0.0
  %1782 = vmatprep.subr.mxu0 0.0
  %1783 = vmatpush1.xpose.msra.mxu0 0.0
  %1784 = vmatprep.subr.mxu0 0.0
  %1785 = vmatpush1.xpose.msra.mxu0 0.0
  %1786 = vmatprep.subr.mxu0 0.0
  %1787 = vmatpush1.xpose.msra.mxu0 0.0
  %1788 = vmatprep.subr.mxu0 0.0
  %1789 = vmatpush1.xpose.msra.mxu0 0.0
  %1790 = vmatprep.subr.mxu0 0.0
  %1791 = vmatpush1.xpose.msra.mxu0 0.0
  %1792 = vmatprep.subr.mxu0 0.0
  %1793 = vmatpush1.xpose.msra.mxu0 0.0
  %1794 = vmatprep.subr.mxu0 0.0
  %1795 = vmatpush1.xpose.msra.mxu0 0.0
  %1796 = vmatprep.subr.mxu0 0.0
  %1797 = vmatpush1.xpose.msra.mxu0 0.0
  %1798 = vmatprep.subr.mxu0 0.0
  %1799 = vmatpush1.xpose.msra.mxu0 0.0
  %1800 = vmatprep.subr.mxu0 0.0
  %1801 = vmatpush1.xpose.msra.mxu0 0.0
  %1802 = vmatprep.subr.mxu0 0.0
  %1803 = vmatpush1.xpose.msra.mxu0 0.0
  %1804 = vmatprep.subr.mxu0 0.0
  %1805 = vmatpush1.xpose.msra.mxu0 0.0
  %1806 = vmatprep.subr.mxu0 0.0
  %1807 = vmatpush1.xpose.msra.mxu0 0.0
  %1808 = vmatprep.subr.mxu0 0.0
  %1809 = vmatpush1.xpose.msra.mxu0 0.0
  %1810 = vmatprep.subr.mxu0 0.0
  %1811 = vmatpush1.xpose.msra.mxu0 0.0
  %1812 = vmatprep.subr.mxu0 0.0
  %1813 = vmatpush1.xpose.msra.mxu0 0.0
  %1814 = vmatprep.subr.mxu0 0.0
  %1815 = vmatpush1.xpose.msra.mxu0 0.0
  %1816 = vmatprep.subr.mxu0 0.0
  %1817 = vmatpush1.xpose.msra.mxu0 0.0
  %1818 = vmatprep.subr.mxu0 0.0
  %1819 = vmatpush1.xpose.msra.mxu0 0.0
  %1820 = vmatprep.subr.mxu0 0.0
  %1821 = vmatpush1.xpose.msra.mxu0 0.0
  %1822 = vmatprep.subr.mxu0 0.0
  %1823 = vmatpush1.xpose.msra.mxu0 0.0
  %1824 = vmatprep.subr.mxu0 0.0
  %1825 = vmatpush1.xpose.msra.mxu0 0.0
  %1826 = vmatprep.subr.mxu0 0.0
  %1827 = vmatpush1.xpose.msra.mxu0 0.0
  %1828 = vmatprep.mubr.f32.mxu0 0.0
  %1829 = vmatmul.mubr.f32.gmra.mrb[0].mxu0 %v1760
  %v1830 = vpop.f32.mrb[0].mxu0
  %v1831 = vadd.f32 0.0, %v1830
  %v1832 = vpop.f32.mrb[0].mxu0
  %1833 = vdwg.mxu0
  %v1834 = vsub.f32 %v1753, %v79
  %v1835 = vsub.f32 %v1831, %v79
  %v1836 = vsel %vm503, %v1834, -inf
  %1837 = vmax.xlane.f32.xlu0 %v1836
  %v1838 = vpop.xlane.xlu0 %1837
  %v1839 = vsel %vm503, %v1835, -inf
  %1840 = vmax.xlane.f32.xlu0 %v1839
  %v1841 = vpop.xlane.xlu0 %1840
  %v1842 = vsub.f32 %v1834, %v1838
  %v1843 = vsub.f32 %v1835, %v1841
  %v1844 = vmul.f32 %v1842, 1.442695
  %v1845 = vpow.pop %v1844
  %v1846 = vmul.f32 %v1843, 1.442695
  %v1847 = vpow.pop %v1846
  %v1848 = vsel %vm503, %v1845, 0.0
  %1849 = vadd.xlane.f32.xlu0 %v1848
  %v1850 = vpop.xlane.xlu0 %1849
  %v1851 = vsel %vm503, %v1847, 0.0
  %1852 = vadd.xlane.f32.xlu0 %v1851
  %v1853 = vpop.xlane.xlu0 %1852
  %v1854 = vrcp.pop %v1850
  %v1855 = vmul.f32 %v1845, %v1854
  %v1856 = vrcp.pop %v1853
  %v1857 = vmul.f32 %v1847, %v1856
  %1858 = vrot.lane.b32.xlu0 %v343, 116
  %v1859 = vpop.permute.xlu0 %1858
  %v1861 = vsel %vm186, %v1855, 0
  %v1863 = vsel %vm189, %v1859, 0
  %1865 = vmatprep.subr.mxu0 0.0
  %1866 = vmatpush1.msra.mxu0 %v1863
  %1867 = vmatprep.subr.mxu0 0.0
  %1868 = vmatpush1.msra.mxu0 0.0
  %1869 = vmatprep.subr.mxu0 0.0
  %1870 = vmatpush1.msra.mxu0 0.0
  %1871 = vmatprep.subr.mxu0 0.0
  %1872 = vmatpush1.msra.mxu0 0.0
  %1873 = vmatprep.subr.mxu0 0.0
  %1874 = vmatpush1.msra.mxu0 0.0
  %1875 = vmatprep.subr.mxu0 0.0
  %1876 = vmatpush1.msra.mxu0 0.0
  %1877 = vmatprep.subr.mxu0 0.0
  %1878 = vmatpush1.msra.mxu0 0.0
  %1879 = vmatprep.subr.mxu0 0.0
  %1880 = vmatpush1.msra.mxu0 0.0
  %1881 = vmatprep.subr.mxu0 0.0
  %1882 = vmatpush1.msra.mxu0 0.0
  %1883 = vmatprep.subr.mxu0 0.0
  %1884 = vmatpush1.msra.mxu0 0.0
  %1885 = vmatprep.subr.mxu0 0.0
  %1886 = vmatpush1.msra.mxu0 0.0
  %1887 = vmatprep.subr.mxu0 0.0
  %1888 = vmatpush1.msra.mxu0 0.0
  %1889 = vmatprep.subr.mxu0 0.0
  %1890 = vmatpush1.msra.mxu0 0.0
  %1891 = vmatprep.subr.mxu0 0.0
  %1892 = vmatpush1.msra.mxu0 0.0
  %1893 = vmatprep.subr.mxu0 0.0
  %1894 = vmatpush1.msra.mxu0 0.0
  %1895 = vmatprep.subr.mxu0 0.0
  %1896 = vmatpush1.msra.mxu0 0.0
  %1897 = vmatprep.subr.mxu0 0.0
  %1898 = vmatpush1.msra.mxu0 0.0
  %1899 = vmatprep.subr.mxu0 0.0
  %1900 = vmatpush1.msra.mxu0 0.0
  %1901 = vmatprep.subr.mxu0 0.0
  %1902 = vmatpush1.msra.mxu0 0.0
  %1903 = vmatprep.subr.mxu0 0.0
  %1904 = vmatpush1.msra.mxu0 0.0
  %1905 = vmatprep.subr.mxu0 0.0
  %1906 = vmatpush1.msra.mxu0 0.0
  %1907 = vmatprep.subr.mxu0 0.0
  %1908 = vmatpush1.msra.mxu0 0.0
  %1909 = vmatprep.subr.mxu0 0.0
  %1910 = vmatpush1.msra.mxu0 0.0
  %1911 = vmatprep.subr.mxu0 0.0
  %1912 = vmatpush1.msra.mxu0 0.0
  %1913 = vmatprep.subr.mxu0 0.0
  %1914 = vmatpush1.msra.mxu0 0.0
  %1915 = vmatprep.subr.mxu0 0.0
  %1916 = vmatpush1.msra.mxu0 0.0
  %1917 = vmatprep.subr.mxu0 0.0
  %1918 = vmatpush1.msra.mxu0 0.0
  %1919 = vmatprep.subr.mxu0 0.0
  %1920 = vmatpush1.msra.mxu0 0.0
  %1921 = vmatprep.subr.mxu0 0.0
  %1922 = vmatpush1.msra.mxu0 0.0
  %1923 = vmatprep.subr.mxu0 0.0
  %1924 = vmatpush1.msra.mxu0 0.0
  %1925 = vmatprep.subr.mxu0 0.0
  %1926 = vmatpush1.msra.mxu0 0.0
  %1927 = vmatprep.subr.mxu0 0.0
  %1928 = vmatpush1.msra.mxu0 0.0
  %1929 = vmatprep.mubr.f32.mxu0 0.0
  %1930 = vmatmul.mubr.f32.gmra.mrb[0].mxu0 %v1861
  %v1931 = vpop.f32.mrb[0].mxu0
  %v1932 = vadd.f32 0.0, %v1931
  %v1933 = vpop.f32.mrb[0].mxu0
  %1934 = vdwg.mxu0
  %1935 = vrot.lane.b32.xlu0 %v347, 116
  %v1936 = vpop.permute.xlu0 %1935
  %v1938 = vsel %vm186, %v1857, 0
  %v1940 = vsel %vm189, %v1936, 0
  %1942 = vmatprep.subr.mxu0 0.0
  %1943 = vmatpush1.msra.mxu0 %v1940
  %1944 = vmatprep.subr.mxu0 0.0
  %1945 = vmatpush1.msra.mxu0 0.0
  %1946 = vmatprep.subr.mxu0 0.0
  %1947 = vmatpush1.msra.mxu0 0.0
  %1948 = vmatprep.subr.mxu0 0.0
  %1949 = vmatpush1.msra.mxu0 0.0
  %1950 = vmatprep.subr.mxu0 0.0
  %1951 = vmatpush1.msra.mxu0 0.0
  %1952 = vmatprep.subr.mxu0 0.0
  %1953 = vmatpush1.msra.mxu0 0.0
  %1954 = vmatprep.subr.mxu0 0.0
  %1955 = vmatpush1.msra.mxu0 0.0
  %1956 = vmatprep.subr.mxu0 0.0
  %1957 = vmatpush1.msra.mxu0 0.0
  %1958 = vmatprep.subr.mxu0 0.0
  %1959 = vmatpush1.msra.mxu0 0.0
  %1960 = vmatprep.subr.mxu0 0.0
  %1961 = vmatpush1.msra.mxu0 0.0
  %1962 = vmatprep.subr.mxu0 0.0
  %1963 = vmatpush1.msra.mxu0 0.0
  %1964 = vmatprep.subr.mxu0 0.0
  %1965 = vmatpush1.msra.mxu0 0.0
  %1966 = vmatprep.subr.mxu0 0.0
  %1967 = vmatpush1.msra.mxu0 0.0
  %1968 = vmatprep.subr.mxu0 0.0
  %1969 = vmatpush1.msra.mxu0 0.0
  %1970 = vmatprep.subr.mxu0 0.0
  %1971 = vmatpush1.msra.mxu0 0.0
  %1972 = vmatprep.subr.mxu0 0.0
  %1973 = vmatpush1.msra.mxu0 0.0
  %1974 = vmatprep.subr.mxu0 0.0
  %1975 = vmatpush1.msra.mxu0 0.0
  %1976 = vmatprep.subr.mxu0 0.0
  %1977 = vmatpush1.msra.mxu0 0.0
  %1978 = vmatprep.subr.mxu0 0.0
  %1979 = vmatpush1.msra.mxu0 0.0
  %1980 = vmatprep.subr.mxu0 0.0
  %1981 = vmatpush1.msra.mxu0 0.0
  %1982 = vmatprep.subr.mxu0 0.0
  %1983 = vmatpush1.msra.mxu0 0.0
  %1984 = vmatprep.subr.mxu0 0.0
  %1985 = vmatpush1.msra.mxu0 0.0
  %1986 = vmatprep.subr.mxu0 0.0
  %1987 = vmatpush1.msra.mxu0 0.0
  %1988 = vmatprep.subr.mxu0 0.0
  %1989 = vmatpush1.msra.mxu0 0.0
  %1990 = vmatprep.subr.mxu0 0.0
  %1991 = vmatpush1.msra.mxu0 0.0
  %1992 = vmatprep.subr.mxu0 0.0
  %1993 = vmatpush1.msra.mxu0 0.0
  %1994 = vmatprep.subr.mxu0 0.0
  %1995 = vmatpush1.msra.mxu0 0.0
  %1996 = vmatprep.subr.mxu0 0.0
  %1997 = vmatpush1.msra.mxu0 0.0
  %1998 = vmatprep.subr.mxu0 0.0
  %1999 = vmatpush1.msra.mxu0 0.0
  %2000 = vmatprep.subr.mxu0 0.0
  %2001 = vmatpush1.msra.mxu0 0.0
  %2002 = vmatprep.subr.mxu0 0.0
  %2003 = vmatpush1.msra.mxu0 0.0
  %2004 = vmatprep.subr.mxu0 0.0
  %2005 = vmatpush1.msra.mxu0 0.0
  %2006 = vmatprep.mubr.f32.mxu0 0.0
  %2007 = vmatmul.mubr.f32.gmra.mrb[0].mxu0 %v1938
  %v2008 = vpop.f32.mrb[0].mxu0
  %v2009 = vadd.f32 0.0, %v2008
  %v2010 = vpop.f32.mrb[0].mxu0
  %2011 = vdwg.mxu0
  %2012 = vrot.lane.b32.xlu0 %v348, 113
  %v2013 = vpop.permute.xlu0 %2012
  %2014 = vrot.lane.b32.xlu0 %v260, 113
  %v2015 = vpop.permute.xlu0 %2014
  %v2016 = vsel %vm350, %v2013, 0
  %v2018 = vsel %vm350, %v2015, 0
  %2020 = vmatprep.subr.mxu0 0.0
  %2021 = vmatpush1.xpose.msra.mxu0 %v2018
  %2022 = vmatprep.subr.mxu0 0.0
  %2023 = vmatpush1.xpose.msra.mxu0 0.0
  %2024 = vmatprep.subr.mxu0 0.0
  %2025 = vmatpush1.xpose.msra.mxu0 0.0
  %2026 = vmatprep.subr.mxu0 0.0
  %2027 = vmatpush1.xpose.msra.mxu0 0.0
  %2028 = vmatprep.subr.mxu0 0.0
  %2029 = vmatpush1.xpose.msra.mxu0 0.0
  %2030 = vmatprep.subr.mxu0 0.0
  %2031 = vmatpush1.xpose.msra.mxu0 0.0
  %2032 = vmatprep.subr.mxu0 0.0
  %2033 = vmatpush1.xpose.msra.mxu0 0.0
  %2034 = vmatprep.subr.mxu0 0.0
  %2035 = vmatpush1.xpose.msra.mxu0 0.0
  %2036 = vmatprep.subr.mxu0 0.0
  %2037 = vmatpush1.xpose.msra.mxu0 0.0
  %2038 = vmatprep.subr.mxu0 0.0
  %2039 = vmatpush1.xpose.msra.mxu0 0.0
  %2040 = vmatprep.subr.mxu0 0.0
  %2041 = vmatpush1.xpose.msra.mxu0 0.0
  %2042 = vmatprep.subr.mxu0 0.0
  %2043 = vmatpush1.xpose.msra.mxu0 0.0
  %2044 = vmatprep.subr.mxu0 0.0
  %2045 = vmatpush1.xpose.msra.mxu0 0.0
  %2046 = vmatprep.subr.mxu0 0.0
  %2047 = vmatpush1.xpose.msra.mxu0 0.0
  %2048 = vmatprep.subr.mxu0 0.0
  %2049 = vmatpush1.xpose.msra.mxu0 0.0
  %2050 = vmatprep.subr.mxu0 0.0
  %2051 = vmatpush1.xpose.msra.mxu0 0.0
  %2052 = vmatprep.subr.mxu0 0.0
  %2053 = vmatpush1.xpose.msra.mxu0 0.0
  %2054 = vmatprep.subr.mxu0 0.0
  %2055 = vmatpush1.xpose.msra.mxu0 0.0
  %2056 = vmatprep.subr.mxu0 0.0
  %2057 = vmatpush1.xpose.msra.mxu0 0.0
  %2058 = vmatprep.subr.mxu0 0.0
  %2059 = vmatpush1.xpose.msra.mxu0 0.0
  %2060 = vmatprep.subr.mxu0 0.0
  %2061 = vmatpush1.xpose.msra.mxu0 0.0
  %2062 = vmatprep.subr.mxu0 0.0
  %2063 = vmatpush1.xpose.msra.mxu0 0.0
  %2064 = vmatprep.subr.mxu0 0.0
  %2065 = vmatpush1.xpose.msra.mxu0 0.0
  %2066 = vmatprep.subr.mxu0 0.0
  %2067 = vmatpush1.xpose.msra.mxu0 0.0
  %2068 = vmatprep.subr.mxu0 0.0
  %2069 = vmatpush1.xpose.msra.mxu0 0.0
  %2070 = vmatprep.subr.mxu0 0.0
  %2071 = vmatpush1.xpose.msra.mxu0 0.0
  %2072 = vmatprep.subr.mxu0 0.0
  %2073 = vmatpush1.xpose.msra.mxu0 0.0
  %2074 = vmatprep.subr.mxu0 0.0
  %2075 = vmatpush1.xpose.msra.mxu0 0.0
  %2076 = vmatprep.subr.mxu0 0.0
  %2077 = vmatpush1.xpose.msra.mxu0 0.0
  %2078 = vmatprep.subr.mxu0 0.0
  %2079 = vmatpush1.xpose.msra.mxu0 0.0
  %2080 = vmatprep.subr.mxu0 0.0
  %2081 = vmatpush1.xpose.msra.mxu0 0.0
  %2082 = vmatprep.subr.mxu0 0.0
  %2083 = vmatpush1.xpose.msra.mxu0 0.0
  %2084 = vmatprep.mubr.f32.mxu0 0.0
  %2085 = vmatmul.mubr.f32.gmra.mrb[0].mxu0 %v2016
  %v2086 = vpop.f32.mrb[0].mxu0
  %v2087 = vadd.f32 0.0, %v2086
  %v2088 = vpop.f32.mrb[0].mxu0
  %2089 = vdwg.mxu0
  %2090 = vrot.lane.b32.xlu0 %v349, 113
  %v2091 = vpop.permute.xlu0 %2090
  %2092 = vrot.lane.b32.xlu0 %v264, 113
  %v2093 = vpop.permute.xlu0 %2092
  %v2094 = vsel %vm350, %v2091, 0
  %v2096 = vsel %vm350, %v2093, 0
  %2098 = vmatprep.subr.mxu0 0.0
  %2099 = vmatpush1.xpose.msra.mxu0 %v2096
  %2100 = vmatprep.subr.mxu0 0.0
  %2101 = vmatpush1.xpose.msra.mxu0 0.0
  %2102 = vmatprep.subr.mxu0 0.0
  %2103 = vmatpush1.xpose.msra.mxu0 0.0
  %2104 = vmatprep.subr.mxu0 0.0
  %2105 = vmatpush1.xpose.msra.mxu0 0.0
  %2106 = vmatprep.subr.mxu0 0.0
  %2107 = vmatpush1.xpose.msra.mxu0 0.0
  %2108 = vmatprep.subr.mxu0 0.0
  %2109 = vmatpush1.xpose.msra.mxu0 0.0
  %2110 = vmatprep.subr.mxu0 0.0
  %2111 = vmatpush1.xpose.msra.mxu0 0.0
  %2112 = vmatprep.subr.mxu0 0.0
  %2113 = vmatpush1.xpose.msra.mxu0 0.0
  %2114 = vmatprep.subr.mxu0 0.0
  %2115 = vmatpush1.xpose.msra.mxu0 0.0
  %2116 = vmatprep.subr.mxu0 0.0
  %2117 = vmatpush1.xpose.msra.mxu0 0.0
  %2118 = vmatprep.subr.mxu0 0.0
  %2119 = vmatpush1.xpose.msra.mxu0 0.0
  %2120 = vmatprep.subr.mxu0 0.0
  %2121 = vmatpush1.xpose.msra.mxu0 0.0
  %2122 = vmatprep.subr.mxu0 0.0
  %2123 = vmatpush1.xpose.msra.mxu0 0.0
  %2124 = vmatprep.subr.mxu0 0.0
  %2125 = vmatpush1.xpose.msra.mxu0 0.0
  %2126 = vmatprep.subr.mxu0 0.0
  %2127 = vmatpush1.xpose.msra.mxu0 0.0
  %2128 = vmatprep.subr.mxu0 0.0
  %2129 = vmatpush1.xpose.msra.mxu0 0.0
  %2130 = vmatprep.subr.mxu0 0.0
  %2131 = vmatpush1.xpose.msra.mxu0 0.0
  %2132 = vmatprep.subr.mxu0 0.0
  %2133 = vmatpush1.xpose.msra.mxu0 0.0
  %2134 = vmatprep.subr.mxu0 0.0
  %2135 = vmatpush1.xpose.msra.mxu0 0.0
  %2136 = vmatprep.subr.mxu0 0.0
  %2137 = vmatpush1.xpose.msra.mxu0 0.0
  %2138 = vmatprep.subr.mxu0 0.0
  %2139 = vmatpush1.xpose.msra.mxu0 0.0
  %2140 = vmatprep.subr.mxu0 0.0
  %2141 = vmatpush1.xpose.msra.mxu0 0.0
  %2142 = vmatprep.subr.mxu0 0.0
  %2143 = vmatpush1.xpose.msra.mxu0 0.0
  %2144 = vmatprep.subr.mxu0 0.0
  %2145 = vmatpush1.xpose.msra.mxu0 0.0
  %2146 = vmatprep.subr.mxu0 0.0
  %2147 = vmatpush1.xpose.msra.mxu0 0.0
  %2148 = vmatprep.subr.mxu0 0.0
  %2149 = vmatpush1.xpose.msra.mxu0 0.0
  %2150 = vmatprep.subr.mxu0 0.0
  %2151 = vmatpush1.xpose.msra.mxu0 0.0
  %2152 = vmatprep.subr.mxu0 0.0
  %2153 = vmatpush1.xpose.msra.mxu0 0.0
  %2154 = vmatprep.subr.mxu0 0.0
  %2155 = vmatpush1.xpose.msra.mxu0 0.0
  %2156 = vmatprep.subr.mxu0 0.0
  %2157 = vmatpush1.xpose.msra.mxu0 0.0
  %2158 = vmatprep.subr.mxu0 0.0
  %2159 = vmatpush1.xpose.msra.mxu0 0.0
  %2160 = vmatprep.subr.mxu0 0.0
  %2161 = vmatpush1.xpose.msra.mxu0 0.0
  %2162 = vmatprep.mubr.f32.mxu0 0.0
  %2163 = vmatmul.mubr.f32.gmra.mrb[0].mxu0 %v2094
  %v2164 = vpop.f32.mrb[0].mxu0
  %v2165 = vadd.f32 0.0, %v2164
  %v2166 = vpop.f32.mrb[0].mxu0
  %2167 = vdwg.mxu0
  %v2168 = vsub.f32 %v2087, %v79
  %v2169 = vsub.f32 %v2165, %v79
  %v2170 = vsel %vm503, %v2168, -inf
  %2171 = vmax.xlane.f32.xlu0 %v2170
  %v2172 = vpop.xlane.xlu0 %2171
  %v2173 = vsel %vm503, %v2169, -inf
  %2174 = vmax.xlane.f32.xlu0 %v2173
  %v2175 = vpop.xlane.xlu0 %2174
  %v2176 = vsub.f32 %v2168, %v2172
  %v2177 = vsub.f32 %v2169, %v2175
  %v2178 = vmul.f32 %v2176, 1.442695
  %v2179 = vpow.pop %v2178
  %v2180 = vmul.f32 %v2177, 1.442695
  %v2181 = vpow.pop %v2180
  %v2182 = vsel %vm503, %v2179, 0.0
  %2183 = vadd.xlane.f32.xlu0 %v2182
  %v2184 = vpop.xlane.xlu0 %2183
  %v2185 = vsel %vm503, %v2181, 0.0
  %2186 = vadd.xlane.f32.xlu0 %v2185
  %v2187 = vpop.xlane.xlu0 %2186
  %v2188 = vrcp.pop %v2184
  %v2189 = vmul.f32 %v2179, %v2188
  %v2190 = vrcp.pop %v2187
  %v2191 = vmul.f32 %v2181, %v2190
  %2192 = vrot.lane.b32.xlu0 %v343, 113
  %v2193 = vpop.permute.xlu0 %2192
  %v2195 = vsel %vm186, %v2189, 0
  %v2197 = vsel %vm189, %v2193, 0
  %2199 = vmatprep.subr.mxu0 0.0
  %2200 = vmatpush1.msra.mxu0 %v2197
  %2201 = vmatprep.subr.mxu0 0.0
  %2202 = vmatpush1.msra.mxu0 0.0
  %2203 = vmatprep.subr.mxu0 0.0
  %2204 = vmatpush1.msra.mxu0 0.0
  %2205 = vmatprep.subr.mxu0 0.0
  %2206 = vmatpush1.msra.mxu0 0.0
  %2207 = vmatprep.subr.mxu0 0.0
  %2208 = vmatpush1.msra.mxu0 0.0
  %2209 = vmatprep.subr.mxu0 0.0
  %2210 = vmatpush1.msra.mxu0 0.0
  %2211 = vmatprep.subr.mxu0 0.0
  %2212 = vmatpush1.msra.mxu0 0.0
  %2213 = vmatprep.subr.mxu0 0.0
  %2214 = vmatpush1.msra.mxu0 0.0
  %2215 = vmatprep.subr.mxu0 0.0
  %2216 = vmatpush1.msra.mxu0 0.0
  %2217 = vmatprep.subr.mxu0 0.0
  %2218 = vmatpush1.msra.mxu0 0.0
  %2219 = vmatprep.subr.mxu0 0.0
  %2220 = vmatpush1.msra.mxu0 0.0
  %2221 = vmatprep.subr.mxu0 0.0
  %2222 = vmatpush1.msra.mxu0 0.0
  %2223 = vmatprep.subr.mxu0 0.0
  %2224 = vmatpush1.msra.mxu0 0.0
  %2225 = vmatprep.subr.mxu0 0.0
  %2226 = vmatpush1.msra.mxu0 0.0
  %2227 = vmatprep.subr.mxu0 0.0
  %2228 = vmatpush1.msra.mxu0 0.0
  %2229 = vmatprep.subr.mxu0 0.0
  %2230 = vmatpush1.msra.mxu0 0.0
  %2231 = vmatprep.subr.mxu0 0.0
  %2232 = vmatpush1.msra.mxu0 0.0
  %2233 = vmatprep.subr.mxu0 0.0
  %2234 = vmatpush1.msra.mxu0 0.0
  %2235 = vmatprep.subr.mxu0 0.0
  %2236 = vmatpush1.msra.mxu0 0.0
  %2237 = vmatprep.subr.mxu0 0.0
  %2238 = vmatpush1.msra.mxu0 0.0
  %2239 = vmatprep.subr.mxu0 0.0
  %2240 = vmatpush1.msra.mxu0 0.0
  %2241 = vmatprep.subr.mxu0 0.0
  %2242 = vmatpush1.msra.mxu0 0.0
  %2243 = vmatprep.subr.mxu0 0.0
  %2244 = vmatpush1.msra.mxu0 0.0
  %2245 = vmatprep.subr.mxu0 0.0
  %2246 = vmatpush1.msra.mxu0 0.0
  %2247 = vmatprep.subr.mxu0 0.0
  %2248 = vmatpush1.msra.mxu0 0.0
  %2249 = vmatprep.subr.mxu0 0.0
  %2250 = vmatpush1.msra.mxu0 0.0
  %2251 = vmatprep.subr.mxu0 0.0
  %2252 = vmatpush1.msra.mxu0 0.0
  %2253 = vmatprep.subr.mxu0 0.0
  %2254 = vmatpush1.msra.mxu0 0.0
  %2255 = vmatprep.subr.mxu0 0.0
  %2256 = vmatpush1.msra.mxu0 0.0
  %2257 = vmatprep.subr.mxu0 0.0
  %2258 = vmatpush1.msra.mxu0 0.0
  %2259 = vmatprep.subr.mxu0 0.0
  %2260 = vmatpush1.msra.mxu0 0.0
  %2261 = vmatprep.subr.mxu0 0.0
  %2262 = vmatpush1.msra.mxu0 0.0
  %2263 = vmatprep.mubr.f32.mxu0 0.0
  %2264 = vmatmul.mubr.f32.gmra.mrb[0].mxu0 %v2195
  %v2265 = vpop.f32.mrb[0].mxu0
  %v2266 = vadd.f32 0.0, %v2265
  %v2267 = vpop.f32.mrb[0].mxu0
  %2268 = vdwg.mxu0
  %2269 = vrot.lane.b32.xlu0 %v347, 113
  %v2270 = vpop.permute.xlu0 %2269
  %v2272 = vsel %vm186, %v2191, 0
  %v2274 = vsel %vm189, %v2270, 0
  %2276 = vmatprep.subr.mxu0 0.0
  %2277 = vmatpush1.msra.mxu0 %v2274
  %2278 = vmatprep.subr.mxu0 0.0
  %2279 = vmatpush1.msra.mxu0 0.0
  %2280 = vmatprep.subr.mxu0 0.0
  %2281 = vmatpush1.msra.mxu0 0.0
  %2282 = vmatprep.subr.mxu0 0.0
  %2283 = vmatpush1.msra.mxu0 0.0
  %2284 = vmatprep.subr.mxu0 0.0
  %2285 = vmatpush1.msra.mxu0 0.0
  %2286 = vmatprep.subr.mxu0 0.0
  %2287 = vmatpush1.msra.mxu0 0.0
  %2288 = vmatprep.subr.mxu0 0.0
  %2289 = vmatpush1.msra.mxu0 0.0
  %2290 = vmatprep.subr.mxu0 0.0
  %2291 = vmatpush1.msra.mxu0 0.0
  %2292 = vmatprep.subr.mxu0 0.0
  %2293 = vmatpush1.msra.mxu0 0.0
  %2294 = vmatprep.subr.mxu0 0.0
  %2295 = vmatpush1.msra.mxu0 0.0
  %2296 = vmatprep.subr.mxu0 0.0
  %2297 = vmatpush1.msra.mxu0 0.0
  %2298 = vmatprep.subr.mxu0 0.0
  %2299 = vmatpush1.msra.mxu0 0.0
  %2300 = vmatprep.subr.mxu0 0.0
  %2301 = vmatpush1.msra.mxu0 0.0
  %2302 = vmatprep.subr.mxu0 0.0
  %2303 = vmatpush1.msra.mxu0 0.0
  %2304 = vmatprep.subr.mxu0 0.0
  %2305 = vmatpush1.msra.mxu0 0.0
  %2306 = vmatprep.subr.mxu0 0.0
  %2307 = vmatpush1.msra.mxu0 0.0
  %2308 = vmatprep.subr.mxu0 0.0
  %2309 = vmatpush1.msra.mxu0 0.0
  %2310 = vmatprep.subr.mxu0 0.0
  %2311 = vmatpush1.msra.mxu0 0.0
  %2312 = vmatprep.subr.mxu0 0.0
  %2313 = vmatpush1.msra.mxu0 0.0
  %2314 = vmatprep.subr.mxu0 0.0
  %2315 = vmatpush1.msra.mxu0 0.0
  %2316 = vmatprep.subr.mxu0 0.0
  %2317 = vmatpush1.msra.mxu0 0.0
  %2318 = vmatprep.subr.mxu0 0.0
  %2319 = vmatpush1.msra.mxu0 0.0
  %2320 = vmatprep.subr.mxu0 0.0
  %2321 = vmatpush1.msra.mxu0 0.0
  %2322 = vmatprep.subr.mxu0 0.0
  %2323 = vmatpush1.msra.mxu0 0.0
  %2324 = vmatprep.subr.mxu0 0.0
  %2325 = vmatpush1.msra.mxu0 0.0
  %2326 = vmatprep.subr.mxu0 0.0
  %2327 = vmatpush1.msra.mxu0 0.0
  %2328 = vmatprep.subr.mxu0 0.0
  %2329 = vmatpush1.msra.mxu0 0.0
  %2330 = vmatprep.subr.mxu0 0.0
  %2331 = vmatpush1.msra.mxu0 0.0
  %2332 = vmatprep.subr.mxu0 0.0
  %2333 = vmatpush1.msra.mxu0 0.0
  %2334 = vmatprep.subr.mxu0 0.0
  %2335 = vmatpush1.msra.mxu0 0.0
  %2336 = vmatprep.subr.mxu0 0.0
  %2337 = vmatpush1.msra.mxu0 0.0
  %2338 = vmatprep.subr.mxu0 0.0
  %2339 = vmatpush1.msra.mxu0 0.0
  %2340 = vmatprep.mubr.f32.mxu0 0.0
  %2341 = vmatmul.mubr.f32.gmra.mrb[0].mxu0 %v2272
  %v2342 = vpop.f32.mrb[0].mxu0
  %v2343 = vadd.f32 0.0, %v2342
  %v2344 = vpop.f32.mrb[0].mxu0
  %2345 = vdwg.mxu0
  %2346 = vrot.lane.b32.xlu0 %v348, 110
  %v2347 = vpop.permute.xlu0 %2346
  %2348 = vrot.lane.b32.xlu0 %v260, 110
  %v2349 = vpop.permute.xlu0 %2348
  %v2350 = vsel %vm350, %v2347, 0
  %v2352 = vsel %vm350, %v2349, 0
  %2354 = vmatprep.subr.mxu0 0.0
  %2355 = vmatpush1.xpose.msra.mxu0 %v2352
  %2356 = vmatprep.subr.mxu0 0.0
  %2357 = vmatpush1.xpose.msra.mxu0 0.0
  %2358 = vmatprep.subr.mxu0 0.0
  %2359 = vmatpush1.xpose.msra.mxu0 0.0
  %2360 = vmatprep.subr.mxu0 0.0
  %2361 = vmatpush1.xpose.msra.mxu0 0.0
  %2362 = vmatprep.subr.mxu0 0.0
  %2363 = vmatpush1.xpose.msra.mxu0 0.0
  %2364 = vmatprep.subr.mxu0 0.0
  %2365 = vmatpush1.xpose.msra.mxu0 0.0
  %2366 = vmatprep.subr.mxu0 0.0
  %2367 = vmatpush1.xpose.msra.mxu0 0.0
  %2368 = vmatprep.subr.mxu0 0.0
  %2369 = vmatpush1.xpose.msra.mxu0 0.0
  %2370 = vmatprep.subr.mxu0 0.0
  %2371 = vmatpush1.xpose.msra.mxu0 0.0
  %2372 = vmatprep.subr.mxu0 0.0
  %2373 = vmatpush1.xpose.msra.mxu0 0.0
  %2374 = vmatprep.subr.mxu0 0.0
  %2375 = vmatpush1.xpose.msra.mxu0 0.0
  %2376 = vmatprep.subr.mxu0 0.0
  %2377 = vmatpush1.xpose.msra.mxu0 0.0
  %2378 = vmatprep.subr.mxu0 0.0
  %2379 = vmatpush1.xpose.msra.mxu0 0.0
  %2380 = vmatprep.subr.mxu0 0.0
  %2381 = vmatpush1.xpose.msra.mxu0 0.0
  %2382 = vmatprep.subr.mxu0 0.0
  %2383 = vmatpush1.xpose.msra.mxu0 0.0
  %2384 = vmatprep.subr.mxu0 0.0
  %2385 = vmatpush1.xpose.msra.mxu0 0.0
  %2386 = vmatprep.subr.mxu0 0.0
  %2387 = vmatpush1.xpose.msra.mxu0 0.0
  %2388 = vmatprep.subr.mxu0 0.0
  %2389 = vmatpush1.xpose.msra.mxu0 0.0
  %2390 = vmatprep.subr.mxu0 0.0
  %2391 = vmatpush1.xpose.msra.mxu0 0.0
  %2392 = vmatprep.subr.mxu0 0.0
  %2393 = vmatpush1.xpose.msra.mxu0 0.0
  %2394 = vmatprep.subr.mxu0 0.0
  %2395 = vmatpush1.xpose.msra.mxu0 0.0
  %2396 = vmatprep.subr.mxu0 0.0
  %2397 = vmatpush1.xpose.msra.mxu0 0.0
  %2398 = vmatprep.subr.mxu0 0.0
  %2399 = vmatpush1.xpose.msra.mxu0 0.0
  %2400 = vmatprep.subr.mxu0 0.0
  %2401 = vmatpush1.xpose.msra.mxu0 0.0
  %2402 = vmatprep.subr.mxu0 0.0
  %2403 = vmatpush1.xpose.msra.mxu0 0.0
  %2404 = vmatprep.subr.mxu0 0.0
  %2405 = vmatpush1.xpose.msra.mxu0 0.0
  %2406 = vmatprep.subr.mxu0 0.0
  %2407 = vmatpush1.xpose.msra.mxu0 0.0
  %2408 = vmatprep.subr.mxu0 0.0
  %2409 = vmatpush1.xpose.msra.mxu0 0.0
  %2410 = vmatprep.subr.mxu0 0.0
  %2411 = vmatpush1.xpose.msra.mxu0 0.0
  %2412 = vmatprep.subr.mxu0 0.0
  %2413 = vmatpush1.xpose.msra.mxu0 0.0
  %2414 = vmatprep.subr.mxu0 0.0
  %2415 = vmatpush1.xpose.msra.mxu0 0.0
  %2416 = vmatprep.subr.mxu0 0.0
  %2417 = vmatpush1.xpose.msra.mxu0 0.0
  %2418 = vmatprep.mubr.f32.mxu0 0.0
  %2419 = vmatmul.mubr.f32.gmra.mrb[0].mxu0 %v2350
  %v2420 = vpop.f32.mrb[0].mxu0
  %v2421 = vadd.f32 0.0, %v2420
  %v2422 = vpop.f32.mrb[0].mxu0
  %2423 = vdwg.mxu0
  %2424 = vrot.lane.b32.xlu0 %v349, 110
  %v2425 = vpop.permute.xlu0 %2424
  %2426 = vrot.lane.b32.xlu0 %v264, 110
  %v2427 = vpop.permute.xlu0 %2426
  %v2428 = vsel %vm350, %v2425, 0
  %v2430 = vsel %vm350, %v2427, 0
  %2432 = vmatprep.subr.mxu0 0.0
  %2433 = vmatpush1.xpose.msra.mxu0 %v2430
  %2434 = vmatprep.subr.mxu0 0.0
  %2435 = vmatpush1.xpose.msra.mxu0 0.0
  %2436 = vmatprep.subr.mxu0 0.0
  %2437 = vmatpush1.xpose.msra.mxu0 0.0
  %2438 = vmatprep.subr.mxu0 0.0
  %2439 = vmatpush1.xpose.msra.mxu0 0.0
  %2440 = vmatprep.subr.mxu0 0.0
  %2441 = vmatpush1.xpose.msra.mxu0 0.0
  %2442 = vmatprep.subr.mxu0 0.0
  %2443 = vmatpush1.xpose.msra.mxu0 0.0
  %2444 = vmatprep.subr.mxu0 0.0
  %2445 = vmatpush1.xpose.msra.mxu0 0.0
  %2446 = vmatprep.subr.mxu0 0.0
  %2447 = vmatpush1.xpose.msra.mxu0 0.0
  %2448 = vmatprep.subr.mxu0 0.0
  %2449 = vmatpush1.xpose.msra.mxu0 0.0
  %2450 = vmatprep.subr.mxu0 0.0
  %2451 = vmatpush1.xpose.msra.mxu0 0.0
  %2452 = vmatprep.subr.mxu0 0.0
  %2453 = vmatpush1.xpose.msra.mxu0 0.0
  %2454 = vmatprep.subr.mxu0 0.0
  %2455 = vmatpush1.xpose.msra.mxu0 0.0
  %2456 = vmatprep.subr.mxu0 0.0
  %2457 = vmatpush1.xpose.msra.mxu0 0.0
  %2458 = vmatprep.subr.mxu0 0.0
  %2459 = vmatpush1.xpose.msra.mxu0 0.0
  %2460 = vmatprep.subr.mxu0 0.0
  %2461 = vmatpush1.xpose.msra.mxu0 0.0
  %2462 = vmatprep.subr.mxu0 0.0
  %2463 = vmatpush1.xpose.msra.mxu0 0.0
  %2464 = vmatprep.subr.mxu0 0.0
  %2465 = vmatpush1.xpose.msra.mxu0 0.0
  %2466 = vmatprep.subr.mxu0 0.0
  %2467 = vmatpush1.xpose.msra.mxu0 0.0
  %2468 = vmatprep.subr.mxu0 0.0
  %2469 = vmatpush1.xpose.msra.mxu0 0.0
  %2470 = vmatprep.subr.mxu0 0.0
  %2471 = vmatpush1.xpose.msra.mxu0 0.0
  %2472 = vmatprep.subr.mxu0 0.0
  %2473 = vmatpush1.xpose.msra.mxu0 0.0
  %2474 = vmatprep.subr.mxu0 0.0
  %2475 = vmatpush1.xpose.msra.mxu0 0.0
  %2476 = vmatprep.subr.mxu0 0.0
  %2477 = vmatpush1.xpose.msra.mxu0 0.0
  %2478 = vmatprep.subr.mxu0 0.0
  %2479 = vmatpush1.xpose.msra.mxu0 0.0
  %2480 = vmatprep.subr.mxu0 0.0
  %2481 = vmatpush1.xpose.msra.mxu0 0.0
  %2482 = vmatprep.subr.mxu0 0.0
  %2483 = vmatpush1.xpose.msra.mxu0 0.0
  %2484 = vmatprep.subr.mxu0 0.0
  %2485 = vmatpush1.xpose.msra.mxu0 0.0
  %2486 = vmatprep.subr.mxu0 0.0
  %2487 = vmatpush1.xpose.msra.mxu0 0.0
  %2488 = vmatprep.subr.mxu0 0.0
  %2489 = vmatpush1.xpose.msra.mxu0 0.0
  %2490 = vmatprep.subr.mxu0 0.0
  %2491 = vmatpush1.xpose.msra.mxu0 0.0
  %2492 = vmatprep.subr.mxu0 0.0
  %2493 = vmatpush1.xpose.msra.mxu0 0.0
  %2494 = vmatprep.subr.mxu0 0.0
  %2495 = vmatpush1.xpose.msra.mxu0 0.0
  %2496 = vmatprep.mubr.f32.mxu0 0.0
  %2497 = vmatmul.mubr.f32.gmra.mrb[0].mxu0 %v2428
  %v2498 = vpop.f32.mrb[0].mxu0
  %v2499 = vadd.f32 0.0, %v2498
  %v2500 = vpop.f32.mrb[0].mxu0
  %2501 = vdwg.mxu0
  %v2502 = vsub.f32 %v2421, %v79
  %v2503 = vsub.f32 %v2499, %v79
  %v2504 = vsel %vm503, %v2502, -inf
  %2505 = vmax.xlane.f32.xlu0 %v2504
  %v2506 = vpop.xlane.xlu0 %2505
  %v2507 = vsel %vm503, %v2503, -inf
  %2508 = vmax.xlane.f32.xlu0 %v2507
  %v2509 = vpop.xlane.xlu0 %2508
  %v2510 = vsub.f32 %v2502, %v2506
  %v2511 = vsub.f32 %v2503, %v2509
  %v2512 = vmul.f32 %v2510, 1.442695
  %v2513 = vpow.pop %v2512
  %v2514 = vmul.f32 %v2511, 1.442695
  %v2515 = vpow.pop %v2514
  %v2516 = vsel %vm503, %v2513, 0.0
  %2517 = vadd.xlane.f32.xlu0 %v2516
  %v2518 = vpop.xlane.xlu0 %2517
  %v2519 = vsel %vm503, %v2515, 0.0
  %2520 = vadd.xlane.f32.xlu0 %v2519
  %v2521 = vpop.xlane.xlu0 %2520
  %v2522 = vrcp.pop %v2518
  %v2523 = vmul.f32 %v2513, %v2522
  %v2524 = vrcp.pop %v2521
  %v2525 = vmul.f32 %v2515, %v2524
  %2526 = vrot.lane.b32.xlu0 %v343, 110
  %v2527 = vpop.permute.xlu0 %2526
  %v2529 = vsel %vm186, %v2523, 0
  %v2531 = vsel %vm189, %v2527, 0
  %2533 = vmatprep.subr.mxu0 0.0
  %2534 = vmatpush1.msra.mxu0 %v2531
  %2535 = vmatprep.subr.mxu0 0.0
  %2536 = vmatpush1.msra.mxu0 0.0
  %2537 = vmatprep.subr.mxu0 0.0
  %2538 = vmatpush1.msra.mxu0 0.0
  %2539 = vmatprep.subr.mxu0 0.0
  %2540 = vmatpush1.msra.mxu0 0.0
  %2541 = vmatprep.subr.mxu0 0.0
  %2542 = vmatpush1.msra.mxu0 0.0
  %2543 = vmatprep.subr.mxu0 0.0
  %2544 = vmatpush1.msra.mxu0 0.0
  %2545 = vmatprep.subr.mxu0 0.0
  %2546 = vmatpush1.msra.mxu0 0.0
  %2547 = vmatprep.subr.mxu0 0.0
  %2548 = vmatpush1.msra.mxu0 0.0
  %2549 = vmatprep.subr.mxu0 0.0
  %2550 = vmatpush1.msra.mxu0 0.0
  %2551 = vmatprep.subr.mxu0 0.0
  %2552 = vmatpush1.msra.mxu0 0.0
  %2553 = vmatprep.subr.mxu0 0.0
  %2554 = vmatpush1.msra.mxu0 0.0
  %2555 = vmatprep.subr.mxu0 0.0
  %2556 = vmatpush1.msra.mxu0 0.0
  %2557 = vmatprep.subr.mxu0 0.0
  %2558 = vmatpush1.msra.mxu0 0.0
  %2559 = vmatprep.subr.mxu0 0.0
  %2560 = vmatpush1.msra.mxu0 0.0
  %2561 = vmatprep.subr.mxu0 0.0
  %2562 = vmatpush1.msra.mxu0 0.0
  %2563 = vmatprep.subr.mxu0 0.0
  %2564 = vmatpush1.msra.mxu0 0.0
  %2565 = vmatprep.subr.mxu0 0.0
  %2566 = vmatpush1.msra.mxu0 0.0
  %2567 = vmatprep.subr.mxu0 0.0
  %2568 = vmatpush1.msra.mxu0 0.0
  %2569 = vmatprep.subr.mxu0 0.0
  %2570 = vmatpush1.msra.mxu0 0.0
  %2571 = vmatprep.subr.mxu0 0.0
  %2572 = vmatpush1.msra.mxu0 0.0
  %2573 = vmatprep.subr.mxu0 0.0
  %2574 = vmatpush1.msra.mxu0 0.0
  %2575 = vmatprep.subr.mxu0 0.0
  %2576 = vmatpush1.msra.mxu0 0.0
  %2577 = vmatprep.subr.mxu0 0.0
  %2578 = vmatpush1.msra.mxu0 0.0
  %2579 = vmatprep.subr.mxu0 0.0
  %2580 = vmatpush1.msra.mxu0 0.0
  %2581 = vmatprep.subr.mxu0 0.0
  %2582 = vmatpush1.msra.mxu0 0.0
  %2583 = vmatprep.subr.mxu0 0.0
  %2584 = vmatpush1.msra.mxu0 0.0
  %2585 = vmatprep.subr.mxu0 0.0
  %2586 = vmatpush1.msra.mxu0 0.0
  %2587 = vmatprep.subr.mxu0 0.0
  %2588 = vmatpush1.msra.mxu0 0.0
  %2589 = vmatprep.subr.mxu0 0.0
  %2590 = vmatpush1.msra.mxu0 0.0
  %2591 = vmatprep.subr.mxu0 0.0
  %2592 = vmatpush1.msra.mxu0 0.0
  %2593 = vmatprep.subr.mxu0 0.0
  %2594 = vmatpush1.msra.mxu0 0.0
  %2595 = vmatprep.subr.mxu0 0.0
  %2596 = vmatpush1.msra.mxu0 0.0
  %2597 = vmatprep.mubr.f32.mxu0 0.0
  %2598 = vmatmul.mubr.f32.gmra.mrb[0].mxu0 %v2529
  %v2599 = vpop.f32.mrb[0].mxu0
  %v2600 = vadd.f32 0.0, %v2599
  %v2601 = vpop.f32.mrb[0].mxu0
  %2602 = vdwg.mxu0
  %2603 = vrot.lane.b32.xlu0 %v347, 110
  %v2604 = vpop.permute.xlu0 %2603
  %v2606 = vsel %vm186, %v2525, 0
  %v2608 = vsel %vm189, %v2604, 0
  %2610 = vmatprep.subr.mxu0 0.0
  %2611 = vmatpush1.msra.mxu0 %v2608
  %2612 = vmatprep.subr.mxu0 0.0
  %2613 = vmatpush1.msra.mxu0 0.0
  %2614 = vmatprep.subr.mxu0 0.0
  %2615 = vmatpush1.msra.mxu0 0.0
  %2616 = vmatprep.subr.mxu0 0.0
  %2617 = vmatpush1.msra.mxu0 0.0
  %2618 = vmatprep.subr.mxu0 0.0
  %2619 = vmatpush1.msra.mxu0 0.0
  %2620 = vmatprep.subr.mxu0 0.0
  %2621 = vmatpush1.msra.mxu0 0.0
  %2622 = vmatprep.subr.mxu0 0.0
  %2623 = vmatpush1.msra.mxu0 0.0
  %2624 = vmatprep.subr.mxu0 0.0
  %2625 = vmatpush1.msra.mxu0 0.0
  %2626 = vmatprep.subr.mxu0 0.0
  %2627 = vmatpush1.msra.mxu0 0.0
  %2628 = vmatprep.subr.mxu0 0.0
  %2629 = vmatpush1.msra.mxu0 0.0
  %2630 = vmatprep.subr.mxu0 0.0
  %2631 = vmatpush1.msra.mxu0 0.0
  %2632 = vmatprep.subr.mxu0 0.0
  %2633 = vmatpush1.msra.mxu0 0.0
  %2634 = vmatprep.subr.mxu0 0.0
  %2635 = vmatpush1.msra.mxu0 0.0
  %2636 = vmatprep.subr.mxu0 0.0
  %2637 = vmatpush1.msra.mxu0 0.0
  %2638 = vmatprep.subr.mxu0 0.0
  %2639 = vmatpush1.msra.mxu0 0.0
  %2640 = vmatprep.subr.mxu0 0.0
  %2641 = vmatpush1.msra.mxu0 0.0
  %2642 = vmatprep.subr.mxu0 0.0
  %2643 = vmatpush1.msra.mxu0 0.0
  %2644 = vmatprep.subr.mxu0 0.0
  %2645 = vmatpush1.msra.mxu0 0.0
  %2646 = vmatprep.subr.mxu0 0.0
  %2647 = vmatpush1.msra.mxu0 0.0
  %2648 = vmatprep.subr.mxu0 0.0
  %2649 = vmatpush1.msra.mxu0 0.0
  %2650 = vmatprep.subr.mxu0 0.0
  %2651 = vmatpush1.msra.mxu0 0.0
  %2652 = vmatprep.subr.mxu0 0.0
  %2653 = vmatpush1.msra.mxu0 0.0
  %2654 = vmatprep.subr.mxu0 0.0
  %2655 = vmatpush1.msra.mxu0 0.0
  %2656 = vmatprep.subr.mxu0 0.0
  %2657 = vmatpush1.msra.mxu0 0.0
  %2658 = vmatprep.subr.mxu0 0.0
  %2659 = vmatpush1.msra.mxu0 0.0
  %2660 = vmatprep.subr.mxu0 0.0
  %2661 = vmatpush1.msra.mxu0 0.0
  %2662 = vmatprep.subr.mxu0 0.0
  %2663 = vmatpush1.msra.mxu0 0.0
  %2664 = vmatprep.subr.mxu0 0.0
  %2665 = vmatpush1.msra.mxu0 0.0
  %2666 = vmatprep.subr.mxu0 0.0
  %2667 = vmatpush1.msra.mxu0 0.0
  %2668 = vmatprep.subr.mxu0 0.0
  %2669 = vmatpush1.msra.mxu0 0.0
  %2670 = vmatprep.subr.mxu0 0.0
  %2671 = vmatpush1.msra.mxu0 0.0
  %2672 = vmatprep.subr.mxu0 0.0
  %2673 = vmatpush1.msra.mxu0 0.0
  %2674 = vmatprep.mubr.f32.mxu0 0.0
  %2675 = vmatmul.mubr.f32.gmra.mrb[0].mxu0 %v2606
  %v2676 = vpop.f32.mrb[0].mxu0
  %v2677 = vadd.f32 0.0, %v2676
  %v2678 = vpop.f32.mrb[0].mxu0
  %2679 = vdwg.mxu0
  %2680 = vrot.lane.b32.xlu0 %v348, 107
  %v2681 = vpop.permute.xlu0 %2680
  %2682 = vrot.lane.b32.xlu0 %v260, 107
  %v2683 = vpop.permute.xlu0 %2682
  %v2684 = vsel %vm350, %v2681, 0
  %v2686 = vsel %vm350, %v2683, 0
  %2688 = vmatprep.subr.mxu0 0.0
  %2689 = vmatpush1.xpose.msra.mxu0 %v2686
  %2690 = vmatprep.subr.mxu0 0.0
  %2691 = vmatpush1.xpose.msra.mxu0 0.0
  %2692 = vmatprep.subr.mxu0 0.0
  %2693 = vmatpush1.xpose.msra.mxu0 0.0
  %2694 = vmatprep.subr.mxu0 0.0
  %2695 = vmatpush1.xpose.msra.mxu0 0.0
  %2696 = vmatprep.subr.mxu0 0.0
  %2697 = vmatpush1.xpose.msra.mxu0 0.0
  %2698 = vmatprep.subr.mxu0 0.0
  %2699 = vmatpush1.xpose.msra.mxu0 0.0
  %2700 = vmatprep.subr.mxu0 0.0
  %2701 = vmatpush1.xpose.msra.mxu0 0.0
  %2702 = vmatprep.subr.mxu0 0.0
  %2703 = vmatpush1.xpose.msra.mxu0 0.0
  %2704 = vmatprep.subr.mxu0 0.0
  %2705 = vmatpush1.xpose.msra.mxu0 0.0
  %2706 = vmatprep.subr.mxu0 0.0
  %2707 = vmatpush1.xpose.msra.mxu0 0.0
  %2708 = vmatprep.subr.mxu0 0.0
  %2709 = vmatpush1.xpose.msra.mxu0 0.0
  %2710 = vmatprep.subr.mxu0 0.0
  %2711 = vmatpush1.xpose.msra.mxu0 0.0
  %2712 = vmatprep.subr.mxu0 0.0
  %2713 = vmatpush1.xpose.msra.mxu0 0.0
  %2714 = vmatprep.subr.mxu0 0.0
  %2715 = vmatpush1.xpose.msra.mxu0 0.0
  %2716 = vmatprep.subr.mxu0 0.0
  %2717 = vmatpush1.xpose.msra.mxu0 0.0
  %2718 = vmatprep.subr.mxu0 0.0
  %2719 = vmatpush1.xpose.msra.mxu0 0.0
  %2720 = vmatprep.subr.mxu0 0.0
  %2721 = vmatpush1.xpose.msra.mxu0 0.0
  %2722 = vmatprep.subr.mxu0 0.0
  %2723 = vmatpush1.xpose.msra.mxu0 0.0
  %2724 = vmatprep.subr.mxu0 0.0
  %2725 = vmatpush1.xpose.msra.mxu0 0.0
  %2726 = vmatprep.subr.mxu0 0.0
  %2727 = vmatpush1.xpose.msra.mxu0 0.0
  %2728 = vmatprep.subr.mxu0 0.0
  %2729 = vmatpush1.xpose.msra.mxu0 0.0
  %2730 = vmatprep.subr.mxu0 0.0
  %2731 = vmatpush1.xpose.msra.mxu0 0.0
  %2732 = vmatprep.subr.mxu0 0.0
  %2733 = vmatpush1.xpose.msra.mxu0 0.0
  %2734 = vmatprep.subr.mxu0 0.0
  %2735 = vmatpush1.xpose.msra.mxu0 0.0
  %2736 = vmatprep.subr.mxu0 0.0
  %2737 = vmatpush1.xpose.msra.mxu0 0.0
  %2738 = vmatprep.subr.mxu0 0.0
  %2739 = vmatpush1.xpose.msra.mxu0 0.0
  %2740 = vmatprep.subr.mxu0 0.0
  %2741 = vmatpush1.xpose.msra.mxu0 0.0
  %2742 = vmatprep.subr.mxu0 0.0
  %2743 = vmatpush1.xpose.msra.mxu0 0.0
  %2744 = vmatprep.subr.mxu0 0.0
  %2745 = vmatpush1.xpose.msra.mxu0 0.0
  %2746 = vmatprep.subr.mxu0 0.0
  %2747 = vmatpush1.xpose.msra.mxu0 0.0
  %2748 = vmatprep.subr.mxu0 0.0
  %2749 = vmatpush1.xpose.msra.mxu0 0.0
  %2750 = vmatprep.subr.mxu0 0.0
  %2751 = vmatpush1.xpose.msra.mxu0 0.0
  %2752 = vmatprep.mubr.f32.mxu0 0.0
  %2753 = vmatmul.mubr.f32.gmra.mrb[0].mxu0 %v2684
  %v2754 = vpop.f32.mrb[0].mxu0
  %v2755 = vadd.f32 0.0, %v2754
  %v2756 = vpop.f32.mrb[0].mxu0
  %2757 = vdwg.mxu0
  %2758 = vrot.lane.b32.xlu0 %v349, 107
  %v2759 = vpop.permute.xlu0 %2758
  %2760 = vrot.lane.b32.xlu0 %v264, 107
  %v2761 = vpop.permute.xlu0 %2760
  %v2762 = vsel %vm350, %v2759, 0
  %v2764 = vsel %vm350, %v2761, 0
  %2766 = vmatprep.subr.mxu0 0.0
  %2767 = vmatpush1.xpose.msra.mxu0 %v2764
  %2768 = vmatprep.subr.mxu0 0.0
  %2769 = vmatpush1.xpose.msra.mxu0 0.0
  %2770 = vmatprep.subr.mxu0 0.0
  %2771 = vmatpush1.xpose.msra.mxu0 0.0
  %2772 = vmatprep.subr.mxu0 0.0
  %2773 = vmatpush1.xpose.msra.mxu0 0.0
  %2774 = vmatprep.subr.mxu0 0.0
  %2775 = vmatpush1.xpose.msra.mxu0 0.0
  %2776 = vmatprep.subr.mxu0 0.0
  %2777 = vmatpush1.xpose.msra.mxu0 0.0
  %2778 = vmatprep.subr.mxu0 0.0
  %2779 = vmatpush1.xpose.msra.mxu0 0.0
  %2780 = vmatprep.subr.mxu0 0.0
  %2781 = vmatpush1.xpose.msra.mxu0 0.0
  %2782 = vmatprep.subr.mxu0 0.0
  %2783 = vmatpush1.xpose.msra.mxu0 0.0
  %2784 = vmatprep.subr.mxu0 0.0
  %2785 = vmatpush1.xpose.msra.mxu0 0.0
  %2786 = vmatprep.subr.mxu0 0.0
  %2787 = vmatpush1.xpose.msra.mxu0 0.0
  %2788 = vmatprep.subr.mxu0 0.0
  %2789 = vmatpush1.xpose.msra.mxu0 0.0
  %2790 = vmatprep.subr.mxu0 0.0
  %2791 = vmatpush1.xpose.msra.mxu0 0.0
  %2792 = vmatprep.subr.mxu0 0.0
  %2793 = vmatpush1.xpose.msra.mxu0 0.0
  %2794 = vmatprep.subr.mxu0 0.0
  %2795 = vmatpush1.xpose.msra.mxu0 0.0
  %2796 = vmatprep.subr.mxu0 0.0
  %2797 = vmatpush1.xpose.msra.mxu0 0.0
  %2798 = vmatprep.subr.mxu0 0.0
  %2799 = vmatpush1.xpose.msra.mxu0 0.0
  %2800 = vmatprep.subr.mxu0 0.0
  %2801 = vmatpush1.xpose.msra.mxu0 0.0
  %2802 = vmatprep.subr.mxu0 0.0
  %2803 = vmatpush1.xpose.msra.mxu0 0.0
  %2804 = vmatprep.subr.mxu0 0.0
  %2805 = vmatpush1.xpose.msra.mxu0 0.0
  %2806 = vmatprep.subr.mxu0 0.0
  %2807 = vmatpush1.xpose.msra.mxu0 0.0
  %2808 = vmatprep.subr.mxu0 0.0
  %2809 = vmatpush1.xpose.msra.mxu0 0.0
  %2810 = vmatprep.subr.mxu0 0.0
  %2811 = vmatpush1.xpose.msra.mxu0 0.0
  %2812 = vmatprep.subr.mxu0 0.0
  %2813 = vmatpush1.xpose.msra.mxu0 0.0
  %2814 = vmatprep.subr.mxu0 0.0
  %2815 = vmatpush1.xpose.msra.mxu0 0.0
  %2816 = vmatprep.subr.mxu0 0.0
  %2817 = vmatpush1.xpose.msra.mxu0 0.0
  %2818 = vmatprep.subr.mxu0 0.0
  %2819 = vmatpush1.xpose.msra.mxu0 0.0
  %2820 = vmatprep.subr.mxu0 0.0
  %2821 = vmatpush1.xpose.msra.mxu0 0.0
  %2822 = vmatprep.subr.mxu0 0.0
  %2823 = vmatpush1.xpose.msra.mxu0 0.0
  %2824 = vmatprep.subr.mxu0 0.0
  %2825 = vmatpush1.xpose.msra.mxu0 0.0
  %2826 = vmatprep.subr.mxu0 0.0
  %2827 = vmatpush1.xpose.msra.mxu0 0.0
  %2828 = vmatprep.subr.mxu0 0.0
  %2829 = vmatpush1.xpose.msra.mxu0 0.0
  %2830 = vmatprep.mubr.f32.mxu0 0.0
  %2831 = vmatmul.mubr.f32.gmra.mrb[0].mxu0 %v2762
  %v2832 = vpop.f32.mrb[0].mxu0
  %v2833 = vadd.f32 0.0, %v2832
  %v2834 = vpop.f32.mrb[0].mxu0
  %2835 = vdwg.mxu0
  %v2836 = vsub.f32 %v2755, %v79
  %v2837 = vsub.f32 %v2833, %v79
  %v2838 = vsel %vm503, %v2836, -inf
  %2839 = vmax.xlane.f32.xlu0 %v2838
  %v2840 = vpop.xlane.xlu0 %2839
  %v2841 = vsel %vm503, %v2837, -inf
  %2842 = vmax.xlane.f32.xlu0 %v2841
  %v2843 = vpop.xlane.xlu0 %2842
  %v2844 = vsub.f32 %v2836, %v2840
  %v2845 = vsub.f32 %v2837, %v2843
  %v2846 = vmul.f32 %v2844, 1.442695
  %v2847 = vpow.pop %v2846
  %v2848 = vmul.f32 %v2845, 1.442695
  %v2849 = vpow.pop %v2848
  %v2850 = vsel %vm503, %v2847, 0.0
  %2851 = vadd.xlane.f32.xlu0 %v2850
  %v2852 = vpop.xlane.xlu0 %2851
  %v2853 = vsel %vm503, %v2849, 0.0
  %2854 = vadd.xlane.f32.xlu0 %v2853
  %v2855 = vpop.xlane.xlu0 %2854
  %v2856 = vrcp.pop %v2852
  %v2857 = vmul.f32 %v2847, %v2856
  %v2858 = vrcp.pop %v2855
  %v2859 = vmul.f32 %v2849, %v2858
  %2860 = vrot.lane.b32.xlu0 %v343, 107
  %v2861 = vpop.permute.xlu0 %2860
  %v2863 = vsel %vm186, %v2857, 0
  %v2865 = vsel %vm189, %v2861, 0
  %2867 = vmatprep.subr.mxu0 0.0
  %2868 = vmatpush1.msra.mxu0 %v2865
  %2869 = vmatprep.subr.mxu0 0.0
  %2870 = vmatpush1.msra.mxu0 0.0
  %2871 = vmatprep.subr.mxu0 0.0
  %2872 = vmatpush1.msra.mxu0 0.0
  %2873 = vmatprep.subr.mxu0 0.0
  %2874 = vmatpush1.msra.mxu0 0.0
  %2875 = vmatprep.subr.mxu0 0.0
  %2876 = vmatpush1.msra.mxu0 0.0
  %2877 = vmatprep.subr.mxu0 0.0
  %2878 = vmatpush1.msra.mxu0 0.0
  %2879 = vmatprep.subr.mxu0 0.0
  %2880 = vmatpush1.msra.mxu0 0.0
  %2881 = vmatprep.subr.mxu0 0.0
  %2882 = vmatpush1.msra.mxu0 0.0
  %2883 = vmatprep.subr.mxu0 0.0
  %2884 = vmatpush1.msra.mxu0 0.0
  %2885 = vmatprep.subr.mxu0 0.0
  %2886 = vmatpush1.msra.mxu0 0.0
  %2887 = vmatprep.subr.mxu0 0.0
  %2888 = vmatpush1.msra.mxu0 0.0
  %2889 = vmatprep.subr.mxu0 0.0
  %2890 = vmatpush1.msra.mxu0 0.0
  %2891 = vmatprep.subr.mxu0 0.0
  %2892 = vmatpush1.msra.mxu0 0.0
  %2893 = vmatprep.subr.mxu0 0.0
  %2894 = vmatpush1.msra.mxu0 0.0
  %2895 = vmatprep.subr.mxu0 0.0
  %2896 = vmatpush1.msra.mxu0 0.0
  %2897 = vmatprep.subr.mxu0 0.0
  %2898 = vmatpush1.msra.mxu0 0.0
  %2899 = vmatprep.subr.mxu0 0.0
  %2900 = vmatpush1.msra.mxu0 0.0
  %2901 = vmatprep.subr.mxu0 0.0
  %2902 = vmatpush1.msra.mxu0 0.0
  %2903 = vmatprep.subr.mxu0 0.0
  %2904 = vmatpush1.msra.mxu0 0.0
  %2905 = vmatprep.subr.mxu0 0.0
  %2906 = vmatpush1.msra.mxu0 0.0
  %2907 = vmatprep.subr.mxu0 0.0
  %2908 = vmatpush1.msra.mxu0 0.0
  %2909 = vmatprep.subr.mxu0 0.0
  %2910 = vmatpush1.msra.mxu0 0.0
  %2911 = vmatprep.subr.mxu0 0.0
  %2912 = vmatpush1.msra.mxu0 0.0
  %2913 = vmatprep.subr.mxu0 0.0
  %2914 = vmatpush1.msra.mxu0 0.0
  %2915 = vmatprep.subr.mxu0 0.0
  %2916 = vmatpush1.msra.mxu0 0.0
  %2917 = vmatprep.subr.mxu0 0.0
  %2918 = vmatpush1.msra.mxu0 0.0
  %2919 = vmatprep.subr.mxu0 0.0
  %2920 = vmatpush1.msra.mxu0 0.0
  %2921 = vmatprep.subr.mxu0 0.0
  %2922 = vmatpush1.msra.mxu0 0.0
  %2923 = vmatprep.subr.mxu0 0.0
  %2924 = vmatpush1.msra.mxu0 0.0
  %2925 = vmatprep.subr.mxu0 0.0
  %2926 = vmatpush1.msra.mxu0 0.0
  %2927 = vmatprep.subr.mxu0 0.0
  %2928 = vmatpush1.msra.mxu0 0.0
  %2929 = vmatprep.subr.mxu0 0.0
  %2930 = vmatpush1.msra.mxu0 0.0
  %2931 = vmatprep.mubr.f32.mxu0 0.0
  %2932 = vmatmul.mubr.f32.gmra.mrb[0].mxu0 %v2863
  %v2933 = vpop.f32.mrb[0].mxu0
  %v2934 = vadd.f32 0.0, %v2933
  %v2935 = vpop.f32.mrb[0].mxu0
  %2936 = vdwg.mxu0
  %2937 = vrot.lane.b32.xlu0 %v347, 107
  %v2938 = vpop.permute.xlu0 %2937
  %v2940 = vsel %vm186, %v2859, 0
  %v2942 = vsel %vm189, %v2938, 0
  %2944 = vmatprep.subr.mxu0 0.0
  %2945 = vmatpush1.msra.mxu0 %v2942
  %2946 = vmatprep.subr.mxu0 0.0
  %2947 = vmatpush1.msra.mxu0 0.0
  %2948 = vmatprep.subr.mxu0 0.0
  %2949 = vmatpush1.msra.mxu0 0.0
  %2950 = vmatprep.subr.mxu0 0.0
  %2951 = vmatpush1.msra.mxu0 0.0
  %2952 = vmatprep.subr.mxu0 0.0
  %2953 = vmatpush1.msra.mxu0 0.0
  %2954 = vmatprep.subr.mxu0 0.0
  %2955 = vmatpush1.msra.mxu0 0.0
  %2956 = vmatprep.subr.mxu0 0.0
  %2957 = vmatpush1.msra.mxu0 0.0
  %2958 = vmatprep.subr.mxu0 0.0
  %2959 = vmatpush1.msra.mxu0 0.0
  %2960 = vmatprep.subr.mxu0 0.0
  %2961 = vmatpush1.msra.mxu0 0.0
  %2962 = vmatprep.subr.mxu0 0.0
  %2963 = vmatpush1.msra.mxu0 0.0
  %2964 = vmatprep.subr.mxu0 0.0
  %2965 = vmatpush1.msra.mxu0 0.0
  %2966 = vmatprep.subr.mxu0 0.0
  %2967 = vmatpush1.msra.mxu0 0.0
  %2968 = vmatprep.subr.mxu0 0.0
  %2969 = vmatpush1.msra.mxu0 0.0
  %2970 = vmatprep.subr.mxu0 0.0
  %2971 = vmatpush1.msra.mxu0 0.0
  %2972 = vmatprep.subr.mxu0 0.0
  %2973 = vmatpush1.msra.mxu0 0.0
  %2974 = vmatprep.subr.mxu0 0.0
  %2975 = vmatpush1.msra.mxu0 0.0
  %2976 = vmatprep.subr.mxu0 0.0
  %2977 = vmatpush1.msra.mxu0 0.0
  %2978 = vmatprep.subr.mxu0 0.0
  %2979 = vmatpush1.msra.mxu0 0.0
  %2980 = vmatprep.subr.mxu0 0.0
  %2981 = vmatpush1.msra.mxu0 0.0
  %2982 = vmatprep.subr.mxu0 0.0
  %2983 = vmatpush1.msra.mxu0 0.0
  %2984 = vmatprep.subr.mxu0 0.0
  %2985 = vmatpush1.msra.mxu0 0.0
  %2986 = vmatprep.subr.mxu0 0.0
  %2987 = vmatpush1.msra.mxu0 0.0
  %2988 = vmatprep.subr.mxu0 0.0
  %2989 = vmatpush1.msra.mxu0 0.0
  %2990 = vmatprep.subr.mxu0 0.0
  %2991 = vmatpush1.msra.mxu0 0.0
  %2992 = vmatprep.subr.mxu0 0.0
  %2993 = vmatpush1.msra.mxu0 0.0
  %2994 = vmatprep.subr.mxu0 0.0
  %2995 = vmatpush1.msra.mxu0 0.0
  %2996 = vmatprep.subr.mxu0 0.0
  %2997 = vmatpush1.msra.mxu0 0.0
  %2998 = vmatprep.subr.mxu0 0.0
  %2999 = vmatpush1.msra.mxu0 0.0
  %3000 = vmatprep.subr.mxu0 0.0
  %3001 = vmatpush1.msra.mxu0 0.0
  %3002 = vmatprep.subr.mxu0 0.0
  %3003 = vmatpush1.msra.mxu0 0.0
  %3004 = vmatprep.subr.mxu0 0.0
  %3005 = vmatpush1.msra.mxu0 0.0
  %3006 = vmatprep.subr.mxu0 0.0
  %3007 = vmatpush1.msra.mxu0 0.0
  %3008 = vmatprep.mubr.f32.mxu0 0.0
  %3009 = vmatmul.mubr.f32.gmra.mrb[0].mxu0 %v2940
  %v3010 = vpop.f32.mrb[0].mxu0
  %v3011 = vadd.f32 0.0, %v3010
  %v3012 = vpop.f32.mrb[0].mxu0
  %3013 = vdwg.mxu0
  %v3016 = vcombine.low %v598, %v673
  %v3020 = vcombine.low %v930, %v1007
  %3021 = vrot.lane.b32.xlu0 %v3020, 3
  %v3022 = vpop.permute.xlu0 %3021
  %v3026 = vcombine.low %v1264, %v1341
  %3027 = vrot.lane.b32.xlu0 %v3026, 6
  %v3028 = vpop.permute.xlu0 %3027
  %v3032 = vcombine.low %v1598, %v1675
  %3033 = vrot.lane.b32.xlu0 %v3032, 9
  %v3034 = vpop.permute.xlu0 %3033
  %v3038 = vcombine.low %v1932, %v2009
  %3039 = vrot.lane.b32.xlu0 %v3038, 12
  %v3040 = vpop.permute.xlu0 %3039
  %v3044 = vcombine.low %v2266, %v2343
  %3045 = vrot.lane.b32.xlu0 %v3044, 15
  %v3046 = vpop.permute.xlu0 %3045
  %v3050 = vcombine.low %v2600, %v2677
  %3051 = vrot.lane.b32.xlu0 %v3050, 18
  %v3052 = vpop.permute.xlu0 %3051
  %v3056 = vcombine.low %v2934, %v3011
  %3057 = vrot.lane.b32.xlu0 %v3056, 21
  %v3058 = vpop.permute.xlu0 %3057
  %v3060 = vsel %vm350, %v3016, %v3022
  %v3061 = vsel %vm95, %v3060, %v3028
  %vm3062 = vcmask 72704
  %v3063 = vsel %vm3062, %v3061, %v3034
  %vm3064 = vcmask 97280
  %v3065 = vsel %vm3064, %v3063, %v3040
  %vm3066 = vcmask 121856
  %v3067 = vsel %vm3066, %v3065, %v3046
  %vm3068 = vcmask 146432
  %v3069 = vsel %vm3068, %v3067, %v3052
  %vm3070 = vcmask 171008
  %v3071 = vsel %vm3070, %v3069, %v3058
  %v3072 = vld [vmem:[%s10] sm:$0xff]
  %v3073 = vld [vmem:[%s10 + $0x8] sm:$0xff]
  %v3074 = vld [vmem:[%s10 + $0x10] sm:$0xff]
  %v3075 = vld [vmem:[%s11] sm:$0x1]
  %v3077 = vlaneseq
  %v3078 = vshrl.u32 %v3077, 7
  %v3079 = vsub.s32 0, %v3078
  %v3080 = vrot.slane %v3075, %v3079
  %vm3082 = vcmask 195584
  %v3084 = vsel %vm3082, %v3071, 0
  %3086 = vmatprep.subr.mxu0 0.0
  %3087 = vmatpush1.msra.mxu0 %v3072
  %3088 = vmatprep.subr.mxu0 0.0
  %3089 = vmatpush1.msra.mxu0 %v3073
  %3090 = vmatprep.subr.mxu0 0.0
  %3091 = vmatpush1.msra.mxu0 %v3074
  %3092 = vmatprep.subr.mxu0 0.0
  %3093 = vmatpush1.msra.mxu0 0.0
  %3094 = vmatprep.subr.mxu0 0.0
  %3095 = vmatpush1.msra.mxu0 0.0
  %3096 = vmatprep.subr.mxu0 0.0
  %3097 = vmatpush1.msra.mxu0 0.0
  %3098 = vmatprep.subr.mxu0 0.0
  %3099 = vmatpush1.msra.mxu0 0.0
  %3100 = vmatprep.subr.mxu0 0.0
  %3101 = vmatpush1.msra.mxu0 0.0
  %3102 = vmatprep.subr.mxu0 0.0
  %3103 = vmatpush1.msra.mxu0 0.0
  %3104 = vmatprep.subr.mxu0 0.0
  %3105 = vmatpush1.msra.mxu0 0.0
  %3106 = vmatprep.subr.mxu0 0.0
  %3107 = vmatpush1.msra.mxu0 0.0
  %3108 = vmatprep.subr.mxu0 0.0
  %3109 = vmatpush1.msra.mxu0 0.0
  %3110 = vmatprep.subr.mxu0 0.0
  %3111 = vmatpush1.msra.mxu0 0.0
  %3112 = vmatprep.subr.mxu0 0.0
  %3113 = vmatpush1.msra.mxu0 0.0
  %3114 = vmatprep.subr.mxu0 0.0
  %3115 = vmatpush1.msra.mxu0 0.0
  %3116 = vmatprep.subr.mxu0 0.0
  %3117 = vmatpush1.msra.mxu0 0.0
  %3118 = vmatprep.subr.mxu0 0.0
  %3119 = vmatpush1.msra.mxu0 0.0
  %3120 = vmatprep.subr.mxu0 0.0
  %3121 = vmatpush1.msra.mxu0 0.0
  %3122 = vmatprep.subr.mxu0 0.0
  %3123 = vmatpush1.msra.mxu0 0.0
  %3124 = vmatprep.subr.mxu0 0.0
  %3125 = vmatpush1.msra.mxu0 0.0
  %3126 = vmatprep.subr.mxu0 0.0
  %3127 = vmatpush1.msra.mxu0 0.0
  %3128 = vmatprep.subr.mxu0 0.0
  %3129 = vmatpush1.msra.mxu0 0.0
  %3130 = vmatprep.subr.mxu0 0.0
  %3131 = vmatpush1.msra.mxu0 0.0
  %3132 = vmatprep.subr.mxu0 0.0
  %3133 = vmatpush1.msra.mxu0 0.0
  %3134 = vmatprep.subr.mxu0 0.0
  %3135 = vmatpush1.msra.mxu0 0.0
  %3136 = vmatprep.subr.mxu0 0.0
  %3137 = vmatpush1.msra.mxu0 0.0
  %3138 = vmatprep.subr.mxu0 0.0
  %3139 = vmatpush1.msra.mxu0 0.0
  %3140 = vmatprep.subr.mxu0 0.0
  %3141 = vmatpush1.msra.mxu0 0.0
  %3142 = vmatprep.subr.mxu0 0.0
  %3143 = vmatpush1.msra.mxu0 0.0
  %3144 = vmatprep.subr.mxu0 0.0
  %3145 = vmatpush1.msra.mxu0 0.0
  %3146 = vmatprep.subr.mxu0 0.0
  %3147 = vmatpush1.msra.mxu0 0.0
  %3148 = vmatprep.subr.mxu0 0.0
  %3149 = vmatpush1.msra.mxu0 0.0
  %3150 = vmatprep.mubr.f32.mxu0 0.0
  %3151 = vmatmul.mubr.f32.gmra.mrb[0].mxu0 %v3084
  %v3152 = vpop.f32.mrb[0].mxu0
  %v3153 = vadd.f32 %v3080, %v3152
  %v3154 = vpop.f32.mrb[0].mxu0
  %3155 = vdwg.mxu0
  %v3156 = vld [vmem:[%s12] sm:$0xf]
  %v3157 = vld [vmem:[%s13] sm:$0x1]
  %v3159 = vlaneseq
  %v3160 = vshrl.u32 %v3159, 7
  %v3161 = vsub.s32 0, %v3160
  %v3162 = vrot.slane %v3157, %v3161
  %v3165 = vsel %vm186, %v3153, 0
  %v3168 = vsel %vm189, %v3156, 0
  %3170 = vmatprep.subr.mxu0 0.0
  %3171 = vmatpush1.msra.mxu0 %v3168
  %3172 = vmatprep.subr.mxu0 0.0
  %3173 = vmatpush1.msra.mxu0 0.0
  %3174 = vmatprep.subr.mxu0 0.0
  %3175 = vmatpush1.msra.mxu0 0.0
  %3176 = vmatprep.subr.mxu0 0.0
  %3177 = vmatpush1.msra.mxu0 0.0
  %3178 = vmatprep.subr.mxu0 0.0
  %3179 = vmatpush1.msra.mxu0 0.0
  %3180 = vmatprep.subr.mxu0 0.0
  %3181 = vmatpush1.msra.mxu0 0.0
  %3182 = vmatprep.subr.mxu0 0.0
  %3183 = vmatpush1.msra.mxu0 0.0
  %3184 = vmatprep.subr.mxu0 0.0
  %3185 = vmatpush1.msra.mxu0 0.0
  %3186 = vmatprep.subr.mxu0 0.0
  %3187 = vmatpush1.msra.mxu0 0.0
  %3188 = vmatprep.subr.mxu0 0.0
  %3189 = vmatpush1.msra.mxu0 0.0
  %3190 = vmatprep.subr.mxu0 0.0
  %3191 = vmatpush1.msra.mxu0 0.0
  %3192 = vmatprep.subr.mxu0 0.0
  %3193 = vmatpush1.msra.mxu0 0.0
  %3194 = vmatprep.subr.mxu0 0.0
  %3195 = vmatpush1.msra.mxu0 0.0
  %3196 = vmatprep.subr.mxu0 0.0
  %3197 = vmatpush1.msra.mxu0 0.0
  %3198 = vmatprep.subr.mxu0 0.0
  %3199 = vmatpush1.msra.mxu0 0.0
  %3200 = vmatprep.subr.mxu0 0.0
  %3201 = vmatpush1.msra.mxu0 0.0
  %3202 = vmatprep.subr.mxu0 0.0
  %3203 = vmatpush1.msra.mxu0 0.0
  %3204 = vmatprep.subr.mxu0 0.0
  %3205 = vmatpush1.msra.mxu0 0.0
  %3206 = vmatprep.subr.mxu0 0.0
  %3207 = vmatpush1.msra.mxu0 0.0
  %3208 = vmatprep.subr.mxu0 0.0
  %3209 = vmatpush1.msra.mxu0 0.0
  %3210 = vmatprep.subr.mxu0 0.0
  %3211 = vmatpush1.msra.mxu0 0.0
  %3212 = vmatprep.subr.mxu0 0.0
  %3213 = vmatpush1.msra.mxu0 0.0
  %3214 = vmatprep.subr.mxu0 0.0
  %3215 = vmatpush1.msra.mxu0 0.0
  %3216 = vmatprep.subr.mxu0 0.0
  %3217 = vmatpush1.msra.mxu0 0.0
  %3218 = vmatprep.subr.mxu0 0.0
  %3219 = vmatpush1.msra.mxu0 0.0
  %3220 = vmatprep.subr.mxu0 0.0
  %3221 = vmatpush1.msra.mxu0 0.0
  %3222 = vmatprep.subr.mxu0 0.0
  %3223 = vmatpush1.msra.mxu0 0.0
  %3224 = vmatprep.subr.mxu0 0.0
  %3225 = vmatpush1.msra.mxu0 0.0
  %3226 = vmatprep.subr.mxu0 0.0
  %3227 = vmatpush1.msra.mxu0 0.0
  %3228 = vmatprep.subr.mxu0 0.0
  %3229 = vmatpush1.msra.mxu0 0.0
  %3230 = vmatprep.subr.mxu0 0.0
  %3231 = vmatpush1.msra.mxu0 0.0
  %3232 = vmatprep.subr.mxu0 0.0
  %3233 = vmatpush1.msra.mxu0 0.0
  %3234 = vmatprep.mubr.f32.mxu0 0.0
  %3235 = vmatmul.mubr.f32.gmra.mrb[0].mxu0 %v3165
  %v3236 = vpop.f32.mrb[0].mxu0
  %v3237 = vadd.f32 %v3162, %v3236
  %v3238 = vpop.f32.mrb[0].mxu0
  %3239 = vdwg.mxu0
  %v3240 = vld [vmem:[%s14] sm:$0x1]
  %v3242 = vlaneseq
  %v3243 = vshrl.u32 %v3242, 7
  %v3244 = vsub.s32 0, %v3243
  %v3245 = vrot.slane %v3240, %v3244
  %v3247 = vmul.f32 %v3237, %v3245
  %v3248 = vld [vmem:[%s15] sm:$0x1]
  %v3250 = vlaneseq
  %v3251 = vshrl.u32 %v3250, 7
  %v3252 = vsub.s32 0, %v3251
  %v3253 = vrot.slane %v3248, %v3252
  %v3255 = vadd.f32 %v3247, %v3253
  %v3256 = vmax.f32 %v3255, 0.0
  %v3257 = vld [vmem:[%s16] sm:$0xff]
  %v3258 = vld [vmem:[%s16 + $0x8] sm:$0xff]
  %v3259 = vld [vmem:[%s16 + $0x10] sm:$0xff]
  %v3260 = vld [vmem:[%s16 + $0x18] sm:$0xff]
  %v3261 = vld [vmem:[%s17] sm:$0x1]
  %v3263 = vlaneseq
  %v3264 = vshrl.u32 %v3263, 7
  %v3265 = vsub.s32 0, %v3264
  %v3266 = vrot.slane %v3261, %v3265
  %vm3268 = vcmask 261120
  %v3270 = vsel %vm3268, %v3256, 0
  %3272 = vmatprep.subr.mxu0 0.0
  %3273 = vmatpush1.msra.mxu0 %v3257
  %3274 = vmatprep.subr.mxu0 0.0
  %3275 = vmatpush1.msra.mxu0 %v3258
  %3276 = vmatprep.subr.mxu0 0.0
  %3277 = vmatpush1.msra.mxu0 %v3259
  %3278 = vmatprep.subr.mxu0 0.0
  %3279 = vmatpush1.msra.mxu0 %v3260
  %3280 = vmatprep.subr.mxu0 0.0
  %3281 = vmatpush1.msra.mxu0 0.0
  %3282 = vmatprep.subr.mxu0 0.0
  %3283 = vmatpush1.msra.mxu0 0.0
  %3284 = vmatprep.subr.mxu0 0.0
  %3285 = vmatpush1.msra.mxu0 0.0
  %3286 = vmatprep.subr.mxu0 0.0
  %3287 = vmatpush1.msra.mxu0 0.0
  %3288 = vmatprep.subr.mxu0 0.0
  %3289 = vmatpush1.msra.mxu0 0.0
  %3290 = vmatprep.subr.mxu0 0.0
  %3291 = vmatpush1.msra.mxu0 0.0
  %3292 = vmatprep.subr.mxu0 0.0
  %3293 = vmatpush1.msra.mxu0 0.0
  %3294 = vmatprep.subr.mxu0 0.0
  %3295 = vmatpush1.msra.mxu0 0.0
  %3296 = vmatprep.subr.mxu0 0.0
  %3297 = vmatpush1.msra.mxu0 0.0
  %3298 = vmatprep.subr.mxu0 0.0
  %3299 = vmatpush1.msra.mxu0 0.0
  %3300 = vmatprep.subr.mxu0 0.0
  %3301 = vmatpush1.msra.mxu0 0.0
  %3302 = vmatprep.subr.mxu0 0.0
  %3303 = vmatpush1.msra.mxu0 0.0
  %3304 = vmatprep.subr.mxu0 0.0
  %3305 = vmatpush1.msra.mxu0 0.0
  %3306 = vmatprep.subr.mxu0 0.0
  %3307 = vmatpush1.msra.mxu0 0.0
  %3308 = vmatprep.subr.mxu0 0.0
  %3309 = vmatpush1.msra.mxu0 0.0
  %3310 = vmatprep.subr.mxu0 0.0
  %3311 = vmatpush1.msra.mxu0 0.0
  %3312 = vmatprep.subr.mxu0 0.0
  %3313 = vmatpush1.msra.mxu0 0.0
  %3314 = vmatprep.subr.mxu0 0.0
  %3315 = vmatpush1.msra.mxu0 0.0
  %3316 = vmatprep.subr.mxu0 0.0
  %3317 = vmatpush1.msra.mxu0 0.0
  %3318 = vmatprep.subr.mxu0 0.0
  %3319 = vmatpush1.msra.mxu0 0.0
  %3320 = vmatprep.subr.mxu0 0.0
  %3321 = vmatpush1.msra.mxu0 0.0
  %3322 = vmatprep.subr.mxu0 0.0
  %3323 = vmatpush1.msra.mxu0 0.0
  %3324 = vmatprep.subr.mxu0 0.0
  %3325 = vmatpush1.msra.mxu0 0.0
  %3326 = vmatprep.subr.mxu0 0.0
  %3327 = vmatpush1.msra.mxu0 0.0
  %3328 = vmatprep.subr.mxu0 0.0
  %3329 = vmatpush1.msra.mxu0 0.0
  %3330 = vmatprep.subr.mxu0 0.0
  %3331 = vmatpush1.msra.mxu0 0.0
  %3332 = vmatprep.subr.mxu0 0.0
  %3333 = vmatpush1.msra.mxu0 0.0
  %3334 = vmatprep.subr.mxu0 0.0
  %3335 = vmatpush1.msra.mxu0 0.0
  %3336 = vmatprep.mubr.f32.mxu0 0.0
  %3337 = vmatmul.mubr.f32.gmra.mrb[0].mxu0 %v3270
  %v3338 = vpop.f32.mrb[0].mxu0
  %v3339 = vadd.f32 %v3266, %v3338
  %v3340 = vpop.f32.mrb[0].mxu0
  %3341 = vdwg.mxu0
  %v3342 = vld [vmem:[%s18] sm:$0x1]
  %v3344 = vlaneseq
  %v3345 = vshrl.u32 %v3344, 7
  %v3346 = vsub.s32 0, %v3345
  %v3347 = vrot.slane %v3342, %v3346
  %v3349 = vmul.f32 %v3339, %v3347
  %v3350 = vld [vmem:[%s19] sm:$0x1]
  %v3352 = vlaneseq
  %v3353 = vshrl.u32 %v3352, 7
  %v3354 = vsub.s32 0, %v3353
  %v3355 = vrot.slane %v3350, %v3354
  %v3357 = vadd.f32 %v3349, %v3355
  %v3358 = vmax.f32 %v3357, 0.0
  %v3359 = vld [vmem:[%s20] sm:$0xff]
  %v3360 = vld [vmem:[%s20 + $0x8] sm:$0xff]
  %v3361 = vld [vmem:[%s20 + $0x10] sm:$0xff]
  %v3362 = vld [vmem:[%s20 + $0x18] sm:$0xff]
  %v3363 = vld [vmem:[%s21] sm:$0x1]
  %v3365 = vlaneseq
  %v3366 = vshrl.u32 %v3365, 7
  %v3367 = vsub.s32 0, %v3366
  %v3368 = vrot.slane %v3363, %v3367
  %v3371 = vsel %vm3268, %v3358, 0
  %3373 = vmatprep.subr.mxu0 0.0
  %3374 = vmatpush1.msra.mxu0 %v3359
  %3375 = vmatprep.subr.mxu0 0.0
  %3376 = vmatpush1.msra.mxu0 %v3360
  %3377 = vmatprep.subr.mxu0 0.0
  %3378 = vmatpush1.msra.mxu0 %v3361
  %3379 = vmatprep.subr.mxu0 0.0
  %3380 = vmatpush1.msra.mxu0 %v3362
  %3381 = vmatprep.subr.mxu0 0.0
  %3382 = vmatpush1.msra.mxu0 0.0
  %3383 = vmatprep.subr.mxu0 0.0
  %3384 = vmatpush1.msra.mxu0 0.0
  %3385 = vmatprep.subr.mxu0 0.0
  %3386 = vmatpush1.msra.mxu0 0.0
  %3387 = vmatprep.subr.mxu0 0.0
  %3388 = vmatpush1.msra.mxu0 0.0
  %3389 = vmatprep.subr.mxu0 0.0
  %3390 = vmatpush1.msra.mxu0 0.0
  %3391 = vmatprep.subr.mxu0 0.0
  %3392 = vmatpush1.msra.mxu0 0.0
  %3393 = vmatprep.subr.mxu0 0.0
  %3394 = vmatpush1.msra.mxu0 0.0
  %3395 = vmatprep.subr.mxu0 0.0
  %3396 = vmatpush1.msra.mxu0 0.0
  %3397 = vmatprep.subr.mxu0 0.0
  %3398 = vmatpush1.msra.mxu0 0.0
  %3399 = vmatprep.subr.mxu0 0.0
  %3400 = vmatpush1.msra.mxu0 0.0
  %3401 = vmatprep.subr.mxu0 0.0
  %3402 = vmatpush1.msra.mxu0 0.0
  %3403 = vmatprep.subr.mxu0 0.0
  %3404 = vmatpush1.msra.mxu0 0.0
  %3405 = vmatprep.subr.mxu0 0.0
  %3406 = vmatpush1.msra.mxu0 0.0
  %3407 = vmatprep.subr.mxu0 0.0
  %3408 = vmatpush1.msra.mxu0 0.0
  %3409 = vmatprep.subr.mxu0 0.0
  %3410 = vmatpush1.msra.mxu0 0.0
  %3411 = vmatprep.subr.mxu0 0.0
  %3412 = vmatpush1.msra.mxu0 0.0
  %3413 = vmatprep.subr.mxu0 0.0
  %3414 = vmatpush1.msra.mxu0 0.0
  %3415 = vmatprep.subr.mxu0 0.0
  %3416 = vmatpush1.msra.mxu0 0.0
  %3417 = vmatprep.subr.mxu0 0.0
  %3418 = vmatpush1.msra.mxu0 0.0
  %3419 = vmatprep.subr.mxu0 0.0
  %3420 = vmatpush1.msra.mxu0 0.0
  %3421 = vmatprep.subr.mxu0 0.0
  %3422 = vmatpush1.msra.mxu0 0.0
  %3423 = vmatprep.subr.mxu0 0.0
  %3424 = vmatpush1.msra.mxu0 0.0
  %3425 = vmatprep.subr.mxu0 0.0
  %3426 = vmatpush1.msra.mxu0 0.0
  %3427 = vmatprep.subr.mxu0 0.0
  %3428 = vmatpush1.msra.mxu0 0.0
  %3429 = vmatprep.subr.mxu0 0.0
  %3430 = vmatpush1.msra.mxu0 0.0
  %3431 = vmatprep.subr.mxu0 0.0
  %3432 = vmatpush1.msra.mxu0 0.0
  %3433 = vmatprep.subr.mxu0 0.0
  %3434 = vmatpush1.msra.mxu0 0.0
  %3435 = vmatprep.subr.mxu0 0.0
  %3436 = vmatpush1.msra.mxu0 0.0
  %3437 = vmatprep.mubr.f32.mxu0 0.0
  %3438 = vmatmul.mubr.f32.gmra.mrb[0].mxu0 %v3371
  %v3439 = vpop.f32.mrb[0].mxu0
  %v3440 = vadd.f32 %v3368, %v3439
  %v3441 = vpop.f32.mrb[0].mxu0
  %3442 = vdwg.mxu0
  %v3443 = vadd.f32 %v3237, %v3440
  %s3444 = scalar_lea.vmem %s14, 1
  %v3445 = vld [vmem:[%s3444] sm:$0x1]
  %v3447 = vlaneseq
  %v3448 = vshrl.u32 %v3447, 7
  %v3449 = vsub.s32 0, %v3448
  %v3450 = vrot.slane %v3445, %v3449
  %v3452 = vmul.f32 %v3443, %v3450
  %s3453 = scalar_lea.vmem %s15, 1
  %v3454 = vld [vmem:[%s3453] sm:$0x1]
  %v3456 = vlaneseq
  %v3457 = vshrl.u32 %v3456, 7
  %v3458 = vsub.s32 0, %v3457
  %v3459 = vrot.slane %v3454, %v3458
  %v3461 = vadd.f32 %v3452, %v3459
  %v3462 = vmax.f32 %v3461, 0.0
  %s3463 = scalar_lea.vmem %s16, 32
  %v3464 = vld [vmem:[%s3463] sm:$0xff]
  %v3465 = vld [vmem:[%s3463 + $0x8] sm:$0xff]
  %v3466 = vld [vmem:[%s3463 + $0x10] sm:$0xff]
  %v3467 = vld [vmem:[%s3463 + $0x18] sm:$0xff]
  %s3468 = scalar_lea.vmem %s17, 1
  %v3469 = vld [vmem:[%s3468] sm:$0x1]
  %v3471 = vlaneseq
  %v3472 = vshrl.u32 %v3471, 7
  %v3473 = vsub.s32 0, %v3472
  %v3474 = vrot.slane %v3469, %v3473
  %v3477 = vsel %vm3268, %v3462, 0
  %3479 = vmatprep.subr.mxu0 0.0
  %3480 = vmatpush1.msra.mxu0 %v3464
  %3481 = vmatprep.subr.mxu0 0.0
  %3482 = vmatpush1.msra.mxu0 %v3465
  %3483 = vmatprep.subr.mxu0 0.0
  %3484 = vmatpush1.msra.mxu0 %v3466
  %3485 = vmatprep.subr.mxu0 0.0
  %3486 = vmatpush1.msra.mxu0 %v3467
  %3487 = vmatprep.subr.mxu0 0.0
  %3488 = vmatpush1.msra.mxu0 0.0
  %3489 = vmatprep.subr.mxu0 0.0
  %3490 = vmatpush1.msra.mxu0 0.0
  %3491 = vmatprep.subr.mxu0 0.0
  %3492 = vmatpush1.msra.mxu0 0.0
  %3493 = vmatprep.subr.mxu0 0.0
  %3494 = vmatpush1.msra.mxu0 0.0
  %3495 = vmatprep.subr.mxu0 0.0
  %3496 = vmatpush1.msra.mxu0 0.0
  %3497 = vmatprep.subr.mxu0 0.0
  %3498 = vmatpush1.msra.mxu0 0.0
  %3499 = vmatprep.subr.mxu0 0.0
  %3500 = vmatpush1.msra.mxu0 0.0
  %3501 = vmatprep.subr.mxu0 0.0
  %3502 = vmatpush1.msra.mxu0 0.0
  %3503 = vmatprep.subr.mxu0 0.0
  %3504 = vmatpush1.msra.mxu0 0.0
  %3505 = vmatprep.subr.mxu0 0.0
  %3506 = vmatpush1.msra.mxu0 0.0
  %3507 = vmatprep.subr.mxu0 0.0
  %3508 = vmatpush1.msra.mxu0 0.0
  %3509 = vmatprep.subr.mxu0 0.0
  %3510 = vmatpush1.msra.mxu0 0.0
  %3511 = vmatprep.subr.mxu0 0.0
  %3512 = vmatpush1.msra.mxu0 0.0
  %3513 = vmatprep.subr.mxu0 0.0
  %3514 = vmatpush1.msra.mxu0 0.0
  %3515 = vmatprep.subr.mxu0 0.0
  %3516 = vmatpush1.msra.mxu0 0.0
  %3517 = vmatprep.subr.mxu0 0.0
  %3518 = vmatpush1.msra.mxu0 0.0
  %3519 = vmatprep.subr.mxu0 0.0
  %3520 = vmatpush1.msra.mxu0 0.0
  %3521 = vmatprep.subr.mxu0 0.0
  %3522 = vmatpush1.msra.mxu0 0.0
  %3523 = vmatprep.subr.mxu0 0.0
  %3524 = vmatpush1.msra.mxu0 0.0
  %3525 = vmatprep.subr.mxu0 0.0
  %3526 = vmatpush1.msra.mxu0 0.0
  %3527 = vmatprep.subr.mxu0 0.0
  %3528 = vmatpush1.msra.mxu0 0.0
  %3529 = vmatprep.subr.mxu0 0.0
  %3530 = vmatpush1.msra.mxu0 0.0
  %3531 = vmatprep.subr.mxu0 0.0
  %3532 = vmatpush1.msra.mxu0 0.0
  %3533 = vmatprep.subr.mxu0 0.0
  %3534 = vmatpush1.msra.mxu0 0.0
  %3535 = vmatprep.subr.mxu0 0.0
  %3536 = vmatpush1.msra.mxu0 0.0
  %3537 = vmatprep.subr.mxu0 0.0
  %3538 = vmatpush1.msra.mxu0 0.0
  %3539 = vmatprep.subr.mxu0 0.0
  %3540 = vmatpush1.msra.mxu0 0.0
  %3541 = vmatprep.subr.mxu0 0.0
  %3542 = vmatpush1.msra.mxu0 0.0
  %3543 = vmatprep.mubr.f32.mxu0 0.0
  %3544 = vmatmul.mubr.f32.gmra.mrb[0].mxu0 %v3477
  %v3545 = vpop.f32.mrb[0].mxu0
  %v3546 = vadd.f32 %v3474, %v3545
  %v3547 = vpop.f32.mrb[0].mxu0
  %3548 = vdwg.mxu0
  %s3549 = scalar_lea.vmem %s18, 1
  %v3550 = vld [vmem:[%s3549] sm:$0x1]
  %v3552 = vlaneseq
  %v3553 = vshrl.u32 %v3552, 7
  %v3554 = vsub.s32 0, %v3553
  %v3555 = vrot.slane %v3550, %v3554
  %v3557 = vmul.f32 %v3546, %v3555
  %s3558 = scalar_lea.vmem %s19, 1
  %v3559 = vld [vmem:[%s3558] sm:$0x1]
  %v3561 = vlaneseq
  %v3562 = vshrl.u32 %v3561, 7
  %v3563 = vsub.s32 0, %v3562
  %v3564 = vrot.slane %v3559, %v3563
  %v3566 = vadd.f32 %v3557, %v3564
  %v3567 = vmax.f32 %v3566, 0.0
  %s3568 = scalar_lea.vmem %s20, 32
  %v3569 = vld [vmem:[%s3568] sm:$0xff]
  %v3570 = vld [vmem:[%s3568 + $0x8] sm:$0xff]
  %v3571 = vld [vmem:[%s3568 + $0x10] sm:$0xff]
  %v3572 = vld [vmem:[%s3568 + $0x18] sm:$0xff]
  %s3573 = scalar_lea.vmem %s21, 1
  %v3574 = vld [vmem:[%s3573] sm:$0x1]
  %v3576 = vlaneseq
  %v3577 = vshrl.u32 %v3576, 7
  %v3578 = vsub.s32 0, %v3577
  %v3579 = vrot.slane %v3574, %v3578
  %v3582 = vsel %vm3268, %v3567, 0
  %3584 = vmatprep.subr.mxu0 0.0
  %3585 = vmatpush1.msra.mxu0 %v3569
  %3586 = vmatprep.subr.mxu0 0.0
  %3587 = vmatpush1.msra.mxu0 %v3570
  %3588 = vmatprep.subr.mxu0 0.0
  %3589 = vmatpush1.msra.mxu0 %v3571
  %3590 = vmatprep.subr.mxu0 0.0
  %3591 = vmatpush1.msra.mxu0 %v3572
  %3592 = vmatprep.subr.mxu0 0.0
  %3593 = vmatpush1.msra.mxu0 0.0
  %3594 = vmatprep.subr.mxu0 0.0
  %3595 = vmatpush1.msra.mxu0 0.0
  %3596 = vmatprep.subr.mxu0 0.0
  %3597 = vmatpush1.msra.mxu0 0.0
  %3598 = vmatprep.subr.mxu0 0.0
  %3599 = vmatpush1.msra.mxu0 0.0
  %3600 = vmatprep.subr.mxu0 0.0
  %3601 = vmatpush1.msra.mxu0 0.0
  %3602 = vmatprep.subr.mxu0 0.0
  %3603 = vmatpush1.msra.mxu0 0.0
  %3604 = vmatprep.subr.mxu0 0.0
  %3605 = vmatpush1.msra.mxu0 0.0
  %3606 = vmatprep.subr.mxu0 0.0
  %3607 = vmatpush1.msra.mxu0 0.0
  %3608 = vmatprep.subr.mxu0 0.0
  %3609 = vmatpush1.msra.mxu0 0.0
  %3610 = vmatprep.subr.mxu0 0.0
  %3611 = vmatpush1.msra.mxu0 0.0
  %3612 = vmatprep.subr.mxu0 0.0
  %3613 = vmatpush1.msra.mxu0 0.0
  %3614 = vmatprep.subr.mxu0 0.0
  %3615 = vmatpush1.msra.mxu0 0.0
  %3616 = vmatprep.subr.mxu0 0.0
  %3617 = vmatpush1.msra.mxu0 0.0
  %3618 = vmatprep.subr.mxu0 0.0
  %3619 = vmatpush1.msra.mxu0 0.0
  %3620 = vmatprep.subr.mxu0 0.0
  %3621 = vmatpush1.msra.mxu0 0.0
  %3622 = vmatprep.subr.mxu0 0.0
  %3623 = vmatpush1.msra.mxu0 0.0
  %3624 = vmatprep.subr.mxu0 0.0
  %3625 = vmatpush1.msra.mxu0 0.0
  %3626 = vmatprep.subr.mxu0 0.0
  %3627 = vmatpush1.msra.mxu0 0.0
  %3628 = vmatprep.subr.mxu0 0.0
  %3629 = vmatpush1.msra.mxu0 0.0
  %3630 = vmatprep.subr.mxu0 0.0
  %3631 = vmatpush1.msra.mxu0 0.0
  %3632 = vmatprep.subr.mxu0 0.0
  %3633 = vmatpush1.msra.mxu0 0.0
  %3634 = vmatprep.subr.mxu0 0.0
  %3635 = vmatpush1.msra.mxu0 0.0
  %3636 = vmatprep.subr.mxu0 0.0
  %3637 = vmatpush1.msra.mxu0 0.0
  %3638 = vmatprep.subr.mxu0 0.0
  %3639 = vmatpush1.msra.mxu0 0.0
  %3640 = vmatprep.subr.mxu0 0.0
  %3641 = vmatpush1.msra.mxu0 0.0
  %3642 = vmatprep.subr.mxu0 0.0
  %3643 = vmatpush1.msra.mxu0 0.0
  %3644 = vmatprep.subr.mxu0 0.0
  %3645 = vmatpush1.msra.mxu0 0.0
  %3646 = vmatprep.subr.mxu0 0.0
  %3647 = vmatpush1.msra.mxu0 0.0
  %3648 = vmatprep.mubr.f32.mxu0 0.0
  %3649 = vmatmul.mubr.f32.gmra.mrb[0].mxu0 %v3582
  %v3650 = vpop.f32.mrb[0].mxu0
  %v3651 = vadd.f32 %v3579, %v3650
  %v3652 = vpop.f32.mrb[0].mxu0
  %3653 = vdwg.mxu0
  %v3654 = vadd.f32 %v3443, %v3651
  %v3655 = vld [vmem:[%s22] sm:$0xff]
  %v3656 = vld [vmem:[%s22 + $0x8] sm:$0xff]
  %v3657 = vld [vmem:[%s22 + $0x10] sm:$0xff]
  %v3658 = vld [vmem:[%s22 + $0x18] sm:$0xff]
  %v3659 = vld [vmem:[%s23] sm:$0x1]
  %v3661 = vlaneseq
  %v3662 = vshrl.u32 %v3661, 7
  %v3663 = vsub.s32 0, %v3662
  %v3664 = vrot.slane %v3659, %v3663
  %v3667 = vsel %vm3268, %v3654, 0
  %3669 = vmatprep.subr.mxu0 0.0
  %3670 = vmatpush1.msra.mxu0 %v3655
  %3671 = vmatprep.subr.mxu0 0.0
  %3672 = vmatpush1.msra.mxu0 %v3656
  %3673 = vmatprep.subr.mxu0 0.0
  %3674 = vmatpush1.msra.mxu0 %v3657
  %3675 = vmatprep.subr.mxu0 0.0
  %3676 = vmatpush1.msra.mxu0 %v3658
  %3677 = vmatprep.subr.mxu0 0.0
  %3678 = vmatpush1.msra.mxu0 0.0
  %3679 = vmatprep.subr.mxu0 0.0
  %3680 = vmatpush1.msra.mxu0 0.0
  %3681 = vmatprep.subr.mxu0 0.0
  %3682 = vmatpush1.msra.mxu0 0.0
  %3683 = vmatprep.subr.mxu0 0.0
  %3684 = vmatpush1.msra.mxu0 0.0
  %3685 = vmatprep.subr.mxu0 0.0
  %3686 = vmatpush1.msra.mxu0 0.0
  %3687 = vmatprep.subr.mxu0 0.0
  %3688 = vmatpush1.msra.mxu0 0.0
  %3689 = vmatprep.subr.mxu0 0.0
  %3690 = vmatpush1.msra.mxu0 0.0
  %3691 = vmatprep.subr.mxu0 0.0
  %3692 = vmatpush1.msra.mxu0 0.0
  %3693 = vmatprep.subr.mxu0 0.0
  %3694 = vmatpush1.msra.mxu0 0.0
  %3695 = vmatprep.subr.mxu0 0.0
  %3696 = vmatpush1.msra.mxu0 0.0
  %3697 = vmatprep.subr.mxu0 0.0
  %3698 = vmatpush1.msra.mxu0 0.0
  %3699 = vmatprep.subr.mxu0 0.0
  %3700 = vmatpush1.msra.mxu0 0.0
  %3701 = vmatprep.subr.mxu0 0.0
  %3702 = vmatpush1.msra.mxu0 0.0
  %3703 = vmatprep.subr.mxu0 0.0
  %3704 = vmatpush1.msra.mxu0 0.0
  %3705 = vmatprep.subr.mxu0 0.0
  %3706 = vmatpush1.msra.mxu0 0.0
  %3707 = vmatprep.subr.mxu0 0.0
  %3708 = vmatpush1.msra.mxu0 0.0
  %3709 = vmatprep.subr.mxu0 0.0
  %3710 = vmatpush1.msra.mxu0 0.0
  %3711 = vmatprep.subr.mxu0 0.0
  %3712 = vmatpush1.msra.mxu0 0.0
  %3713 = vmatprep.subr.mxu0 0.0
  %3714 = vmatpush1.msra.mxu0 0.0
  %3715 = vmatprep.subr.mxu0 0.0
  %3716 = vmatpush1.msra.mxu0 0.0
  %3717 = vmatprep.subr.mxu0 0.0
  %3718 = vmatpush1.msra.mxu0 0.0
  %3719 = vmatprep.subr.mxu0 0.0
  %3720 = vmatpush1.msra.mxu0 0.0
  %3721 = vmatprep.subr.mxu0 0.0
  %3722 = vmatpush1.msra.mxu0 0.0
  %3723 = vmatprep.subr.mxu0 0.0
  %3724 = vmatpush1.msra.mxu0 0.0
  %3725 = vmatprep.subr.mxu0 0.0
  %3726 = vmatpush1.msra.mxu0 0.0
  %3727 = vmatprep.subr.mxu0 0.0
  %3728 = vmatpush1.msra.mxu0 0.0
  %3729 = vmatprep.subr.mxu0 0.0
  %3730 = vmatpush1.msra.mxu0 0.0
  %3731 = vmatprep.subr.mxu0 0.0
  %3732 = vmatpush1.msra.mxu0 0.0
  %3733 = vmatprep.mubr.f32.mxu0 0.0
  %3734 = vmatmul.mubr.f32.gmra.mrb[0].mxu0 %v3667
  %v3735 = vpop.f32.mrb[0].mxu0
  %v3736 = vadd.f32 %v3664, %v3735
  %v3737 = vpop.f32.mrb[0].mxu0
  %3738 = vdwg.mxu0
  %v3739 = vsub.f32 0.0, %v3736
  %v3740 = vmul.f32 %v3739, 1.442695
  %v3741 = vpow.pop %v3740
  %v3742 = vadd.f32 %v3741, 1.0
  %v3743 = vrcp.pop %v3742
  %v3744 = vadd.f32 %v3743, 0.5
  %v3745 = vld [vmem:[%s2] sm:$0xf]
  %v3746 = vld [vmem:[%s2 + $0x4] sm:$0xf]
  %v3749 = vcombine.low %v3745, %v3746
  %v3751 = vmul.f32 %v3744, %v3749
  %3753 = vrot.lane.b32.xlu0 %v3736, 124
  %v3754 = vpop.permute.xlu0 %3753
  %v3756 = vadd.f32 %v3751, %v3754
  %v3758 = vcombine.high %v3756, %v3756
  %3760 = vst.msk [vmem:[%s24] sm:$0xf] %vm503, %v3756
  %3761 = vst.msk [vmem:[%s24 + $0x4] sm:$0xf] %vm503, %v3758
  %v3762 = vlog2.pop %v3744
  %v3763 = vmul.f32 %v3762, 0.6931472
  %v3765 = vcombine.high %v3763, %v3763
  %v3767 = vsel %vm503, %v3763, 0.0
  %3768 = vadd.xlane.f32.xlu0 %v3767
  %v3769 = vpop.xlane.xlu0 %3768
  %v3770 = vsel %vm503, %v3765, 0.0
  %3771 = vadd.xlane.f32.xlu0 %v3770
  %v3772 = vpop.xlane.xlu0 %3771
  %v3775 = vlaneseq
  %v3776 = vand.u32 %v3775, 127
  %v3777 = vlaneseq
  %v3778 = vshrl.u32 %v3777, 7
  %v3779 = vsub.s32 %v3776, %v3778
  %v3780 = vrot.slane %v3769, %v3779
  %v3781 = vlaneseq
  %v3782 = vshrl.u32 %v3781, 7
  %v3783 = vsub.s32 %v3776, %v3782
  %v3784 = vrot.slane %v3772, %v3783
  %vm3785 = vcmask 1041409
  %v3786 = vsel %vm3785, %v3784, %v3780
  %vm3788 = vcmask 25600
  %v3789 = vsel %vm3788, %v3786, 0.0
  %3790 = vadd.xlane.f32.xlu0 %v3789
  %v3791 = vpop.xlane.xlu0 %3790
  %v3792 = vmul.f32 %v3791, 0.125
  %vm3793 = vcmask 1024
  %3794 = vst.msk [vmem:[%s25] sm:$0x3] %vm3793, %v3792
  // Predicated region
  $region98: #{additive_coupling_self_attention_forward.2} parent=0 // pred_check
    _
  $region99: #{additive_coupling_self_attention_forward.2} parent=0 // pred_check_branch
    %3796 = sbr.rel (0) target = $region101
  $region100: #{additive_coupling_self_attention_forward.2} parent=0 // pred_region
    _
  $region101: #{additive_coupling_self_attention_forward.2} parent=0 // pred_fallthru
    _
  // Predicated region
  $region102: #{additive_coupling_self_attention_forward.2} parent=0 // pred_check
    _
  $region103: #{additive_coupling_self_attention_forward.2} parent=0 // pred_check_branch
    %3798 = sbr.rel (0) target = $region105
  $region104: #{additive_coupling_self_attention_forward.2} parent=0 // pred_region
    _
  $region105: #{additive_coupling_self_attention_forward.2} parent=0 // pred_fallthru
    _
  // Predicated region
  $region106: #{additive_coupling_self_attention_forward.2} parent=0 // pred_check
    _
  $region107: #{additive_coupling_self_attention_forward.2} parent=0 // pred_check_branch
    %3800 = sbr.rel (0) target = $region109
  $region108: #{additive_coupling_self_attention_forward.2} parent=0 // pred_region
    _
  $region109: #{additive_coupling_self_attention_forward.2} parent=0 // pred_fallthru
    _
  // Predicated region
  $region110: #{additive_coupling_self_attention_forward.2} parent=0 // pred_check
    _
  $region111: #{additive_coupling_self_attention_forward.2} parent=0 // pred_check_branch
    %3802 = sbr.rel (0) target = $region113
  $region112: #{additive_coupling_self_attention_forward.2} parent=0 // pred_region
    _
  $region113: #{additive_coupling_self_attention_forward.2} parent=0 // pred_fallthru
    _

</llo_original>
